<compile_context>
chip_gen: v7x
topology: tpu7x:2x2x1
jax: 0.10.0
libtpu: 0.0.40
codegen_flags: <defaults>
</compile_context>

<pallas_src>
import jax
import jax.numpy as jnp
from jax.experimental import pallas as pl
from jax.experimental.pallas import tpu as pltpu

EPS = 1e-3     # BatchNorm2d eps=0.001
C_PAD = 128    # lane-dense channel count (88 -> 128)


def _relu_dwconv_bn_relu_kernel(x_ref, w_ref, gamma_ref, beta_ref, o_ref, xp_ref):
    # x_ref:     (N, H, W, C)       unpadded input (pre-ReLU), C == 128
    # w_ref:     (3, 3, C)          depthwise 3x3 weights (per channel)
    # gamma_ref: (1, 1, 1, C)       BN scale
    # beta_ref:  (1, 1, 1, C)       BN shift
    # o_ref:     (N, H, W, C)
    # xp_ref:    (N, H+2, W+2, C)   VMEM scratch: zero-padded, ReLU'd input
    N, H, W, C = o_ref.shape

    # ---- ReLU + zero-pad entirely inside VMEM (no padded HBM round trip) ----
    xp_ref[...] = jnp.zeros_like(xp_ref)
    xp_ref[:, 1:H + 1, 1:W + 1, :] = jnp.maximum(x_ref[...], 0.0)
    xp = xp_ref[...]                                      # (N, H+2, W+2, C)

    # ---- depthwise 3x3 conv as 9 shifted VPU multiply-adds ----
    w = w_ref[...]                                        # load weights once
    # hoist the three sublane (W-axis) shifts; reuse across the kh rows
    cols = [xp[:, :, kw:kw + W, :] for kw in range(3)]    # each (N, H+2, W, C)

    acc = jnp.zeros((N, H, W, C), dtype=jnp.float32)
    for kh in range(3):
        for kw in range(3):
            tap = w[kh, kw].reshape(1, 1, 1, C)
            acc = acc + cols[kw][:, kh:kh + H, :, :] * tap

    # ---- BatchNorm2d (training-mode batch stats, biased variance, affine) ----
    cnt = jnp.float32(N * H * W)
    s1 = jnp.sum(acc, axis=(0, 1, 2), keepdims=True)
    s2 = jnp.sum(acc * acc, axis=(0, 1, 2), keepdims=True)
    mean = s1 / cnt
    var = s2 / cnt - mean * mean                          # one-pass variance
    inv = jax.lax.rsqrt(var + EPS)
    scale = gamma_ref[...] * inv
    shift = beta_ref[...] - mean * scale

    o_ref[...] = jnp.maximum(acc * scale + shift, 0.0)    # relu5


@jax.jit
def relu_dwconv_bn_relu(x_nchw, w_33c, gamma, beta):
    """x_nchw: (N, 88, H, W) float32. Returns (N, 88, H, W) float32."""
    N, C, H, W = x_nchw.shape
    pad_c = C_PAD - C

    # NCHW -> NHWC + lane-dense channel pad (fused by XLA under jit)
    x = jnp.transpose(x_nchw, (0, 2, 3, 1)).astype(jnp.float32)
    x = jnp.pad(x, ((0, 0), (0, 0), (0, 0), (0, pad_c)))
    w = jnp.pad(w_33c.astype(jnp.float32), ((0, 0), (0, 0), (0, pad_c)))
    g = jnp.pad(gamma.astype(jnp.float32), (0, pad_c),
                constant_values=1.0).reshape(1, 1, 1, C_PAD)
    b = jnp.pad(beta.astype(jnp.float32), (0, pad_c)).reshape(1, 1, 1, C_PAD)

    out_nhwc = pl.pallas_call(
        _relu_dwconv_bn_relu_kernel,
        out_shape=jax.ShapeDtypeStruct((N, H, W, C_PAD), jnp.float32),
        grid=(1,),
        in_specs=[
            pl.BlockSpec((N, H, W, C_PAD), lambda i: (0, 0, 0, 0)),
            pl.BlockSpec((3, 3, C_PAD), lambda i: (0, 0, 0)),
            pl.BlockSpec((1, 1, 1, C_PAD), lambda i: (0, 0, 0, 0)),
            pl.BlockSpec((1, 1, 1, C_PAD), lambda i: (0, 0, 0, 0)),
        ],
        out_specs=pl.BlockSpec((N, H, W, C_PAD), lambda i: (0, 0, 0, 0)),
        scratch_shapes=[pltpu.VMEM((N, H + 2, W + 2, C_PAD), jnp.float32)],
        compiler_params=pltpu.CompilerParams(
            dimension_semantics=("arbitrary",)),
    )(x, w, g, b)

    # drop pad channels (zero by construction) and go back to NCHW
    out = out_nhwc[:, :, :, :C]
    return jnp.transpose(out, (0, 3, 1, 2))


def _reference(x_nchw, w_33c, gamma, beta):
    """Pure-JAX reference mirroring the PyTorch forward (training-mode BN)."""
    x = jnp.maximum(x_nchw, 0.0)
    w_oihw = jnp.transpose(w_33c, (2, 0, 1))[:, None, :, :]        # (88,1,3,3)
    y = jax.lax.conv_general_dilated(
        x, w_oihw, window_strides=(1, 1), padding=((1, 1), (1, 1)),
        feature_group_count=x.shape[1],
        dimension_numbers=("NCHW", "OIHW", "NCHW"))
    mean = jnp.mean(y, axis=(0, 2, 3), keepdims=True)
    var = jnp.mean((y - mean) ** 2, axis=(0, 2, 3), keepdims=True)
    yn = (y - mean) / jnp.sqrt(var + EPS)
    yn = yn * gamma.reshape(1, -1, 1, 1) + beta.reshape(1, -1, 1, 1)
    return jnp.maximum(yn, 0.0)


if __name__ == "__main__":
    key = jax.random.PRNGKey(0)
    k_x, k_w, k_g, k_b = jax.random.split(key, 4)

    N, C, H, W = 1, 88, 28, 28   # matches the module's x24 = randn(1, 88, 28, 28)
    x = jax.random.normal(k_x, (N, C, H, W), dtype=jnp.float32)

    # Deterministic synthetic parameters (module __init__ shapes):
    #   conv2d9.weight: (88, 1, 3, 3) depthwise -> stored here as (3, 3, 88)
    #   batchnorm2d7.weight/bias: (88,)
    w = jax.random.normal(k_w, (3, 3, C), dtype=jnp.float32) * 0.1
    gamma = 0.5 + jax.random.uniform(k_g, (C,), dtype=jnp.float32)
    beta = jax.random.normal(k_b, (C,), dtype=jnp.float32) * 0.1
    # TODO(synk): running_mean/running_var momentum updates (a training-time
    # side effect) are not modeled; forward output does not depend on them.

    out = relu_dwconv_bn_relu(x, w, gamma, beta)
    out = jax.block_until_ready(out)

    ref = jax.block_until_ready(_reference(x, w, gamma, beta))
    assert out.shape == (N, C, H, W)
    assert jnp.allclose(out, ref, atol=1e-4, rtol=1e-4), float(
        jnp.max(jnp.abs(out - ref)))

    print("KERNEL_OK")
</pallas_src>

<mosaic_0001>
module attributes {stable_mosaic.version = 11 : i64} {
  func.func @_relu_dwconv_bn_relu_kernel(%arg0: i32, %arg1: memref<1x28x28x128xf32, #tpu.memory_space<vmem>>, %arg2: memref<3x3x128xf32, #tpu.memory_space<vmem>>, %arg3: memref<1x1x1x128xf32, #tpu.memory_space<vmem>>, %arg4: memref<1x1x1x128xf32, #tpu.memory_space<vmem>>, %arg5: memref<1x28x28x128xf32, #tpu.memory_space<vmem>>, %arg6: memref<1x30x30x128xf32, #tpu.memory_space<vmem>>) attributes {dimension_semantics = [#tpu.dimension_semantics<arbitrary>], iteration_bounds = array<i64: 1>, scalar_prefetch = 0 : i64, scratch_operands = 1 : i64, tpu.core_type = #tpu.core_type<tc>, window_params = [{pipeline_mode = #tpu.pipeline_mode<synchronous>, transform_indices = @transform_0, window_bounds = array<i64: 1, 28, 28, 128>}, {pipeline_mode = #tpu.pipeline_mode<synchronous>, transform_indices = @transform_1, window_bounds = array<i64: 3, 3, 128>}, {pipeline_mode = #tpu.pipeline_mode<synchronous>, transform_indices = @transform_2, window_bounds = array<i64: 1, 1, 1, 128>}, {pipeline_mode = #tpu.pipeline_mode<synchronous>, transform_indices = @transform_3, window_bounds = array<i64: 1, 1, 1, 128>}, {pipeline_mode = #tpu.pipeline_mode<synchronous>, transform_indices = @transform_4, window_bounds = array<i64: 1, 28, 28, 128>}]} {
    %cst = arith.constant 0.000000e+00 : f32
    %0 = vector.broadcast %cst : f32 to vector<1x30x30x128xf32>
    %c0 = arith.constant 0 : index
    %c0_0 = arith.constant 0 : index
    %c0_1 = arith.constant 0 : index
    %c0_2 = arith.constant 0 : index
    %1 = vector.load %arg6[%c0, %c0_0, %c0_1, %c0_2] : memref<1x30x30x128xf32, #tpu.memory_space<vmem>>, vector<1x30x30x128xf32>
    tpu.vector_store %arg6[%c0, %c0_0, %c0_1, %c0_2], %0 {strides = array<i32>} : memref<1x30x30x128xf32, #tpu.memory_space<vmem>>, vector<1x30x30x128xf32>,
    %c0_3 = arith.constant 0 : index
    %c0_4 = arith.constant 0 : index
    %c0_5 = arith.constant 0 : index
    %c0_6 = arith.constant 0 : index
    %2 = vector.load %arg1[%c0_3, %c0_4, %c0_5, %c0_6] : memref<1x28x28x128xf32, #tpu.memory_space<vmem>>, vector<1x28x28x128xf32>
    %cst_7 = arith.constant 0.000000e+00 : f32
    %3 = vector.broadcast %cst_7 : f32 to vector<1x28x28x128xf32>
    %4 = arith.maximumf %2, %3 : vector<1x28x28x128xf32>
    %c0_8 = arith.constant 0 : index
    %c1 = arith.constant 1 : index
    %c1_9 = arith.constant 1 : index
    %c0_10 = arith.constant 0 : index
    %5 = vector.load %arg6[%c0_8, %c1, %c1_9, %c0_10] : memref<1x30x30x128xf32, #tpu.memory_space<vmem>>, vector<1x28x28x128xf32>
    tpu.vector_store %arg6[%c0_8, %c1, %c1_9, %c0_10], %4 {strides = array<i32>} : memref<1x30x30x128xf32, #tpu.memory_space<vmem>>, vector<1x28x28x128xf32>,
    %c0_11 = arith.constant 0 : index
    %c0_12 = arith.constant 0 : index
    %c0_13 = arith.constant 0 : index
    %c0_14 = arith.constant 0 : index
    %6 = vector.load %arg6[%c0_11, %c0_12, %c0_13, %c0_14] : memref<1x30x30x128xf32, #tpu.memory_space<vmem>>, vector<1x30x30x128xf32>
    %c0_15 = arith.constant 0 : index
    %c0_16 = arith.constant 0 : index
    %c0_17 = arith.constant 0 : index
    %7 = vector.load %arg2[%c0_15, %c0_16, %c0_17] : memref<3x3x128xf32, #tpu.memory_space<vmem>>, vector<3x3x128xf32>
    %8 = vector.extract_strided_slice %6 {offsets = [0, 0, 0, 0], sizes = [1, 30, 28, 128], strides = [1, 1, 1, 1]} : vector<1x30x30x128xf32> to vector<1x30x28x128xf32>
    %9 = vector.extract_strided_slice %6 {offsets = [0, 0, 1, 0], sizes = [1, 30, 28, 128], strides = [1, 1, 1, 1]} : vector<1x30x30x128xf32> to vector<1x30x28x128xf32>
    %10 = vector.extract_strided_slice %6 {offsets = [0, 0, 2, 0], sizes = [1, 30, 28, 128], strides = [1, 1, 1, 1]} : vector<1x30x30x128xf32> to vector<1x30x28x128xf32>
    %cst_18 = arith.constant 0.000000e+00 : f32
    %11 = vector.broadcast %cst_18 : f32 to vector<1x28x28x128xf32>
    %12 = vector.extract_strided_slice %7 {offsets = [0, 0, 0], sizes = [1, 1, 128], strides = [1, 1, 1]} : vector<3x3x128xf32> to vector<1x1x128xf32>
    %13 = vector.shape_cast %12 : vector<1x1x128xf32> to vector<128xf32>
    %14 = vector.shape_cast %13 : vector<128xf32> to vector<1x1x1x128xf32>
    %15 = vector.extract_strided_slice %8 {offsets = [0, 0, 0, 0], sizes = [1, 28, 28, 128], strides = [1, 1, 1, 1]} : vector<1x30x28x128xf32> to vector<1x28x28x128xf32>
    %16 = vector.broadcast %14 : vector<1x1x1x128xf32> to vector<1x28x28x128xf32>
    %17 = arith.mulf %15, %16 : vector<1x28x28x128xf32>
    %18 = arith.addf %11, %17 : vector<1x28x28x128xf32>
    %19 = vector.extract_strided_slice %7 {offsets = [0, 1, 0], sizes = [1, 1, 128], strides = [1, 1, 1]} : vector<3x3x128xf32> to vector<1x1x128xf32>
    %20 = vector.shape_cast %19 : vector<1x1x128xf32> to vector<128xf32>
    %21 = vector.shape_cast %20 : vector<128xf32> to vector<1x1x1x128xf32>
    %22 = vector.extract_strided_slice %9 {offsets = [0, 0, 0, 0], sizes = [1, 28, 28, 128], strides = [1, 1, 1, 1]} : vector<1x30x28x128xf32> to vector<1x28x28x128xf32>
    %23 = vector.broadcast %21 : vector<1x1x1x128xf32> to vector<1x28x28x128xf32>
    %24 = arith.mulf %22, %23 : vector<1x28x28x128xf32>
    %25 = arith.addf %18, %24 : vector<1x28x28x128xf32>
    %26 = vector.extract_strided_slice %7 {offsets = [0, 2, 0], sizes = [1, 1, 128], strides = [1, 1, 1]} : vector<3x3x128xf32> to vector<1x1x128xf32>
    %27 = vector.shape_cast %26 : vector<1x1x128xf32> to vector<128xf32>
    %28 = vector.shape_cast %27 : vector<128xf32> to vector<1x1x1x128xf32>
    %29 = vector.extract_strided_slice %10 {offsets = [0, 0, 0, 0], sizes = [1, 28, 28, 128], strides = [1, 1, 1, 1]} : vector<1x30x28x128xf32> to vector<1x28x28x128xf32>
    %30 = vector.broadcast %28 : vector<1x1x1x128xf32> to vector<1x28x28x128xf32>
    %31 = arith.mulf %29, %30 : vector<1x28x28x128xf32>
    %32 = arith.addf %25, %31 : vector<1x28x28x128xf32>
    %33 = vector.extract_strided_slice %7 {offsets = [1, 0, 0], sizes = [1, 1, 128], strides = [1, 1, 1]} : vector<3x3x128xf32> to vector<1x1x128xf32>
    %34 = vector.shape_cast %33 : vector<1x1x128xf32> to vector<128xf32>
    %35 = vector.shape_cast %34 : vector<128xf32> to vector<1x1x1x128xf32>
    %36 = vector.extract_strided_slice %8 {offsets = [0, 1, 0, 0], sizes = [1, 28, 28, 128], strides = [1, 1, 1, 1]} : vector<1x30x28x128xf32> to vector<1x28x28x128xf32>
    %37 = vector.broadcast %35 : vector<1x1x1x128xf32> to vector<1x28x28x128xf32>
    %38 = arith.mulf %36, %37 : vector<1x28x28x128xf32>
    %39 = arith.addf %32, %38 : vector<1x28x28x128xf32>
    %40 = vector.extract_strided_slice %7 {offsets = [1, 1, 0], sizes = [1, 1, 128], strides = [1, 1, 1]} : vector<3x3x128xf32> to vector<1x1x128xf32>
    %41 = vector.shape_cast %40 : vector<1x1x128xf32> to vector<128xf32>
    %42 = vector.shape_cast %41 : vector<128xf32> to vector<1x1x1x128xf32>
    %43 = vector.extract_strided_slice %9 {offsets = [0, 1, 0, 0], sizes = [1, 28, 28, 128], strides = [1, 1, 1, 1]} : vector<1x30x28x128xf32> to vector<1x28x28x128xf32>
    %44 = vector.broadcast %42 : vector<1x1x1x128xf32> to vector<1x28x28x128xf32>
    %45 = arith.mulf %43, %44 : vector<1x28x28x128xf32>
    %46 = arith.addf %39, %45 : vector<1x28x28x128xf32>
    %47 = vector.extract_strided_slice %7 {offsets = [1, 2, 0], sizes = [1, 1, 128], strides = [1, 1, 1]} : vector<3x3x128xf32> to vector<1x1x128xf32>
    %48 = vector.shape_cast %47 : vector<1x1x128xf32> to vector<128xf32>
    %49 = vector.shape_cast %48 : vector<128xf32> to vector<1x1x1x128xf32>
    %50 = vector.extract_strided_slice %10 {offsets = [0, 1, 0, 0], sizes = [1, 28, 28, 128], strides = [1, 1, 1, 1]} : vector<1x30x28x128xf32> to vector<1x28x28x128xf32>
    %51 = vector.broadcast %49 : vector<1x1x1x128xf32> to vector<1x28x28x128xf32>
    %52 = arith.mulf %50, %51 : vector<1x28x28x128xf32>
    %53 = arith.addf %46, %52 : vector<1x28x28x128xf32>
    %54 = vector.extract_strided_slice %7 {offsets = [2, 0, 0], sizes = [1, 1, 128], strides = [1, 1, 1]} : vector<3x3x128xf32> to vector<1x1x128xf32>
    %55 = vector.shape_cast %54 : vector<1x1x128xf32> to vector<128xf32>
    %56 = vector.shape_cast %55 : vector<128xf32> to vector<1x1x1x128xf32>
    %57 = vector.extract_strided_slice %8 {offsets = [0, 2, 0, 0], sizes = [1, 28, 28, 128], strides = [1, 1, 1, 1]} : vector<1x30x28x128xf32> to vector<1x28x28x128xf32>
    %58 = vector.broadcast %56 : vector<1x1x1x128xf32> to vector<1x28x28x128xf32>
    %59 = arith.mulf %57, %58 : vector<1x28x28x128xf32>
    %60 = arith.addf %53, %59 : vector<1x28x28x128xf32>
    %61 = vector.extract_strided_slice %7 {offsets = [2, 1, 0], sizes = [1, 1, 128], strides = [1, 1, 1]} : vector<3x3x128xf32> to vector<1x1x128xf32>
    %62 = vector.shape_cast %61 : vector<1x1x128xf32> to vector<128xf32>
    %63 = vector.shape_cast %62 : vector<128xf32> to vector<1x1x1x128xf32>
    %64 = vector.extract_strided_slice %9 {offsets = [0, 2, 0, 0], sizes = [1, 28, 28, 128], strides = [1, 1, 1, 1]} : vector<1x30x28x128xf32> to vector<1x28x28x128xf32>
    %65 = vector.broadcast %63 : vector<1x1x1x128xf32> to vector<1x28x28x128xf32>
    %66 = arith.mulf %64, %65 : vector<1x28x28x128xf32>
    %67 = arith.addf %60, %66 : vector<1x28x28x128xf32>
    %68 = vector.extract_strided_slice %7 {offsets = [2, 2, 0], sizes = [1, 1, 128], strides = [1, 1, 1]} : vector<3x3x128xf32> to vector<1x1x128xf32>
    %69 = vector.shape_cast %68 : vector<1x1x128xf32> to vector<128xf32>
    %70 = vector.shape_cast %69 : vector<128xf32> to vector<1x1x1x128xf32>
    %71 = vector.extract_strided_slice %10 {offsets = [0, 2, 0, 0], sizes = [1, 28, 28, 128], strides = [1, 1, 1, 1]} : vector<1x30x28x128xf32> to vector<1x28x28x128xf32>
    %72 = vector.broadcast %70 : vector<1x1x1x128xf32> to vector<1x28x28x128xf32>
    %73 = arith.mulf %71, %72 : vector<1x28x28x128xf32>
    %74 = arith.addf %67, %73 : vector<1x28x28x128xf32>
    %cst_19 = arith.constant dense<0.000000e+00> : vector<128xf32>
    %75 = vector.multi_reduction <add>, %74, %cst_19 [0, 1, 2] : vector<1x28x28x128xf32> to vector<128xf32>
    %76 = vector.shape_cast %75 : vector<128xf32> to vector<1x1x1x128xf32>
    %77 = arith.mulf %74, %74 : vector<1x28x28x128xf32>
    %cst_20 = arith.constant dense<0.000000e+00> : vector<128xf32>
    %78 = vector.multi_reduction <add>, %77, %cst_20 [0, 1, 2] : vector<1x28x28x128xf32> to vector<128xf32>
    %79 = vector.shape_cast %78 : vector<128xf32> to vector<1x1x1x128xf32>
    %cst_21 = arith.constant 7.840000e+02 : f32
    %80 = vector.broadcast %cst_21 : f32 to vector<1x1x1x128xf32>
    %81 = arith.divf %76, %80 : vector<1x1x1x128xf32>
    %cst_22 = arith.constant 7.840000e+02 : f32
    %82 = vector.broadcast %cst_22 : f32 to vector<1x1x1x128xf32>
    %83 = arith.divf %79, %82 : vector<1x1x1x128xf32>
    %84 = arith.mulf %81, %81 : vector<1x1x1x128xf32>
    %85 = arith.subf %83, %84 : vector<1x1x1x128xf32>
    %cst_23 = arith.constant 1.000000e-03 : f32
    %86 = vector.broadcast %cst_23 : f32 to vector<1x1x1x128xf32>
    %87 = arith.addf %85, %86 : vector<1x1x1x128xf32>
    %88 = math.rsqrt %87 : vector<1x1x1x128xf32>
    %c0_24 = arith.constant 0 : index
    %c0_25 = arith.constant 0 : index
    %c0_26 = arith.constant 0 : index
    %c0_27 = arith.constant 0 : index
    %89 = vector.load %arg3[%c0_24, %c0_25, %c0_26, %c0_27] : memref<1x1x1x128xf32, #tpu.memory_space<vmem>>, vector<1x1x1x128xf32>
    %90 = arith.mulf %89, %88 : vector<1x1x1x128xf32>
    %c0_28 = arith.constant 0 : index
    %c0_29 = arith.constant 0 : index
    %c0_30 = arith.constant 0 : index
    %c0_31 = arith.constant 0 : index
    %91 = vector.load %arg4[%c0_28, %c0_29, %c0_30, %c0_31] : memref<1x1x1x128xf32, #tpu.memory_space<vmem>>, vector<1x1x1x128xf32>
    %92 = arith.mulf %81, %90 : vector<1x1x1x128xf32>
    %93 = arith.subf %91, %92 : vector<1x1x1x128xf32>
    %94 = vector.broadcast %90 : vector<1x1x1x128xf32> to vector<1x28x28x128xf32>
    %95 = arith.mulf %74, %94 : vector<1x28x28x128xf32>
    %96 = vector.broadcast %93 : vector<1x1x1x128xf32> to vector<1x28x28x128xf32>
    %97 = arith.addf %95, %96 : vector<1x28x28x128xf32>
    %cst_32 = arith.constant 0.000000e+00 : f32
    %98 = vector.broadcast %cst_32 : f32 to vector<1x28x28x128xf32>
    %99 = arith.maximumf %97, %98 : vector<1x28x28x128xf32>
    %c0_33 = arith.constant 0 : index
    %c0_34 = arith.constant 0 : index
    %c0_35 = arith.constant 0 : index
    %c0_36 = arith.constant 0 : index
    %100 = vector.load %arg5[%c0_33, %c0_34, %c0_35, %c0_36] : memref<1x28x28x128xf32, #tpu.memory_space<vmem>>, vector<1x28x28x128xf32>
    tpu.vector_store %arg5[%c0_33, %c0_34, %c0_35, %c0_36], %99 {strides = array<i32>} : memref<1x28x28x128xf32, #tpu.memory_space<vmem>>, vector<1x28x28x128xf32>,
    return
  }
  func.func @transform_0(%arg0: i32) -> (i32, i32, i32, i32) {
    %c0_i32 = arith.constant 0 : i32
    %c0_i32_0 = arith.constant 0 : i32
    %c0_i32_1 = arith.constant 0 : i32
    %c0_i32_2 = arith.constant 0 : i32
    %c0_i32_3 = arith.constant 0 : i32
    return %c0_i32, %c0_i32_0, %c0_i32_1, %c0_i32_2 : i32, i32, i32, i32
  }
  func.func @transform_1(%arg0: i32) -> (i32, i32, i32) {
    %c0_i32 = arith.constant 0 : i32
    %c0_i32_0 = arith.constant 0 : i32
    %c0_i32_1 = arith.constant 0 : i32
    %c0_i32_2 = arith.constant 0 : i32
    return %c0_i32, %c0_i32_0, %c0_i32_1 : i32, i32, i32
  }
  func.func @transform_2(%arg0: i32) -> (i32, i32, i32, i32) {
    %c0_i32 = arith.constant 0 : i32
    %c0_i32_0 = arith.constant 0 : i32
    %c0_i32_1 = arith.constant 0 : i32
    %c0_i32_2 = arith.constant 0 : i32
    %c0_i32_3 = arith.constant 0 : i32
    return %c0_i32, %c0_i32_0, %c0_i32_1, %c0_i32_2 : i32, i32, i32, i32
  }
  func.func @transform_3(%arg0: i32) -> (i32, i32, i32, i32) {
    %c0_i32 = arith.constant 0 : i32
    %c0_i32_0 = arith.constant 0 : i32
    %c0_i32_1 = arith.constant 0 : i32
    %c0_i32_2 = arith.constant 0 : i32
    %c0_i32_3 = arith.constant 0 : i32
    return %c0_i32, %c0_i32_0, %c0_i32_1, %c0_i32_2 : i32, i32, i32, i32
  }
  func.func @transform_4(%arg0: i32) -> (i32, i32, i32, i32) {
    %c0_i32 = arith.constant 0 : i32
    %c0_i32_0 = arith.constant 0 : i32
    %c0_i32_1 = arith.constant 0 : i32
    %c0_i32_2 = arith.constant 0 : i32
    %c0_i32_3 = arith.constant 0 : i32
    return %c0_i32, %c0_i32_0, %c0_i32_1, %c0_i32_2 : i32, i32, i32, i32
  }
}

</mosaic_0001>

<llo_original>
// kernel: relu_dwconv_bn_relu.1
$region0: #{relu_dwconv_bn_relu.1}
  #allocation0 [shape = 'u32[]', space=smem, size = 0x4, offset = 0x4, fixed_abs, tag = 'smem constant byte address 0x4 - core index']
  #allocation1 [shape = 'u32[144,128]{1,0:T(1,128)}', space=vmem, size = 0x12000, scoped, tag = 'internal scratch']
  #allocation2 [shape = 'f32[1,30,30,128]{3,2,1,0:T(8,128)}', space=vmem, size = 0x78000, scoped, tag = 'scratch operand']
  %s0 = inlined_call_operand.vmem [shape: f32[1,28,28,128], index: 0, kind: input, shape index: {}]
  %s1 = inlined_call_operand.vmem [shape: f32[3,3,128], index: 1, kind: input, shape index: {}]
  %s2 = inlined_call_operand.vmem [shape: f32[1,1,1,128], index: 2, kind: input, shape index: {}]
  %s3 = inlined_call_operand.vmem [shape: f32[1,1,1,128], index: 3, kind: input, shape index: {}]
  %s4 = inlined_call_operand.vmem [shape: f32[1,28,28,128], index: 4, kind: output, shape index: {}]
  %s5 = sld [smem:[#allocation0]]
  $region26: #{relu_dwconv_bn_relu.1} parent=0
    _
  %s7 = ssub.s32 1, %s5
  %s8 = scalar_select 0, %s7, %s5
  // Predicated region
  $region2: #{relu_dwconv_bn_relu.1} parent=0 // pred_check
    _
  $region3: #{relu_dwconv_bn_relu.1} parent=0 // pred_check_branch
    %10 = sbr.rel (0) target = $region5
  $region4: #{relu_dwconv_bn_relu.1} parent=0 // pred_region
    _
  $region5: #{relu_dwconv_bn_relu.1} parent=0 // pred_fallthru
    _
  // Predicated region
  $region6: #{relu_dwconv_bn_relu.1} parent=0 // pred_check
    _
  $region7: #{relu_dwconv_bn_relu.1} parent=0 // pred_check_branch
    %12 = sbr.rel (0) target = $region9
  $region8: #{relu_dwconv_bn_relu.1} parent=0 // pred_region
    _
  $region9: #{relu_dwconv_bn_relu.1} parent=0 // pred_fallthru
    _
  // Predicated region
  $region10: #{relu_dwconv_bn_relu.1} parent=0 // pred_check
    _
  $region11: #{relu_dwconv_bn_relu.1} parent=0 // pred_check_branch
    %14 = sbr.rel (0) target = $region13
  $region12: #{relu_dwconv_bn_relu.1} parent=0 // pred_region
    _
  $region13: #{relu_dwconv_bn_relu.1} parent=0 // pred_fallthru
    _
  // Predicated region
  $region14: #{relu_dwconv_bn_relu.1} parent=0 // pred_check
    _
  $region15: #{relu_dwconv_bn_relu.1} parent=0 // pred_check_branch
    %16 = sbr.rel (0) target = $region17
  $region16: #{relu_dwconv_bn_relu.1} parent=0 // pred_region
    _
  $region17: #{relu_dwconv_bn_relu.1} parent=0 // pred_fallthru
    _
  %17 = vst [vmem:[#allocation2] sm:$0xff] 0.0
  %18 = vst [vmem:[#allocation2 + $0x8] sm:$0xff] 0.0
  %19 = vst [vmem:[#allocation2 + $0x10] sm:$0xff] 0.0
  %20 = vst [vmem:[#allocation2 + $0x18] sm:$0x3f] 0.0
  %21 = vst [vmem:[#allocation2 + $0x20] sm:$0xff] 0.0
  %22 = vst [vmem:[#allocation2 + $0x28] sm:$0xff] 0.0
  %23 = vst [vmem:[#allocation2 + $0x30] sm:$0xff] 0.0
  %24 = vst [vmem:[#allocation2 + $0x38] sm:$0x3f] 0.0
  %25 = vst [vmem:[#allocation2 + $0x40] sm:$0xff] 0.0
  %26 = vst [vmem:[#allocation2 + $0x48] sm:$0xff] 0.0
  %27 = vst [vmem:[#allocation2 + $0x50] sm:$0xff] 0.0
  %28 = vst [vmem:[#allocation2 + $0x58] sm:$0x3f] 0.0
  %29 = vst [vmem:[#allocation2 + $0x60] sm:$0xff] 0.0
  %30 = vst [vmem:[#allocation2 + $0x68] sm:$0xff] 0.0
  %31 = vst [vmem:[#allocation2 + $0x70] sm:$0xff] 0.0
  %32 = vst [vmem:[#allocation2 + $0x78] sm:$0x3f] 0.0
  %33 = vst [vmem:[#allocation2 + $0x80] sm:$0xff] 0.0
  %34 = vst [vmem:[#allocation2 + $0x88] sm:$0xff] 0.0
  %35 = vst [vmem:[#allocation2 + $0x90] sm:$0xff] 0.0
  %36 = vst [vmem:[#allocation2 + $0x98] sm:$0x3f] 0.0
  %37 = vst [vmem:[#allocation2 + $0xa0] sm:$0xff] 0.0
  %38 = vst [vmem:[#allocation2 + $0xa8] sm:$0xff] 0.0
  %39 = vst [vmem:[#allocation2 + $0xb0] sm:$0xff] 0.0
  %40 = vst [vmem:[#allocation2 + $0xb8] sm:$0x3f] 0.0
  %41 = vst [vmem:[#allocation2 + $0xc0] sm:$0xff] 0.0
  %42 = vst [vmem:[#allocation2 + $0xc8] sm:$0xff] 0.0
  %43 = vst [vmem:[#allocation2 + $0xd0] sm:$0xff] 0.0
  %44 = vst [vmem:[#allocation2 + $0xd8] sm:$0x3f] 0.0
  %45 = vst [vmem:[#allocation2 + $0xe0] sm:$0xff] 0.0
  %46 = vst [vmem:[#allocation2 + $0xe8] sm:$0xff] 0.0
  %47 = vst [vmem:[#allocation2 + $0xf0] sm:$0xff] 0.0
  %48 = vst [vmem:[#allocation2 + $0xf8] sm:$0x3f] 0.0
  %49 = vst [vmem:[#allocation2 + $0x100] sm:$0xff] 0.0
  %50 = vst [vmem:[#allocation2 + $0x108] sm:$0xff] 0.0
  %51 = vst [vmem:[#allocation2 + $0x110] sm:$0xff] 0.0
  %52 = vst [vmem:[#allocation2 + $0x118] sm:$0x3f] 0.0
  %53 = vst [vmem:[#allocation2 + $0x120] sm:$0xff] 0.0
  %54 = vst [vmem:[#allocation2 + $0x128] sm:$0xff] 0.0
  %55 = vst [vmem:[#allocation2 + $0x130] sm:$0xff] 0.0
  %56 = vst [vmem:[#allocation2 + $0x138] sm:$0x3f] 0.0
  %57 = vst [vmem:[#allocation2 + $0x140] sm:$0xff] 0.0
  %58 = vst [vmem:[#allocation2 + $0x148] sm:$0xff] 0.0
  %59 = vst [vmem:[#allocation2 + $0x150] sm:$0xff] 0.0
  %60 = vst [vmem:[#allocation2 + $0x158] sm:$0x3f] 0.0
  %61 = vst [vmem:[#allocation2 + $0x160] sm:$0xff] 0.0
  %62 = vst [vmem:[#allocation2 + $0x168] sm:$0xff] 0.0
  %63 = vst [vmem:[#allocation2 + $0x170] sm:$0xff] 0.0
  %64 = vst [vmem:[#allocation2 + $0x178] sm:$0x3f] 0.0
  %65 = vst [vmem:[#allocation2 + $0x180] sm:$0xff] 0.0
  %66 = vst [vmem:[#allocation2 + $0x188] sm:$0xff] 0.0
  %67 = vst [vmem:[#allocation2 + $0x190] sm:$0xff] 0.0
  %68 = vst [vmem:[#allocation2 + $0x198] sm:$0x3f] 0.0
  %69 = vst [vmem:[#allocation2 + $0x1a0] sm:$0xff] 0.0
  %70 = vst [vmem:[#allocation2 + $0x1a8] sm:$0xff] 0.0
  %71 = vst [vmem:[#allocation2 + $0x1b0] sm:$0xff] 0.0
  %72 = vst [vmem:[#allocation2 + $0x1b8] sm:$0x3f] 0.0
  %73 = vst [vmem:[#allocation2 + $0x1c0] sm:$0xff] 0.0
  %74 = vst [vmem:[#allocation2 + $0x1c8] sm:$0xff] 0.0
  %75 = vst [vmem:[#allocation2 + $0x1d0] sm:$0xff] 0.0
  %76 = vst [vmem:[#allocation2 + $0x1d8] sm:$0x3f] 0.0
  %77 = vst [vmem:[#allocation2 + $0x1e0] sm:$0xff] 0.0
  %78 = vst [vmem:[#allocation2 + $0x1e8] sm:$0xff] 0.0
  %79 = vst [vmem:[#allocation2 + $0x1f0] sm:$0xff] 0.0
  %80 = vst [vmem:[#allocation2 + $0x1f8] sm:$0x3f] 0.0
  %81 = vst [vmem:[#allocation2 + $0x200] sm:$0xff] 0.0
  %82 = vst [vmem:[#allocation2 + $0x208] sm:$0xff] 0.0
  %83 = vst [vmem:[#allocation2 + $0x210] sm:$0xff] 0.0
  %84 = vst [vmem:[#allocation2 + $0x218] sm:$0x3f] 0.0
  %85 = vst [vmem:[#allocation2 + $0x220] sm:$0xff] 0.0
  %86 = vst [vmem:[#allocation2 + $0x228] sm:$0xff] 0.0
  %87 = vst [vmem:[#allocation2 + $0x230] sm:$0xff] 0.0
  %88 = vst [vmem:[#allocation2 + $0x238] sm:$0x3f] 0.0
  %89 = vst [vmem:[#allocation2 + $0x240] sm:$0xff] 0.0
  %90 = vst [vmem:[#allocation2 + $0x248] sm:$0xff] 0.0
  %91 = vst [vmem:[#allocation2 + $0x250] sm:$0xff] 0.0
  %92 = vst [vmem:[#allocation2 + $0x258] sm:$0x3f] 0.0
  %93 = vst [vmem:[#allocation2 + $0x260] sm:$0xff] 0.0
  %94 = vst [vmem:[#allocation2 + $0x268] sm:$0xff] 0.0
  %95 = vst [vmem:[#allocation2 + $0x270] sm:$0xff] 0.0
  %96 = vst [vmem:[#allocation2 + $0x278] sm:$0x3f] 0.0
  %97 = vst [vmem:[#allocation2 + $0x280] sm:$0xff] 0.0
  %98 = vst [vmem:[#allocation2 + $0x288] sm:$0xff] 0.0
  %99 = vst [vmem:[#allocation2 + $0x290] sm:$0xff] 0.0
  %100 = vst [vmem:[#allocation2 + $0x298] sm:$0x3f] 0.0
  %101 = vst [vmem:[#allocation2 + $0x2a0] sm:$0xff] 0.0
  %102 = vst [vmem:[#allocation2 + $0x2a8] sm:$0xff] 0.0
  %103 = vst [vmem:[#allocation2 + $0x2b0] sm:$0xff] 0.0
  %104 = vst [vmem:[#allocation2 + $0x2b8] sm:$0x3f] 0.0
  %105 = vst [vmem:[#allocation2 + $0x2c0] sm:$0xff] 0.0
  %106 = vst [vmem:[#allocation2 + $0x2c8] sm:$0xff] 0.0
  %107 = vst [vmem:[#allocation2 + $0x2d0] sm:$0xff] 0.0
  %108 = vst [vmem:[#allocation2 + $0x2d8] sm:$0x3f] 0.0
  %109 = vst [vmem:[#allocation2 + $0x2e0] sm:$0xff] 0.0
  %110 = vst [vmem:[#allocation2 + $0x2e8] sm:$0xff] 0.0
  %111 = vst [vmem:[#allocation2 + $0x2f0] sm:$0xff] 0.0
  %112 = vst [vmem:[#allocation2 + $0x2f8] sm:$0x3f] 0.0
  %113 = vst [vmem:[#allocation2 + $0x300] sm:$0xff] 0.0
  %114 = vst [vmem:[#allocation2 + $0x308] sm:$0xff] 0.0
  %115 = vst [vmem:[#allocation2 + $0x310] sm:$0xff] 0.0
  %116 = vst [vmem:[#allocation2 + $0x318] sm:$0x3f] 0.0
  %117 = vst [vmem:[#allocation2 + $0x320] sm:$0xff] 0.0
  %118 = vst [vmem:[#allocation2 + $0x328] sm:$0xff] 0.0
  %119 = vst [vmem:[#allocation2 + $0x330] sm:$0xff] 0.0
  %120 = vst [vmem:[#allocation2 + $0x338] sm:$0x3f] 0.0
  %121 = vst [vmem:[#allocation2 + $0x340] sm:$0xff] 0.0
  %122 = vst [vmem:[#allocation2 + $0x348] sm:$0xff] 0.0
  %123 = vst [vmem:[#allocation2 + $0x350] sm:$0xff] 0.0
  %124 = vst [vmem:[#allocation2 + $0x358] sm:$0x3f] 0.0
  %125 = vst [vmem:[#allocation2 + $0x360] sm:$0xff] 0.0
  %126 = vst [vmem:[#allocation2 + $0x368] sm:$0xff] 0.0
  %127 = vst [vmem:[#allocation2 + $0x370] sm:$0xff] 0.0
  %128 = vst [vmem:[#allocation2 + $0x378] sm:$0x3f] 0.0
  %129 = vst [vmem:[#allocation2 + $0x380] sm:$0xff] 0.0
  %130 = vst [vmem:[#allocation2 + $0x388] sm:$0xff] 0.0
  %131 = vst [vmem:[#allocation2 + $0x390] sm:$0xff] 0.0
  %132 = vst [vmem:[#allocation2 + $0x398] sm:$0x3f] 0.0
  %133 = vst [vmem:[#allocation2 + $0x3a0] sm:$0xff] 0.0
  %134 = vst [vmem:[#allocation2 + $0x3a8] sm:$0xff] 0.0
  %135 = vst [vmem:[#allocation2 + $0x3b0] sm:$0xff] 0.0
  %136 = vst [vmem:[#allocation2 + $0x3b8] sm:$0x3f] 0.0
  %v137 = vld [vmem:[%s0] sm:$0xff]
  %v138 = vld [vmem:[%s0 + $0x8] sm:$0xff]
  %v139 = vld [vmem:[%s0 + $0x10] sm:$0xff]
  %v140 = vld [vmem:[%s0 + $0x18] sm:$0xf]
  %v141 = vld [vmem:[%s0 + $0x20] sm:$0xff]
  %v142 = vld [vmem:[%s0 + $0x28] sm:$0xff]
  %v143 = vld [vmem:[%s0 + $0x30] sm:$0xff]
  %v144 = vld [vmem:[%s0 + $0x38] sm:$0xf]
  %v145 = vld [vmem:[%s0 + $0x40] sm:$0xff]
  %v146 = vld [vmem:[%s0 + $0x48] sm:$0xff]
  %v147 = vld [vmem:[%s0 + $0x50] sm:$0xff]
  %v148 = vld [vmem:[%s0 + $0x58] sm:$0xf]
  %v149 = vld [vmem:[%s0 + $0x60] sm:$0xff]
  %v150 = vld [vmem:[%s0 + $0x68] sm:$0xff]
  %v151 = vld [vmem:[%s0 + $0x70] sm:$0xff]
  %v152 = vld [vmem:[%s0 + $0x78] sm:$0xf]
  %v153 = vld [vmem:[%s0 + $0x80] sm:$0xff]
  %v154 = vld [vmem:[%s0 + $0x88] sm:$0xff]
  %v155 = vld [vmem:[%s0 + $0x90] sm:$0xff]
  %v156 = vld [vmem:[%s0 + $0x98] sm:$0xf]
  %v157 = vld [vmem:[%s0 + $0xa0] sm:$0xff]
  %v158 = vld [vmem:[%s0 + $0xa8] sm:$0xff]
  %v159 = vld [vmem:[%s0 + $0xb0] sm:$0xff]
  %v160 = vld [vmem:[%s0 + $0xb8] sm:$0xf]
  %v161 = vld [vmem:[%s0 + $0xc0] sm:$0xff]
  %v162 = vld [vmem:[%s0 + $0xc8] sm:$0xff]
  %v163 = vld [vmem:[%s0 + $0xd0] sm:$0xff]
  %v164 = vld [vmem:[%s0 + $0xd8] sm:$0xf]
  %v165 = vld [vmem:[%s0 + $0xe0] sm:$0xff]
  %v166 = vld [vmem:[%s0 + $0xe8] sm:$0xff]
  %v167 = vld [vmem:[%s0 + $0xf0] sm:$0xff]
  %v168 = vld [vmem:[%s0 + $0xf8] sm:$0xf]
  %v169 = vld [vmem:[%s0 + $0x100] sm:$0xff]
  %v170 = vld [vmem:[%s0 + $0x108] sm:$0xff]
  %v171 = vld [vmem:[%s0 + $0x110] sm:$0xff]
  %v172 = vld [vmem:[%s0 + $0x118] sm:$0xf]
  %v173 = vld [vmem:[%s0 + $0x120] sm:$0xff]
  %v174 = vld [vmem:[%s0 + $0x128] sm:$0xff]
  %v175 = vld [vmem:[%s0 + $0x130] sm:$0xff]
  %v176 = vld [vmem:[%s0 + $0x138] sm:$0xf]
  %v177 = vld [vmem:[%s0 + $0x140] sm:$0xff]
  %v178 = vld [vmem:[%s0 + $0x148] sm:$0xff]
  %v179 = vld [vmem:[%s0 + $0x150] sm:$0xff]
  %v180 = vld [vmem:[%s0 + $0x158] sm:$0xf]
  %v181 = vld [vmem:[%s0 + $0x160] sm:$0xff]
  %v182 = vld [vmem:[%s0 + $0x168] sm:$0xff]
  %v183 = vld [vmem:[%s0 + $0x170] sm:$0xff]
  %v184 = vld [vmem:[%s0 + $0x178] sm:$0xf]
  %v185 = vld [vmem:[%s0 + $0x180] sm:$0xff]
  %v186 = vld [vmem:[%s0 + $0x188] sm:$0xff]
  %v187 = vld [vmem:[%s0 + $0x190] sm:$0xff]
  %v188 = vld [vmem:[%s0 + $0x198] sm:$0xf]
  %v189 = vld [vmem:[%s0 + $0x1a0] sm:$0xff]
  %v190 = vld [vmem:[%s0 + $0x1a8] sm:$0xff]
  %v191 = vld [vmem:[%s0 + $0x1b0] sm:$0xff]
  %v192 = vld [vmem:[%s0 + $0x1b8] sm:$0xf]
  %v193 = vld [vmem:[%s0 + $0x1c0] sm:$0xff]
  %v194 = vld [vmem:[%s0 + $0x1c8] sm:$0xff]
  %v195 = vld [vmem:[%s0 + $0x1d0] sm:$0xff]
  %v196 = vld [vmem:[%s0 + $0x1d8] sm:$0xf]
  %v197 = vld [vmem:[%s0 + $0x1e0] sm:$0xff]
  %v198 = vld [vmem:[%s0 + $0x1e8] sm:$0xff]
  %v199 = vld [vmem:[%s0 + $0x1f0] sm:$0xff]
  %v200 = vld [vmem:[%s0 + $0x1f8] sm:$0xf]
  %v201 = vld [vmem:[%s0 + $0x200] sm:$0xff]
  %v202 = vld [vmem:[%s0 + $0x208] sm:$0xff]
  %v203 = vld [vmem:[%s0 + $0x210] sm:$0xff]
  %v204 = vld [vmem:[%s0 + $0x218] sm:$0xf]
  %v205 = vld [vmem:[%s0 + $0x220] sm:$0xff]
  %v206 = vld [vmem:[%s0 + $0x228] sm:$0xff]
  %v207 = vld [vmem:[%s0 + $0x230] sm:$0xff]
  %v208 = vld [vmem:[%s0 + $0x238] sm:$0xf]
  %v209 = vld [vmem:[%s0 + $0x240] sm:$0xff]
  %v210 = vld [vmem:[%s0 + $0x248] sm:$0xff]
  %v211 = vld [vmem:[%s0 + $0x250] sm:$0xff]
  %v212 = vld [vmem:[%s0 + $0x258] sm:$0xf]
  %v213 = vld [vmem:[%s0 + $0x260] sm:$0xff]
  %v214 = vld [vmem:[%s0 + $0x268] sm:$0xff]
  %v215 = vld [vmem:[%s0 + $0x270] sm:$0xff]
  %v216 = vld [vmem:[%s0 + $0x278] sm:$0xf]
  %v217 = vld [vmem:[%s0 + $0x280] sm:$0xff]
  %v218 = vld [vmem:[%s0 + $0x288] sm:$0xff]
  %v219 = vld [vmem:[%s0 + $0x290] sm:$0xff]
  %v220 = vld [vmem:[%s0 + $0x298] sm:$0xf]
  %v221 = vld [vmem:[%s0 + $0x2a0] sm:$0xff]
  %v222 = vld [vmem:[%s0 + $0x2a8] sm:$0xff]
  %v223 = vld [vmem:[%s0 + $0x2b0] sm:$0xff]
  %v224 = vld [vmem:[%s0 + $0x2b8] sm:$0xf]
  %v225 = vld [vmem:[%s0 + $0x2c0] sm:$0xff]
  %v226 = vld [vmem:[%s0 + $0x2c8] sm:$0xff]
  %v227 = vld [vmem:[%s0 + $0x2d0] sm:$0xff]
  %v228 = vld [vmem:[%s0 + $0x2d8] sm:$0xf]
  %v229 = vld [vmem:[%s0 + $0x2e0] sm:$0xff]
  %v230 = vld [vmem:[%s0 + $0x2e8] sm:$0xff]
  %v231 = vld [vmem:[%s0 + $0x2f0] sm:$0xff]
  %v232 = vld [vmem:[%s0 + $0x2f8] sm:$0xf]
  %v233 = vld [vmem:[%s0 + $0x300] sm:$0xff]
  %v234 = vld [vmem:[%s0 + $0x308] sm:$0xff]
  %v235 = vld [vmem:[%s0 + $0x310] sm:$0xff]
  %v236 = vld [vmem:[%s0 + $0x318] sm:$0xf]
  %v237 = vld [vmem:[%s0 + $0x320] sm:$0xff]
  %v238 = vld [vmem:[%s0 + $0x328] sm:$0xff]
  %v239 = vld [vmem:[%s0 + $0x330] sm:$0xff]
  %v240 = vld [vmem:[%s0 + $0x338] sm:$0xf]
  %v241 = vld [vmem:[%s0 + $0x340] sm:$0xff]
  %v242 = vld [vmem:[%s0 + $0x348] sm:$0xff]
  %v243 = vld [vmem:[%s0 + $0x350] sm:$0xff]
  %v244 = vld [vmem:[%s0 + $0x358] sm:$0xf]
  %v245 = vld [vmem:[%s0 + $0x360] sm:$0xff]
  %v246 = vld [vmem:[%s0 + $0x368] sm:$0xff]
  %v247 = vld [vmem:[%s0 + $0x370] sm:$0xff]
  %v248 = vld [vmem:[%s0 + $0x378] sm:$0xf]
  %v249 = vmax.f32 %v137, 0.0
  %v250 = vmax.f32 %v138, 0.0
  %v251 = vmax.f32 %v139, 0.0
  %v252 = vmax.f32 %v140, 0.0
  %v253 = vmax.f32 %v141, 0.0
  %v254 = vmax.f32 %v142, 0.0
  %v255 = vmax.f32 %v143, 0.0
  %v256 = vmax.f32 %v144, 0.0
  %v257 = vmax.f32 %v145, 0.0
  %v258 = vmax.f32 %v146, 0.0
  %v259 = vmax.f32 %v147, 0.0
  %v260 = vmax.f32 %v148, 0.0
  %v261 = vmax.f32 %v149, 0.0
  %v262 = vmax.f32 %v150, 0.0
  %v263 = vmax.f32 %v151, 0.0
  %v264 = vmax.f32 %v152, 0.0
  %v265 = vmax.f32 %v153, 0.0
  %v266 = vmax.f32 %v154, 0.0
  %v267 = vmax.f32 %v155, 0.0
  %v268 = vmax.f32 %v156, 0.0
  %v269 = vmax.f32 %v157, 0.0
  %v270 = vmax.f32 %v158, 0.0
  %v271 = vmax.f32 %v159, 0.0
  %v272 = vmax.f32 %v160, 0.0
  %v273 = vmax.f32 %v161, 0.0
  %v274 = vmax.f32 %v162, 0.0
  %v275 = vmax.f32 %v163, 0.0
  %v276 = vmax.f32 %v164, 0.0
  %v277 = vmax.f32 %v165, 0.0
  %v278 = vmax.f32 %v166, 0.0
  %v279 = vmax.f32 %v167, 0.0
  %v280 = vmax.f32 %v168, 0.0
  %v281 = vmax.f32 %v169, 0.0
  %v282 = vmax.f32 %v170, 0.0
  %v283 = vmax.f32 %v171, 0.0
  %v284 = vmax.f32 %v172, 0.0
  %v285 = vmax.f32 %v173, 0.0
  %v286 = vmax.f32 %v174, 0.0
  %v287 = vmax.f32 %v175, 0.0
  %v288 = vmax.f32 %v176, 0.0
  %v289 = vmax.f32 %v177, 0.0
  %v290 = vmax.f32 %v178, 0.0
  %v291 = vmax.f32 %v179, 0.0
  %v292 = vmax.f32 %v180, 0.0
  %v293 = vmax.f32 %v181, 0.0
  %v294 = vmax.f32 %v182, 0.0
  %v295 = vmax.f32 %v183, 0.0
  %v296 = vmax.f32 %v184, 0.0
  %v297 = vmax.f32 %v185, 0.0
  %v298 = vmax.f32 %v186, 0.0
  %v299 = vmax.f32 %v187, 0.0
  %v300 = vmax.f32 %v188, 0.0
  %v301 = vmax.f32 %v189, 0.0
  %v302 = vmax.f32 %v190, 0.0
  %v303 = vmax.f32 %v191, 0.0
  %v304 = vmax.f32 %v192, 0.0
  %v305 = vmax.f32 %v193, 0.0
  %v306 = vmax.f32 %v194, 0.0
  %v307 = vmax.f32 %v195, 0.0
  %v308 = vmax.f32 %v196, 0.0
  %v309 = vmax.f32 %v197, 0.0
  %v310 = vmax.f32 %v198, 0.0
  %v311 = vmax.f32 %v199, 0.0
  %v312 = vmax.f32 %v200, 0.0
  %v313 = vmax.f32 %v201, 0.0
  %v314 = vmax.f32 %v202, 0.0
  %v315 = vmax.f32 %v203, 0.0
  %v316 = vmax.f32 %v204, 0.0
  %v317 = vmax.f32 %v205, 0.0
  %v318 = vmax.f32 %v206, 0.0
  %v319 = vmax.f32 %v207, 0.0
  %v320 = vmax.f32 %v208, 0.0
  %v321 = vmax.f32 %v209, 0.0
  %v322 = vmax.f32 %v210, 0.0
  %v323 = vmax.f32 %v211, 0.0
  %v324 = vmax.f32 %v212, 0.0
  %v325 = vmax.f32 %v213, 0.0
  %v326 = vmax.f32 %v214, 0.0
  %v327 = vmax.f32 %v215, 0.0
  %v328 = vmax.f32 %v216, 0.0
  %v329 = vmax.f32 %v217, 0.0
  %v330 = vmax.f32 %v218, 0.0
  %v331 = vmax.f32 %v219, 0.0
  %v332 = vmax.f32 %v220, 0.0
  %v333 = vmax.f32 %v221, 0.0
  %v334 = vmax.f32 %v222, 0.0
  %v335 = vmax.f32 %v223, 0.0
  %v336 = vmax.f32 %v224, 0.0
  %v337 = vmax.f32 %v225, 0.0
  %v338 = vmax.f32 %v226, 0.0
  %v339 = vmax.f32 %v227, 0.0
  %v340 = vmax.f32 %v228, 0.0
  %v341 = vmax.f32 %v229, 0.0
  %v342 = vmax.f32 %v230, 0.0
  %v343 = vmax.f32 %v231, 0.0
  %v344 = vmax.f32 %v232, 0.0
  %v345 = vmax.f32 %v233, 0.0
  %v346 = vmax.f32 %v234, 0.0
  %v347 = vmax.f32 %v235, 0.0
  %v348 = vmax.f32 %v236, 0.0
  %v349 = vmax.f32 %v237, 0.0
  %v350 = vmax.f32 %v238, 0.0
  %v351 = vmax.f32 %v239, 0.0
  %v352 = vmax.f32 %v240, 0.0
  %v353 = vmax.f32 %v241, 0.0
  %v354 = vmax.f32 %v242, 0.0
  %v355 = vmax.f32 %v243, 0.0
  %v356 = vmax.f32 %v244, 0.0
  %v357 = vmax.f32 %v245, 0.0
  %v358 = vmax.f32 %v246, 0.0
  %v359 = vmax.f32 %v247, 0.0
  %v360 = vmax.f32 %v248, 0.0
  %s361 = scalar_lea.vmem [#allocation2], 32
  %362 = vst [vmem:[%s361 + $0x1] sm:$0xff] %v249
  %363 = vst [vmem:[%s361 + $0x9] sm:$0xff] %v250
  %364 = vst [vmem:[%s361 + $0x11] sm:$0xff] %v251
  %365 = vst [vmem:[%s361 + $0x19] sm:$0xf] %v252
  %366 = vst [vmem:[%s361 + $0x21] sm:$0xff] %v253
  %367 = vst [vmem:[%s361 + $0x29] sm:$0xff] %v254
  %368 = vst [vmem:[%s361 + $0x31] sm:$0xff] %v255
  %369 = vst [vmem:[%s361 + $0x39] sm:$0xf] %v256
  %370 = vst [vmem:[%s361 + $0x41] sm:$0xff] %v257
  %371 = vst [vmem:[%s361 + $0x49] sm:$0xff] %v258
  %372 = vst [vmem:[%s361 + $0x51] sm:$0xff] %v259
  %373 = vst [vmem:[%s361 + $0x59] sm:$0xf] %v260
  %374 = vst [vmem:[%s361 + $0x61] sm:$0xff] %v261
  %375 = vst [vmem:[%s361 + $0x69] sm:$0xff] %v262
  %376 = vst [vmem:[%s361 + $0x71] sm:$0xff] %v263
  %377 = vst [vmem:[%s361 + $0x79] sm:$0xf] %v264
  %378 = vst [vmem:[%s361 + $0x81] sm:$0xff] %v265
  %379 = vst [vmem:[%s361 + $0x89] sm:$0xff] %v266
  %380 = vst [vmem:[%s361 + $0x91] sm:$0xff] %v267
  %381 = vst [vmem:[%s361 + $0x99] sm:$0xf] %v268
  %382 = vst [vmem:[%s361 + $0xa1] sm:$0xff] %v269
  %383 = vst [vmem:[%s361 + $0xa9] sm:$0xff] %v270
  %384 = vst [vmem:[%s361 + $0xb1] sm:$0xff] %v271
  %385 = vst [vmem:[%s361 + $0xb9] sm:$0xf] %v272
  %386 = vst [vmem:[%s361 + $0xc1] sm:$0xff] %v273
  %387 = vst [vmem:[%s361 + $0xc9] sm:$0xff] %v274
  %388 = vst [vmem:[%s361 + $0xd1] sm:$0xff] %v275
  %389 = vst [vmem:[%s361 + $0xd9] sm:$0xf] %v276
  %390 = vst [vmem:[%s361 + $0xe1] sm:$0xff] %v277
  %391 = vst [vmem:[%s361 + $0xe9] sm:$0xff] %v278
  %392 = vst [vmem:[%s361 + $0xf1] sm:$0xff] %v279
  %393 = vst [vmem:[%s361 + $0xf9] sm:$0xf] %v280
  %394 = vst [vmem:[%s361 + $0x101] sm:$0xff] %v281
  %395 = vst [vmem:[%s361 + $0x109] sm:$0xff] %v282
  %396 = vst [vmem:[%s361 + $0x111] sm:$0xff] %v283
  %397 = vst [vmem:[%s361 + $0x119] sm:$0xf] %v284
  %398 = vst [vmem:[%s361 + $0x121] sm:$0xff] %v285
  %399 = vst [vmem:[%s361 + $0x129] sm:$0xff] %v286
  %400 = vst [vmem:[%s361 + $0x131] sm:$0xff] %v287
  %401 = vst [vmem:[%s361 + $0x139] sm:$0xf] %v288
  %402 = vst [vmem:[%s361 + $0x141] sm:$0xff] %v289
  %403 = vst [vmem:[%s361 + $0x149] sm:$0xff] %v290
  %404 = vst [vmem:[%s361 + $0x151] sm:$0xff] %v291
  %405 = vst [vmem:[%s361 + $0x159] sm:$0xf] %v292
  %406 = vst [vmem:[%s361 + $0x161] sm:$0xff] %v293
  %407 = vst [vmem:[%s361 + $0x169] sm:$0xff] %v294
  %408 = vst [vmem:[%s361 + $0x171] sm:$0xff] %v295
  %409 = vst [vmem:[%s361 + $0x179] sm:$0xf] %v296
  %410 = vst [vmem:[%s361 + $0x181] sm:$0xff] %v297
  %411 = vst [vmem:[%s361 + $0x189] sm:$0xff] %v298
  %412 = vst [vmem:[%s361 + $0x191] sm:$0xff] %v299
  %413 = vst [vmem:[%s361 + $0x199] sm:$0xf] %v300
  %414 = vst [vmem:[%s361 + $0x1a1] sm:$0xff] %v301
  %415 = vst [vmem:[%s361 + $0x1a9] sm:$0xff] %v302
  %416 = vst [vmem:[%s361 + $0x1b1] sm:$0xff] %v303
  %417 = vst [vmem:[%s361 + $0x1b9] sm:$0xf] %v304
  %418 = vst [vmem:[%s361 + $0x1c1] sm:$0xff] %v305
  %419 = vst [vmem:[%s361 + $0x1c9] sm:$0xff] %v306
  %420 = vst [vmem:[%s361 + $0x1d1] sm:$0xff] %v307
  %421 = vst [vmem:[%s361 + $0x1d9] sm:$0xf] %v308
  %422 = vst [vmem:[%s361 + $0x1e1] sm:$0xff] %v309
  %423 = vst [vmem:[%s361 + $0x1e9] sm:$0xff] %v310
  %424 = vst [vmem:[%s361 + $0x1f1] sm:$0xff] %v311
  %425 = vst [vmem:[%s361 + $0x1f9] sm:$0xf] %v312
  %426 = vst [vmem:[%s361 + $0x201] sm:$0xff] %v313
  %427 = vst [vmem:[%s361 + $0x209] sm:$0xff] %v314
  %428 = vst [vmem:[%s361 + $0x211] sm:$0xff] %v315
  %429 = vst [vmem:[%s361 + $0x219] sm:$0xf] %v316
  %430 = vst [vmem:[%s361 + $0x221] sm:$0xff] %v317
  %431 = vst [vmem:[%s361 + $0x229] sm:$0xff] %v318
  %432 = vst [vmem:[%s361 + $0x231] sm:$0xff] %v319
  %433 = vst [vmem:[%s361 + $0x239] sm:$0xf] %v320
  %434 = vst [vmem:[%s361 + $0x241] sm:$0xff] %v321
  %435 = vst [vmem:[%s361 + $0x249] sm:$0xff] %v322
  %436 = vst [vmem:[%s361 + $0x251] sm:$0xff] %v323
  %437 = vst [vmem:[%s361 + $0x259] sm:$0xf] %v324
  %438 = vst [vmem:[%s361 + $0x261] sm:$0xff] %v325
  %439 = vst [vmem:[%s361 + $0x269] sm:$0xff] %v326
  %440 = vst [vmem:[%s361 + $0x271] sm:$0xff] %v327
  %441 = vst [vmem:[%s361 + $0x279] sm:$0xf] %v328
  %442 = vst [vmem:[%s361 + $0x281] sm:$0xff] %v329
  %443 = vst [vmem:[%s361 + $0x289] sm:$0xff] %v330
  %444 = vst [vmem:[%s361 + $0x291] sm:$0xff] %v331
  %445 = vst [vmem:[%s361 + $0x299] sm:$0xf] %v332
  %446 = vst [vmem:[%s361 + $0x2a1] sm:$0xff] %v333
  %447 = vst [vmem:[%s361 + $0x2a9] sm:$0xff] %v334
  %448 = vst [vmem:[%s361 + $0x2b1] sm:$0xff] %v335
  %449 = vst [vmem:[%s361 + $0x2b9] sm:$0xf] %v336
  %450 = vst [vmem:[%s361 + $0x2c1] sm:$0xff] %v337
  %451 = vst [vmem:[%s361 + $0x2c9] sm:$0xff] %v338
  %452 = vst [vmem:[%s361 + $0x2d1] sm:$0xff] %v339
  %453 = vst [vmem:[%s361 + $0x2d9] sm:$0xf] %v340
  %454 = vst [vmem:[%s361 + $0x2e1] sm:$0xff] %v341
  %455 = vst [vmem:[%s361 + $0x2e9] sm:$0xff] %v342
  %456 = vst [vmem:[%s361 + $0x2f1] sm:$0xff] %v343
  %457 = vst [vmem:[%s361 + $0x2f9] sm:$0xf] %v344
  %458 = vst [vmem:[%s361 + $0x301] sm:$0xff] %v345
  %459 = vst [vmem:[%s361 + $0x309] sm:$0xff] %v346
  %460 = vst [vmem:[%s361 + $0x311] sm:$0xff] %v347
  %461 = vst [vmem:[%s361 + $0x319] sm:$0xf] %v348
  %462 = vst [vmem:[%s361 + $0x321] sm:$0xff] %v349
  %463 = vst [vmem:[%s361 + $0x329] sm:$0xff] %v350
  %464 = vst [vmem:[%s361 + $0x331] sm:$0xff] %v351
  %465 = vst [vmem:[%s361 + $0x339] sm:$0xf] %v352
  %466 = vst [vmem:[%s361 + $0x341] sm:$0xff] %v353
  %467 = vst [vmem:[%s361 + $0x349] sm:$0xff] %v354
  %468 = vst [vmem:[%s361 + $0x351] sm:$0xff] %v355
  %469 = vst [vmem:[%s361 + $0x359] sm:$0xf] %v356
  %470 = vst [vmem:[%s361 + $0x361] sm:$0xff] %v357
  %471 = vst [vmem:[%s361 + $0x369] sm:$0xff] %v358
  %472 = vst [vmem:[%s361 + $0x371] sm:$0xff] %v359
  %473 = vst [vmem:[%s361 + $0x379] sm:$0xf] %v360
  %v474 = vld [vmem:[#allocation2] sm:$0xff]
  %v475 = vld [vmem:[#allocation2 + $0x8] sm:$0xff]
  %v476 = vld [vmem:[#allocation2 + $0x10] sm:$0xff]
  %v477 = vld [vmem:[#allocation2 + $0x18] sm:$0x3f]
  %v478 = vld [vmem:[#allocation2 + $0x20] sm:$0xff]
  %v479 = vld [vmem:[#allocation2 + $0x28] sm:$0xff]
  %v480 = vld [vmem:[#allocation2 + $0x30] sm:$0xff]
  %v481 = vld [vmem:[#allocation2 + $0x38] sm:$0x3f]
  %v482 = vld [vmem:[#allocation2 + $0x40] sm:$0xff]
  %v483 = vld [vmem:[#allocation2 + $0x48] sm:$0xff]
  %v484 = vld [vmem:[#allocation2 + $0x50] sm:$0xff]
  %v485 = vld [vmem:[#allocation2 + $0x58] sm:$0x3f]
  %v486 = vld [vmem:[#allocation2 + $0x60] sm:$0xff]
  %v487 = vld [vmem:[#allocation2 + $0x68] sm:$0xff]
  %v488 = vld [vmem:[#allocation2 + $0x70] sm:$0xff]
  %v489 = vld [vmem:[#allocation2 + $0x78] sm:$0x3f]
  %v490 = vld [vmem:[#allocation2 + $0x80] sm:$0xff]
  %v491 = vld [vmem:[#allocation2 + $0x88] sm:$0xff]
  %v492 = vld [vmem:[#allocation2 + $0x90] sm:$0xff]
  %v493 = vld [vmem:[#allocation2 + $0x98] sm:$0x3f]
  %v494 = vld [vmem:[#allocation2 + $0xa0] sm:$0xff]
  %v495 = vld [vmem:[#allocation2 + $0xa8] sm:$0xff]
  %v496 = vld [vmem:[#allocation2 + $0xb0] sm:$0xff]
  %v497 = vld [vmem:[#allocation2 + $0xb8] sm:$0x3f]
  %v498 = vld [vmem:[#allocation2 + $0xc0] sm:$0xff]
  %v499 = vld [vmem:[#allocation2 + $0xc8] sm:$0xff]
  %v500 = vld [vmem:[#allocation2 + $0xd0] sm:$0xff]
  %v501 = vld [vmem:[#allocation2 + $0xd8] sm:$0x3f]
  %v502 = vld [vmem:[#allocation2 + $0xe0] sm:$0xff]
  %v503 = vld [vmem:[#allocation2 + $0xe8] sm:$0xff]
  %v504 = vld [vmem:[#allocation2 + $0xf0] sm:$0xff]
  %v505 = vld [vmem:[#allocation2 + $0xf8] sm:$0x3f]
  %v506 = vld [vmem:[#allocation2 + $0x100] sm:$0xff]
  %v507 = vld [vmem:[#allocation2 + $0x108] sm:$0xff]
  %v508 = vld [vmem:[#allocation2 + $0x110] sm:$0xff]
  %v509 = vld [vmem:[#allocation2 + $0x118] sm:$0x3f]
  %v510 = vld [vmem:[#allocation2 + $0x120] sm:$0xff]
  %v511 = vld [vmem:[#allocation2 + $0x128] sm:$0xff]
  %v512 = vld [vmem:[#allocation2 + $0x130] sm:$0xff]
  %v513 = vld [vmem:[#allocation2 + $0x138] sm:$0x3f]
  %v514 = vld [vmem:[#allocation2 + $0x140] sm:$0xff]
  %v515 = vld [vmem:[#allocation2 + $0x148] sm:$0xff]
  %v516 = vld [vmem:[#allocation2 + $0x150] sm:$0xff]
  %v517 = vld [vmem:[#allocation2 + $0x158] sm:$0x3f]
  %v518 = vld [vmem:[#allocation2 + $0x160] sm:$0xff]
  %v519 = vld [vmem:[#allocation2 + $0x168] sm:$0xff]
  %v520 = vld [vmem:[#allocation2 + $0x170] sm:$0xff]
  %v521 = vld [vmem:[#allocation2 + $0x178] sm:$0x3f]
  %v522 = vld [vmem:[#allocation2 + $0x180] sm:$0xff]
  %v523 = vld [vmem:[#allocation2 + $0x188] sm:$0xff]
  %v524 = vld [vmem:[#allocation2 + $0x190] sm:$0xff]
  %v525 = vld [vmem:[#allocation2 + $0x198] sm:$0x3f]
  %v526 = vld [vmem:[#allocation2 + $0x1a0] sm:$0xff]
  %v527 = vld [vmem:[#allocation2 + $0x1a8] sm:$0xff]
  %v528 = vld [vmem:[#allocation2 + $0x1b0] sm:$0xff]
  %v529 = vld [vmem:[#allocation2 + $0x1b8] sm:$0x3f]
  %v530 = vld [vmem:[#allocation2 + $0x1c0] sm:$0xff]
  %v531 = vld [vmem:[#allocation2 + $0x1c8] sm:$0xff]
  %v532 = vld [vmem:[#allocation2 + $0x1d0] sm:$0xff]
  %v533 = vld [vmem:[#allocation2 + $0x1d8] sm:$0x3f]
  %v534 = vld [vmem:[#allocation2 + $0x1e0] sm:$0xff]
  %v535 = vld [vmem:[#allocation2 + $0x1e8] sm:$0xff]
  %v536 = vld [vmem:[#allocation2 + $0x1f0] sm:$0xff]
  %v537 = vld [vmem:[#allocation2 + $0x1f8] sm:$0x3f]
  %v538 = vld [vmem:[#allocation2 + $0x200] sm:$0xff]
  %v539 = vld [vmem:[#allocation2 + $0x208] sm:$0xff]
  %v540 = vld [vmem:[#allocation2 + $0x210] sm:$0xff]
  %v541 = vld [vmem:[#allocation2 + $0x218] sm:$0x3f]
  %v542 = vld [vmem:[#allocation2 + $0x220] sm:$0xff]
  %v543 = vld [vmem:[#allocation2 + $0x228] sm:$0xff]
  %v544 = vld [vmem:[#allocation2 + $0x230] sm:$0xff]
  %v545 = vld [vmem:[#allocation2 + $0x238] sm:$0x3f]
  %v546 = vld [vmem:[#allocation2 + $0x240] sm:$0xff]
  %v547 = vld [vmem:[#allocation2 + $0x248] sm:$0xff]
  %v548 = vld [vmem:[#allocation2 + $0x250] sm:$0xff]
  %v549 = vld [vmem:[#allocation2 + $0x258] sm:$0x3f]
  %v550 = vld [vmem:[#allocation2 + $0x260] sm:$0xff]
  %v551 = vld [vmem:[#allocation2 + $0x268] sm:$0xff]
  %v552 = vld [vmem:[#allocation2 + $0x270] sm:$0xff]
  %v553 = vld [vmem:[#allocation2 + $0x278] sm:$0x3f]
  %v554 = vld [vmem:[#allocation2 + $0x280] sm:$0xff]
  %v555 = vld [vmem:[#allocation2 + $0x288] sm:$0xff]
  %v556 = vld [vmem:[#allocation2 + $0x290] sm:$0xff]
  %v557 = vld [vmem:[#allocation2 + $0x298] sm:$0x3f]
  %v558 = vld [vmem:[#allocation2 + $0x2a0] sm:$0xff]
  %v559 = vld [vmem:[#allocation2 + $0x2a8] sm:$0xff]
  %v560 = vld [vmem:[#allocation2 + $0x2b0] sm:$0xff]
  %v561 = vld [vmem:[#allocation2 + $0x2b8] sm:$0x3f]
  %v562 = vld [vmem:[#allocation2 + $0x2c0] sm:$0xff]
  %v563 = vld [vmem:[#allocation2 + $0x2c8] sm:$0xff]
  %v564 = vld [vmem:[#allocation2 + $0x2d0] sm:$0xff]
  %v565 = vld [vmem:[#allocation2 + $0x2d8] sm:$0x3f]
  %v566 = vld [vmem:[#allocation2 + $0x2e0] sm:$0xff]
  %v567 = vld [vmem:[#allocation2 + $0x2e8] sm:$0xff]
  %v568 = vld [vmem:[#allocation2 + $0x2f0] sm:$0xff]
  %v569 = vld [vmem:[#allocation2 + $0x2f8] sm:$0x3f]
  %v570 = vld [vmem:[#allocation2 + $0x300] sm:$0xff]
  %v571 = vld [vmem:[#allocation2 + $0x308] sm:$0xff]
  %v572 = vld [vmem:[#allocation2 + $0x310] sm:$0xff]
  %v573 = vld [vmem:[#allocation2 + $0x318] sm:$0x3f]
  %v574 = vld [vmem:[#allocation2 + $0x320] sm:$0xff]
  %v575 = vld [vmem:[#allocation2 + $0x328] sm:$0xff]
  %v576 = vld [vmem:[#allocation2 + $0x330] sm:$0xff]
  %v577 = vld [vmem:[#allocation2 + $0x338] sm:$0x3f]
  %v578 = vld [vmem:[#allocation2 + $0x340] sm:$0xff]
  %v579 = vld [vmem:[#allocation2 + $0x348] sm:$0xff]
  %v580 = vld [vmem:[#allocation2 + $0x350] sm:$0xff]
  %v581 = vld [vmem:[#allocation2 + $0x358] sm:$0x3f]
  %v582 = vld [vmem:[#allocation2 + $0x360] sm:$0xff]
  %v583 = vld [vmem:[#allocation2 + $0x368] sm:$0xff]
  %v584 = vld [vmem:[#allocation2 + $0x370] sm:$0xff]
  %v585 = vld [vmem:[#allocation2 + $0x378] sm:$0x3f]
  %v586 = vld [vmem:[#allocation2 + $0x380] sm:$0xff]
  %v587 = vld [vmem:[#allocation2 + $0x388] sm:$0xff]
  %v588 = vld [vmem:[#allocation2 + $0x390] sm:$0xff]
  %v589 = vld [vmem:[#allocation2 + $0x398] sm:$0x3f]
  %v590 = vld [vmem:[#allocation2 + $0x3a0] sm:$0xff]
  %v591 = vld [vmem:[#allocation2 + $0x3a8] sm:$0xff]
  %v592 = vld [vmem:[#allocation2 + $0x3b0] sm:$0xff]
  %v593 = vld [vmem:[#allocation2 + $0x3b8] sm:$0x3f]
  %v594 = vld [vmem:[%s1] sm:$0x7]
  %v595 = vld [vmem:[%s1 + $0x4] sm:$0x7]
  %v596 = vld [vmem:[%s1 + $0x8] sm:$0x7]
  %v597 = vlaneseq
  %v598 = vshrl.u32 %v597, 7
  %v599 = vsub.s32 0, %v598
  %v600 = vrot.slane %v594, %v599
  %v601 = vmul.f32 %v474, %v600
  %v602 = vmul.f32 %v475, %v600
  %v603 = vmul.f32 %v476, %v600
  %v604 = vmul.f32 %v477, %v600
  %v605 = vmul.f32 %v478, %v600
  %v606 = vmul.f32 %v479, %v600
  %v607 = vmul.f32 %v480, %v600
  %v608 = vmul.f32 %v481, %v600
  %v609 = vmul.f32 %v482, %v600
  %v610 = vmul.f32 %v483, %v600
  %v611 = vmul.f32 %v484, %v600
  %v612 = vmul.f32 %v485, %v600
  %v613 = vmul.f32 %v486, %v600
  %v614 = vmul.f32 %v487, %v600
  %v615 = vmul.f32 %v488, %v600
  %v616 = vmul.f32 %v489, %v600
  %v617 = vmul.f32 %v490, %v600
  %v618 = vmul.f32 %v491, %v600
  %v619 = vmul.f32 %v492, %v600
  %v620 = vmul.f32 %v493, %v600
  %v621 = vmul.f32 %v494, %v600
  %v622 = vmul.f32 %v495, %v600
  %v623 = vmul.f32 %v496, %v600
  %v624 = vmul.f32 %v497, %v600
  %v625 = vmul.f32 %v498, %v600
  %v626 = vmul.f32 %v499, %v600
  %v627 = vmul.f32 %v500, %v600
  %v628 = vmul.f32 %v501, %v600
  %v629 = vmul.f32 %v502, %v600
  %v630 = vmul.f32 %v503, %v600
  %v631 = vmul.f32 %v504, %v600
  %v632 = vmul.f32 %v505, %v600
  %v633 = vmul.f32 %v506, %v600
  %v634 = vmul.f32 %v507, %v600
  %v635 = vmul.f32 %v508, %v600
  %v636 = vmul.f32 %v509, %v600
  %v637 = vmul.f32 %v510, %v600
  %v638 = vmul.f32 %v511, %v600
  %v639 = vmul.f32 %v512, %v600
  %v640 = vmul.f32 %v513, %v600
  %v641 = vmul.f32 %v514, %v600
  %v642 = vmul.f32 %v515, %v600
  %v643 = vmul.f32 %v516, %v600
  %v644 = vmul.f32 %v517, %v600
  %v645 = vmul.f32 %v518, %v600
  %v646 = vmul.f32 %v519, %v600
  %v647 = vmul.f32 %v520, %v600
  %v648 = vmul.f32 %v521, %v600
  %v649 = vmul.f32 %v522, %v600
  %v650 = vmul.f32 %v523, %v600
  %v651 = vmul.f32 %v524, %v600
  %v652 = vmul.f32 %v525, %v600
  %v653 = vmul.f32 %v526, %v600
  %v654 = vmul.f32 %v527, %v600
  %v655 = vmul.f32 %v528, %v600
  %v656 = vmul.f32 %v529, %v600
  %v657 = vmul.f32 %v530, %v600
  %v658 = vmul.f32 %v531, %v600
  %v659 = vmul.f32 %v532, %v600
  %v660 = vmul.f32 %v533, %v600
  %v661 = vmul.f32 %v534, %v600
  %v662 = vmul.f32 %v535, %v600
  %v663 = vmul.f32 %v536, %v600
  %v664 = vmul.f32 %v537, %v600
  %v665 = vmul.f32 %v538, %v600
  %v666 = vmul.f32 %v539, %v600
  %v667 = vmul.f32 %v540, %v600
  %v668 = vmul.f32 %v541, %v600
  %v669 = vmul.f32 %v542, %v600
  %v670 = vmul.f32 %v543, %v600
  %v671 = vmul.f32 %v544, %v600
  %v672 = vmul.f32 %v545, %v600
  %v673 = vmul.f32 %v546, %v600
  %v674 = vmul.f32 %v547, %v600
  %v675 = vmul.f32 %v548, %v600
  %v676 = vmul.f32 %v549, %v600
  %v677 = vmul.f32 %v550, %v600
  %v678 = vmul.f32 %v551, %v600
  %v679 = vmul.f32 %v552, %v600
  %v680 = vmul.f32 %v553, %v600
  %v681 = vmul.f32 %v554, %v600
  %v682 = vmul.f32 %v555, %v600
  %v683 = vmul.f32 %v556, %v600
  %v684 = vmul.f32 %v557, %v600
  %v685 = vmul.f32 %v558, %v600
  %v686 = vmul.f32 %v559, %v600
  %v687 = vmul.f32 %v560, %v600
  %v688 = vmul.f32 %v561, %v600
  %v689 = vmul.f32 %v562, %v600
  %v690 = vmul.f32 %v563, %v600
  %v691 = vmul.f32 %v564, %v600
  %v692 = vmul.f32 %v565, %v600
  %v693 = vmul.f32 %v566, %v600
  %v694 = vmul.f32 %v567, %v600
  %v695 = vmul.f32 %v568, %v600
  %v696 = vmul.f32 %v569, %v600
  %v697 = vmul.f32 %v570, %v600
  %v698 = vmul.f32 %v571, %v600
  %v699 = vmul.f32 %v572, %v600
  %v700 = vmul.f32 %v573, %v600
  %v701 = vmul.f32 %v574, %v600
  %v702 = vmul.f32 %v575, %v600
  %v703 = vmul.f32 %v576, %v600
  %v704 = vmul.f32 %v577, %v600
  %v705 = vmul.f32 %v578, %v600
  %v706 = vmul.f32 %v579, %v600
  %v707 = vmul.f32 %v580, %v600
  %v708 = vmul.f32 %v581, %v600
  %v709 = vmul.f32 %v582, %v600
  %v710 = vmul.f32 %v583, %v600
  %v711 = vmul.f32 %v584, %v600
  %v712 = vmul.f32 %v585, %v600
  %v713 = vadd.f32 %v601, 0.0
  %v714 = vadd.f32 %v602, 0.0
  %v715 = vadd.f32 %v603, 0.0
  %v716 = vadd.f32 %v604, 0.0
  %v717 = vadd.f32 %v605, 0.0
  %v718 = vadd.f32 %v606, 0.0
  %v719 = vadd.f32 %v607, 0.0
  %v720 = vadd.f32 %v608, 0.0
  %v721 = vadd.f32 %v609, 0.0
  %v722 = vadd.f32 %v610, 0.0
  %v723 = vadd.f32 %v611, 0.0
  %v724 = vadd.f32 %v612, 0.0
  %v725 = vadd.f32 %v613, 0.0
  %v726 = vadd.f32 %v614, 0.0
  %v727 = vadd.f32 %v615, 0.0
  %v728 = vadd.f32 %v616, 0.0
  %v729 = vadd.f32 %v617, 0.0
  %v730 = vadd.f32 %v618, 0.0
  %v731 = vadd.f32 %v619, 0.0
  %v732 = vadd.f32 %v620, 0.0
  %v733 = vadd.f32 %v621, 0.0
  %v734 = vadd.f32 %v622, 0.0
  %v735 = vadd.f32 %v623, 0.0
  %v736 = vadd.f32 %v624, 0.0
  %v737 = vadd.f32 %v625, 0.0
  %v738 = vadd.f32 %v626, 0.0
  %v739 = vadd.f32 %v627, 0.0
  %v740 = vadd.f32 %v628, 0.0
  %v741 = vadd.f32 %v629, 0.0
  %v742 = vadd.f32 %v630, 0.0
  %v743 = vadd.f32 %v631, 0.0
  %v744 = vadd.f32 %v632, 0.0
  %v745 = vadd.f32 %v633, 0.0
  %v746 = vadd.f32 %v634, 0.0
  %v747 = vadd.f32 %v635, 0.0
  %v748 = vadd.f32 %v636, 0.0
  %v749 = vadd.f32 %v637, 0.0
  %v750 = vadd.f32 %v638, 0.0
  %v751 = vadd.f32 %v639, 0.0
  %v752 = vadd.f32 %v640, 0.0
  %v753 = vadd.f32 %v641, 0.0
  %v754 = vadd.f32 %v642, 0.0
  %v755 = vadd.f32 %v643, 0.0
  %v756 = vadd.f32 %v644, 0.0
  %v757 = vadd.f32 %v645, 0.0
  %v758 = vadd.f32 %v646, 0.0
  %v759 = vadd.f32 %v647, 0.0
  %v760 = vadd.f32 %v648, 0.0
  %v761 = vadd.f32 %v649, 0.0
  %v762 = vadd.f32 %v650, 0.0
  %v763 = vadd.f32 %v651, 0.0
  %v764 = vadd.f32 %v652, 0.0
  %v765 = vadd.f32 %v653, 0.0
  %v766 = vadd.f32 %v654, 0.0
  %v767 = vadd.f32 %v655, 0.0
  %v768 = vadd.f32 %v656, 0.0
  %v769 = vadd.f32 %v657, 0.0
  %v770 = vadd.f32 %v658, 0.0
  %v771 = vadd.f32 %v659, 0.0
  %v772 = vadd.f32 %v660, 0.0
  %v773 = vadd.f32 %v661, 0.0
  %v774 = vadd.f32 %v662, 0.0
  %v775 = vadd.f32 %v663, 0.0
  %v776 = vadd.f32 %v664, 0.0
  %v777 = vadd.f32 %v665, 0.0
  %v778 = vadd.f32 %v666, 0.0
  %v779 = vadd.f32 %v667, 0.0
  %v780 = vadd.f32 %v668, 0.0
  %v781 = vadd.f32 %v669, 0.0
  %v782 = vadd.f32 %v670, 0.0
  %v783 = vadd.f32 %v671, 0.0
  %v784 = vadd.f32 %v672, 0.0
  %v785 = vadd.f32 %v673, 0.0
  %v786 = vadd.f32 %v674, 0.0
  %v787 = vadd.f32 %v675, 0.0
  %v788 = vadd.f32 %v676, 0.0
  %v789 = vadd.f32 %v677, 0.0
  %v790 = vadd.f32 %v678, 0.0
  %v791 = vadd.f32 %v679, 0.0
  %v792 = vadd.f32 %v680, 0.0
  %v793 = vadd.f32 %v681, 0.0
  %v794 = vadd.f32 %v682, 0.0
  %v795 = vadd.f32 %v683, 0.0
  %v796 = vadd.f32 %v684, 0.0
  %v797 = vadd.f32 %v685, 0.0
  %v798 = vadd.f32 %v686, 0.0
  %v799 = vadd.f32 %v687, 0.0
  %v800 = vadd.f32 %v688, 0.0
  %v801 = vadd.f32 %v689, 0.0
  %v802 = vadd.f32 %v690, 0.0
  %v803 = vadd.f32 %v691, 0.0
  %v804 = vadd.f32 %v692, 0.0
  %v805 = vadd.f32 %v693, 0.0
  %v806 = vadd.f32 %v694, 0.0
  %v807 = vadd.f32 %v695, 0.0
  %v808 = vadd.f32 %v696, 0.0
  %v809 = vadd.f32 %v697, 0.0
  %v810 = vadd.f32 %v698, 0.0
  %v811 = vadd.f32 %v699, 0.0
  %v812 = vadd.f32 %v700, 0.0
  %v813 = vadd.f32 %v701, 0.0
  %v814 = vadd.f32 %v702, 0.0
  %v815 = vadd.f32 %v703, 0.0
  %v816 = vadd.f32 %v704, 0.0
  %v817 = vadd.f32 %v705, 0.0
  %v818 = vadd.f32 %v706, 0.0
  %v819 = vadd.f32 %v707, 0.0
  %v820 = vadd.f32 %v708, 0.0
  %v821 = vadd.f32 %v709, 0.0
  %v822 = vadd.f32 %v710, 0.0
  %v823 = vadd.f32 %v711, 0.0
  %v824 = vadd.f32 %v712, 0.0
  %v825 = vlaneseq
  %v826 = vshrl.u32 %v825, 7
  %v827 = vsub.s32 1, %v826
  %v828 = vrot.slane %v594, %v827
  %v829 = vmul.f32 %v474, %v828
  %v830 = vmul.f32 %v475, %v828
  %v831 = vmul.f32 %v476, %v828
  %v832 = vmul.f32 %v477, %v828
  %v833 = vmul.f32 %v478, %v828
  %v834 = vmul.f32 %v479, %v828
  %v835 = vmul.f32 %v480, %v828
  %v836 = vmul.f32 %v481, %v828
  %v837 = vmul.f32 %v482, %v828
  %v838 = vmul.f32 %v483, %v828
  %v839 = vmul.f32 %v484, %v828
  %v840 = vmul.f32 %v485, %v828
  %v841 = vmul.f32 %v486, %v828
  %v842 = vmul.f32 %v487, %v828
  %v843 = vmul.f32 %v488, %v828
  %v844 = vmul.f32 %v489, %v828
  %v845 = vmul.f32 %v490, %v828
  %v846 = vmul.f32 %v491, %v828
  %v847 = vmul.f32 %v492, %v828
  %v848 = vmul.f32 %v493, %v828
  %v849 = vmul.f32 %v494, %v828
  %v850 = vmul.f32 %v495, %v828
  %v851 = vmul.f32 %v496, %v828
  %v852 = vmul.f32 %v497, %v828
  %v853 = vmul.f32 %v498, %v828
  %v854 = vmul.f32 %v499, %v828
  %v855 = vmul.f32 %v500, %v828
  %v856 = vmul.f32 %v501, %v828
  %v857 = vmul.f32 %v502, %v828
  %v858 = vmul.f32 %v503, %v828
  %v859 = vmul.f32 %v504, %v828
  %v860 = vmul.f32 %v505, %v828
  %v861 = vmul.f32 %v506, %v828
  %v862 = vmul.f32 %v507, %v828
  %v863 = vmul.f32 %v508, %v828
  %v864 = vmul.f32 %v509, %v828
  %v865 = vmul.f32 %v510, %v828
  %v866 = vmul.f32 %v511, %v828
  %v867 = vmul.f32 %v512, %v828
  %v868 = vmul.f32 %v513, %v828
  %v869 = vmul.f32 %v514, %v828
  %v870 = vmul.f32 %v515, %v828
  %v871 = vmul.f32 %v516, %v828
  %v872 = vmul.f32 %v517, %v828
  %v873 = vmul.f32 %v518, %v828
  %v874 = vmul.f32 %v519, %v828
  %v875 = vmul.f32 %v520, %v828
  %v876 = vmul.f32 %v521, %v828
  %v877 = vmul.f32 %v522, %v828
  %v878 = vmul.f32 %v523, %v828
  %v879 = vmul.f32 %v524, %v828
  %v880 = vmul.f32 %v525, %v828
  %v881 = vmul.f32 %v526, %v828
  %v882 = vmul.f32 %v527, %v828
  %v883 = vmul.f32 %v528, %v828
  %v884 = vmul.f32 %v529, %v828
  %v885 = vmul.f32 %v530, %v828
  %v886 = vmul.f32 %v531, %v828
  %v887 = vmul.f32 %v532, %v828
  %v888 = vmul.f32 %v533, %v828
  %v889 = vmul.f32 %v534, %v828
  %v890 = vmul.f32 %v535, %v828
  %v891 = vmul.f32 %v536, %v828
  %v892 = vmul.f32 %v537, %v828
  %v893 = vmul.f32 %v538, %v828
  %v894 = vmul.f32 %v539, %v828
  %v895 = vmul.f32 %v540, %v828
  %v896 = vmul.f32 %v541, %v828
  %v897 = vmul.f32 %v542, %v828
  %v898 = vmul.f32 %v543, %v828
  %v899 = vmul.f32 %v544, %v828
  %v900 = vmul.f32 %v545, %v828
  %v901 = vmul.f32 %v546, %v828
  %v902 = vmul.f32 %v547, %v828
  %v903 = vmul.f32 %v548, %v828
  %v904 = vmul.f32 %v549, %v828
  %v905 = vmul.f32 %v550, %v828
  %v906 = vmul.f32 %v551, %v828
  %v907 = vmul.f32 %v552, %v828
  %v908 = vmul.f32 %v553, %v828
  %v909 = vmul.f32 %v554, %v828
  %v910 = vmul.f32 %v555, %v828
  %v911 = vmul.f32 %v556, %v828
  %v912 = vmul.f32 %v557, %v828
  %v913 = vmul.f32 %v558, %v828
  %v914 = vmul.f32 %v559, %v828
  %v915 = vmul.f32 %v560, %v828
  %v916 = vmul.f32 %v561, %v828
  %v917 = vmul.f32 %v562, %v828
  %v918 = vmul.f32 %v563, %v828
  %v919 = vmul.f32 %v564, %v828
  %v920 = vmul.f32 %v565, %v828
  %v921 = vmul.f32 %v566, %v828
  %v922 = vmul.f32 %v567, %v828
  %v923 = vmul.f32 %v568, %v828
  %v924 = vmul.f32 %v569, %v828
  %v925 = vmul.f32 %v570, %v828
  %v926 = vmul.f32 %v571, %v828
  %v927 = vmul.f32 %v572, %v828
  %v928 = vmul.f32 %v573, %v828
  %v929 = vmul.f32 %v574, %v828
  %v930 = vmul.f32 %v575, %v828
  %v931 = vmul.f32 %v576, %v828
  %v932 = vmul.f32 %v577, %v828
  %v933 = vmul.f32 %v578, %v828
  %v934 = vmul.f32 %v579, %v828
  %v935 = vmul.f32 %v580, %v828
  %v936 = vmul.f32 %v581, %v828
  %v937 = vmul.f32 %v582, %v828
  %v938 = vmul.f32 %v583, %v828
  %v939 = vmul.f32 %v584, %v828
  %v940 = vmul.f32 %v585, %v828
  %vm1053 = vcmask 1046528
  %v1054 = vrot.slane %v829, 1
  %v1055 = vrot.slane %v830, 1
  %v1056 = vsel %vm1053, %v1054, %v1055
  %v1057 = vrot.slane %v831, 1
  %v1058 = vsel %vm1053, %v1055, %v1057
  %v1059 = vrot.slane %v832, 1
  %v1060 = vsel %vm1053, %v1057, %v1059
  %v1061 = vrot.slane %v833, 1
  %v1062 = vrot.slane %v834, 1
  %v1063 = vsel %vm1053, %v1061, %v1062
  %v1064 = vrot.slane %v835, 1
  %v1065 = vsel %vm1053, %v1062, %v1064
  %v1066 = vrot.slane %v836, 1
  %v1067 = vsel %vm1053, %v1064, %v1066
  %v1068 = vrot.slane %v837, 1
  %v1069 = vrot.slane %v838, 1
  %v1070 = vsel %vm1053, %v1068, %v1069
  %v1071 = vrot.slane %v839, 1
  %v1072 = vsel %vm1053, %v1069, %v1071
  %v1073 = vrot.slane %v840, 1
  %v1074 = vsel %vm1053, %v1071, %v1073
  %v1075 = vrot.slane %v841, 1
  %v1076 = vrot.slane %v842, 1
  %v1077 = vsel %vm1053, %v1075, %v1076
  %v1078 = vrot.slane %v843, 1
  %v1079 = vsel %vm1053, %v1076, %v1078
  %v1080 = vrot.slane %v844, 1
  %v1081 = vsel %vm1053, %v1078, %v1080
  %v1082 = vrot.slane %v845, 1
  %v1083 = vrot.slane %v846, 1
  %v1084 = vsel %vm1053, %v1082, %v1083
  %v1085 = vrot.slane %v847, 1
  %v1086 = vsel %vm1053, %v1083, %v1085
  %v1087 = vrot.slane %v848, 1
  %v1088 = vsel %vm1053, %v1085, %v1087
  %v1089 = vrot.slane %v849, 1
  %v1090 = vrot.slane %v850, 1
  %v1091 = vsel %vm1053, %v1089, %v1090
  %v1092 = vrot.slane %v851, 1
  %v1093 = vsel %vm1053, %v1090, %v1092
  %v1094 = vrot.slane %v852, 1
  %v1095 = vsel %vm1053, %v1092, %v1094
  %v1096 = vrot.slane %v853, 1
  %v1097 = vrot.slane %v854, 1
  %v1098 = vsel %vm1053, %v1096, %v1097
  %v1099 = vrot.slane %v855, 1
  %v1100 = vsel %vm1053, %v1097, %v1099
  %v1101 = vrot.slane %v856, 1
  %v1102 = vsel %vm1053, %v1099, %v1101
  %v1103 = vrot.slane %v857, 1
  %v1104 = vrot.slane %v858, 1
  %v1105 = vsel %vm1053, %v1103, %v1104
  %v1106 = vrot.slane %v859, 1
  %v1107 = vsel %vm1053, %v1104, %v1106
  %v1108 = vrot.slane %v860, 1
  %v1109 = vsel %vm1053, %v1106, %v1108
  %v1110 = vrot.slane %v861, 1
  %v1111 = vrot.slane %v862, 1
  %v1112 = vsel %vm1053, %v1110, %v1111
  %v1113 = vrot.slane %v863, 1
  %v1114 = vsel %vm1053, %v1111, %v1113
  %v1115 = vrot.slane %v864, 1
  %v1116 = vsel %vm1053, %v1113, %v1115
  %v1117 = vrot.slane %v865, 1
  %v1118 = vrot.slane %v866, 1
  %v1119 = vsel %vm1053, %v1117, %v1118
  %v1120 = vrot.slane %v867, 1
  %v1121 = vsel %vm1053, %v1118, %v1120
  %v1122 = vrot.slane %v868, 1
  %v1123 = vsel %vm1053, %v1120, %v1122
  %v1124 = vrot.slane %v869, 1
  %v1125 = vrot.slane %v870, 1
  %v1126 = vsel %vm1053, %v1124, %v1125
  %v1127 = vrot.slane %v871, 1
  %v1128 = vsel %vm1053, %v1125, %v1127
  %v1129 = vrot.slane %v872, 1
  %v1130 = vsel %vm1053, %v1127, %v1129
  %v1131 = vrot.slane %v873, 1
  %v1132 = vrot.slane %v874, 1
  %v1133 = vsel %vm1053, %v1131, %v1132
  %v1134 = vrot.slane %v875, 1
  %v1135 = vsel %vm1053, %v1132, %v1134
  %v1136 = vrot.slane %v876, 1
  %v1137 = vsel %vm1053, %v1134, %v1136
  %v1138 = vrot.slane %v877, 1
  %v1139 = vrot.slane %v878, 1
  %v1140 = vsel %vm1053, %v1138, %v1139
  %v1141 = vrot.slane %v879, 1
  %v1142 = vsel %vm1053, %v1139, %v1141
  %v1143 = vrot.slane %v880, 1
  %v1144 = vsel %vm1053, %v1141, %v1143
  %v1145 = vrot.slane %v881, 1
  %v1146 = vrot.slane %v882, 1
  %v1147 = vsel %vm1053, %v1145, %v1146
  %v1148 = vrot.slane %v883, 1
  %v1149 = vsel %vm1053, %v1146, %v1148
  %v1150 = vrot.slane %v884, 1
  %v1151 = vsel %vm1053, %v1148, %v1150
  %v1152 = vrot.slane %v885, 1
  %v1153 = vrot.slane %v886, 1
  %v1154 = vsel %vm1053, %v1152, %v1153
  %v1155 = vrot.slane %v887, 1
  %v1156 = vsel %vm1053, %v1153, %v1155
  %v1157 = vrot.slane %v888, 1
  %v1158 = vsel %vm1053, %v1155, %v1157
  %v1159 = vrot.slane %v889, 1
  %v1160 = vrot.slane %v890, 1
  %v1161 = vsel %vm1053, %v1159, %v1160
  %v1162 = vrot.slane %v891, 1
  %v1163 = vsel %vm1053, %v1160, %v1162
  %v1164 = vrot.slane %v892, 1
  %v1165 = vsel %vm1053, %v1162, %v1164
  %v1166 = vrot.slane %v893, 1
  %v1167 = vrot.slane %v894, 1
  %v1168 = vsel %vm1053, %v1166, %v1167
  %v1169 = vrot.slane %v895, 1
  %v1170 = vsel %vm1053, %v1167, %v1169
  %v1171 = vrot.slane %v896, 1
  %v1172 = vsel %vm1053, %v1169, %v1171
  %v1173 = vrot.slane %v897, 1
  %v1174 = vrot.slane %v898, 1
  %v1175 = vsel %vm1053, %v1173, %v1174
  %v1176 = vrot.slane %v899, 1
  %v1177 = vsel %vm1053, %v1174, %v1176
  %v1178 = vrot.slane %v900, 1
  %v1179 = vsel %vm1053, %v1176, %v1178
  %v1180 = vrot.slane %v901, 1
  %v1181 = vrot.slane %v902, 1
  %v1182 = vsel %vm1053, %v1180, %v1181
  %v1183 = vrot.slane %v903, 1
  %v1184 = vsel %vm1053, %v1181, %v1183
  %v1185 = vrot.slane %v904, 1
  %v1186 = vsel %vm1053, %v1183, %v1185
  %v1187 = vrot.slane %v905, 1
  %v1188 = vrot.slane %v906, 1
  %v1189 = vsel %vm1053, %v1187, %v1188
  %v1190 = vrot.slane %v907, 1
  %v1191 = vsel %vm1053, %v1188, %v1190
  %v1192 = vrot.slane %v908, 1
  %v1193 = vsel %vm1053, %v1190, %v1192
  %v1194 = vrot.slane %v909, 1
  %v1195 = vrot.slane %v910, 1
  %v1196 = vsel %vm1053, %v1194, %v1195
  %v1197 = vrot.slane %v911, 1
  %v1198 = vsel %vm1053, %v1195, %v1197
  %v1199 = vrot.slane %v912, 1
  %v1200 = vsel %vm1053, %v1197, %v1199
  %v1201 = vrot.slane %v913, 1
  %v1202 = vrot.slane %v914, 1
  %v1203 = vsel %vm1053, %v1201, %v1202
  %v1204 = vrot.slane %v915, 1
  %v1205 = vsel %vm1053, %v1202, %v1204
  %v1206 = vrot.slane %v916, 1
  %v1207 = vsel %vm1053, %v1204, %v1206
  %v1208 = vrot.slane %v917, 1
  %v1209 = vrot.slane %v918, 1
  %v1210 = vsel %vm1053, %v1208, %v1209
  %v1211 = vrot.slane %v919, 1
  %v1212 = vsel %vm1053, %v1209, %v1211
  %v1213 = vrot.slane %v920, 1
  %v1214 = vsel %vm1053, %v1211, %v1213
  %v1215 = vrot.slane %v921, 1
  %v1216 = vrot.slane %v922, 1
  %v1217 = vsel %vm1053, %v1215, %v1216
  %v1218 = vrot.slane %v923, 1
  %v1219 = vsel %vm1053, %v1216, %v1218
  %v1220 = vrot.slane %v924, 1
  %v1221 = vsel %vm1053, %v1218, %v1220
  %v1222 = vrot.slane %v925, 1
  %v1223 = vrot.slane %v926, 1
  %v1224 = vsel %vm1053, %v1222, %v1223
  %v1225 = vrot.slane %v927, 1
  %v1226 = vsel %vm1053, %v1223, %v1225
  %v1227 = vrot.slane %v928, 1
  %v1228 = vsel %vm1053, %v1225, %v1227
  %v1229 = vrot.slane %v929, 1
  %v1230 = vrot.slane %v930, 1
  %v1231 = vsel %vm1053, %v1229, %v1230
  %v1232 = vrot.slane %v931, 1
  %v1233 = vsel %vm1053, %v1230, %v1232
  %v1234 = vrot.slane %v932, 1
  %v1235 = vsel %vm1053, %v1232, %v1234
  %v1236 = vrot.slane %v933, 1
  %v1237 = vrot.slane %v934, 1
  %v1238 = vsel %vm1053, %v1236, %v1237
  %v1239 = vrot.slane %v935, 1
  %v1240 = vsel %vm1053, %v1237, %v1239
  %v1241 = vrot.slane %v936, 1
  %v1242 = vsel %vm1053, %v1239, %v1241
  %v1243 = vrot.slane %v937, 1
  %v1244 = vrot.slane %v938, 1
  %v1245 = vsel %vm1053, %v1243, %v1244
  %v1246 = vrot.slane %v939, 1
  %v1247 = vsel %vm1053, %v1244, %v1246
  %v1248 = vrot.slane %v940, 1
  %v1249 = vsel %vm1053, %v1246, %v1248
  %v1362 = vadd.f32 %v713, %v1056
  %v1363 = vadd.f32 %v714, %v1058
  %v1364 = vadd.f32 %v715, %v1060
  %v1365 = vadd.f32 %v716, %v1059
  %v1366 = vadd.f32 %v717, %v1063
  %v1367 = vadd.f32 %v718, %v1065
  %v1368 = vadd.f32 %v719, %v1067
  %v1369 = vadd.f32 %v720, %v1066
  %v1370 = vadd.f32 %v721, %v1070
  %v1371 = vadd.f32 %v722, %v1072
  %v1372 = vadd.f32 %v723, %v1074
  %v1373 = vadd.f32 %v724, %v1073
  %v1374 = vadd.f32 %v725, %v1077
  %v1375 = vadd.f32 %v726, %v1079
  %v1376 = vadd.f32 %v727, %v1081
  %v1377 = vadd.f32 %v728, %v1080
  %v1378 = vadd.f32 %v729, %v1084
  %v1379 = vadd.f32 %v730, %v1086
  %v1380 = vadd.f32 %v731, %v1088
  %v1381 = vadd.f32 %v732, %v1087
  %v1382 = vadd.f32 %v733, %v1091
  %v1383 = vadd.f32 %v734, %v1093
  %v1384 = vadd.f32 %v735, %v1095
  %v1385 = vadd.f32 %v736, %v1094
  %v1386 = vadd.f32 %v737, %v1098
  %v1387 = vadd.f32 %v738, %v1100
  %v1388 = vadd.f32 %v739, %v1102
  %v1389 = vadd.f32 %v740, %v1101
  %v1390 = vadd.f32 %v741, %v1105
  %v1391 = vadd.f32 %v742, %v1107
  %v1392 = vadd.f32 %v743, %v1109
  %v1393 = vadd.f32 %v744, %v1108
  %v1394 = vadd.f32 %v745, %v1112
  %v1395 = vadd.f32 %v746, %v1114
  %v1396 = vadd.f32 %v747, %v1116
  %v1397 = vadd.f32 %v748, %v1115
  %v1398 = vadd.f32 %v749, %v1119
  %v1399 = vadd.f32 %v750, %v1121
  %v1400 = vadd.f32 %v751, %v1123
  %v1401 = vadd.f32 %v752, %v1122
  %v1402 = vadd.f32 %v753, %v1126
  %v1403 = vadd.f32 %v754, %v1128
  %v1404 = vadd.f32 %v755, %v1130
  %v1405 = vadd.f32 %v756, %v1129
  %v1406 = vadd.f32 %v757, %v1133
  %v1407 = vadd.f32 %v758, %v1135
  %v1408 = vadd.f32 %v759, %v1137
  %v1409 = vadd.f32 %v760, %v1136
  %v1410 = vadd.f32 %v761, %v1140
  %v1411 = vadd.f32 %v762, %v1142
  %v1412 = vadd.f32 %v763, %v1144
  %v1413 = vadd.f32 %v764, %v1143
  %v1414 = vadd.f32 %v765, %v1147
  %v1415 = vadd.f32 %v766, %v1149
  %v1416 = vadd.f32 %v767, %v1151
  %v1417 = vadd.f32 %v768, %v1150
  %v1418 = vadd.f32 %v769, %v1154
  %v1419 = vadd.f32 %v770, %v1156
  %v1420 = vadd.f32 %v771, %v1158
  %v1421 = vadd.f32 %v772, %v1157
  %v1422 = vadd.f32 %v773, %v1161
  %v1423 = vadd.f32 %v774, %v1163
  %v1424 = vadd.f32 %v775, %v1165
  %v1425 = vadd.f32 %v776, %v1164
  %v1426 = vadd.f32 %v777, %v1168
  %v1427 = vadd.f32 %v778, %v1170
  %v1428 = vadd.f32 %v779, %v1172
  %v1429 = vadd.f32 %v780, %v1171
  %v1430 = vadd.f32 %v781, %v1175
  %v1431 = vadd.f32 %v782, %v1177
  %v1432 = vadd.f32 %v783, %v1179
  %v1433 = vadd.f32 %v784, %v1178
  %v1434 = vadd.f32 %v785, %v1182
  %v1435 = vadd.f32 %v786, %v1184
  %v1436 = vadd.f32 %v787, %v1186
  %v1437 = vadd.f32 %v788, %v1185
  %v1438 = vadd.f32 %v789, %v1189
  %v1439 = vadd.f32 %v790, %v1191
  %v1440 = vadd.f32 %v791, %v1193
  %v1441 = vadd.f32 %v792, %v1192
  %v1442 = vadd.f32 %v793, %v1196
  %v1443 = vadd.f32 %v794, %v1198
  %v1444 = vadd.f32 %v795, %v1200
  %v1445 = vadd.f32 %v796, %v1199
  %v1446 = vadd.f32 %v797, %v1203
  %v1447 = vadd.f32 %v798, %v1205
  %v1448 = vadd.f32 %v799, %v1207
  %v1449 = vadd.f32 %v800, %v1206
  %v1450 = vadd.f32 %v801, %v1210
  %v1451 = vadd.f32 %v802, %v1212
  %v1452 = vadd.f32 %v803, %v1214
  %v1453 = vadd.f32 %v804, %v1213
  %v1454 = vadd.f32 %v805, %v1217
  %v1455 = vadd.f32 %v806, %v1219
  %v1456 = vadd.f32 %v807, %v1221
  %v1457 = vadd.f32 %v808, %v1220
  %v1458 = vadd.f32 %v809, %v1224
  %v1459 = vadd.f32 %v810, %v1226
  %v1460 = vadd.f32 %v811, %v1228
  %v1461 = vadd.f32 %v812, %v1227
  %v1462 = vadd.f32 %v813, %v1231
  %v1463 = vadd.f32 %v814, %v1233
  %v1464 = vadd.f32 %v815, %v1235
  %v1465 = vadd.f32 %v816, %v1234
  %v1466 = vadd.f32 %v817, %v1238
  %v1467 = vadd.f32 %v818, %v1240
  %v1468 = vadd.f32 %v819, %v1242
  %v1469 = vadd.f32 %v820, %v1241
  %v1470 = vadd.f32 %v821, %v1245
  %v1471 = vadd.f32 %v822, %v1247
  %v1472 = vadd.f32 %v823, %v1249
  %v1473 = vadd.f32 %v824, %v1248
  %v1474 = vlaneseq
  %v1475 = vshrl.u32 %v1474, 7
  %v1476 = vsub.s32 2, %v1475
  %v1477 = vrot.slane %v594, %v1476
  %v1478 = vmul.f32 %v474, %v1477
  %v1479 = vmul.f32 %v475, %v1477
  %v1480 = vmul.f32 %v476, %v1477
  %v1481 = vmul.f32 %v477, %v1477
  %v1482 = vmul.f32 %v478, %v1477
  %v1483 = vmul.f32 %v479, %v1477
  %v1484 = vmul.f32 %v480, %v1477
  %v1485 = vmul.f32 %v481, %v1477
  %v1486 = vmul.f32 %v482, %v1477
  %v1487 = vmul.f32 %v483, %v1477
  %v1488 = vmul.f32 %v484, %v1477
  %v1489 = vmul.f32 %v485, %v1477
  %v1490 = vmul.f32 %v486, %v1477
  %v1491 = vmul.f32 %v487, %v1477
  %v1492 = vmul.f32 %v488, %v1477
  %v1493 = vmul.f32 %v489, %v1477
  %v1494 = vmul.f32 %v490, %v1477
  %v1495 = vmul.f32 %v491, %v1477
  %v1496 = vmul.f32 %v492, %v1477
  %v1497 = vmul.f32 %v493, %v1477
  %v1498 = vmul.f32 %v494, %v1477
  %v1499 = vmul.f32 %v495, %v1477
  %v1500 = vmul.f32 %v496, %v1477
  %v1501 = vmul.f32 %v497, %v1477
  %v1502 = vmul.f32 %v498, %v1477
  %v1503 = vmul.f32 %v499, %v1477
  %v1504 = vmul.f32 %v500, %v1477
  %v1505 = vmul.f32 %v501, %v1477
  %v1506 = vmul.f32 %v502, %v1477
  %v1507 = vmul.f32 %v503, %v1477
  %v1508 = vmul.f32 %v504, %v1477
  %v1509 = vmul.f32 %v505, %v1477
  %v1510 = vmul.f32 %v506, %v1477
  %v1511 = vmul.f32 %v507, %v1477
  %v1512 = vmul.f32 %v508, %v1477
  %v1513 = vmul.f32 %v509, %v1477
  %v1514 = vmul.f32 %v510, %v1477
  %v1515 = vmul.f32 %v511, %v1477
  %v1516 = vmul.f32 %v512, %v1477
  %v1517 = vmul.f32 %v513, %v1477
  %v1518 = vmul.f32 %v514, %v1477
  %v1519 = vmul.f32 %v515, %v1477
  %v1520 = vmul.f32 %v516, %v1477
  %v1521 = vmul.f32 %v517, %v1477
  %v1522 = vmul.f32 %v518, %v1477
  %v1523 = vmul.f32 %v519, %v1477
  %v1524 = vmul.f32 %v520, %v1477
  %v1525 = vmul.f32 %v521, %v1477
  %v1526 = vmul.f32 %v522, %v1477
  %v1527 = vmul.f32 %v523, %v1477
  %v1528 = vmul.f32 %v524, %v1477
  %v1529 = vmul.f32 %v525, %v1477
  %v1530 = vmul.f32 %v526, %v1477
  %v1531 = vmul.f32 %v527, %v1477
  %v1532 = vmul.f32 %v528, %v1477
  %v1533 = vmul.f32 %v529, %v1477
  %v1534 = vmul.f32 %v530, %v1477
  %v1535 = vmul.f32 %v531, %v1477
  %v1536 = vmul.f32 %v532, %v1477
  %v1537 = vmul.f32 %v533, %v1477
  %v1538 = vmul.f32 %v534, %v1477
  %v1539 = vmul.f32 %v535, %v1477
  %v1540 = vmul.f32 %v536, %v1477
  %v1541 = vmul.f32 %v537, %v1477
  %v1542 = vmul.f32 %v538, %v1477
  %v1543 = vmul.f32 %v539, %v1477
  %v1544 = vmul.f32 %v540, %v1477
  %v1545 = vmul.f32 %v541, %v1477
  %v1546 = vmul.f32 %v542, %v1477
  %v1547 = vmul.f32 %v543, %v1477
  %v1548 = vmul.f32 %v544, %v1477
  %v1549 = vmul.f32 %v545, %v1477
  %v1550 = vmul.f32 %v546, %v1477
  %v1551 = vmul.f32 %v547, %v1477
  %v1552 = vmul.f32 %v548, %v1477
  %v1553 = vmul.f32 %v549, %v1477
  %v1554 = vmul.f32 %v550, %v1477
  %v1555 = vmul.f32 %v551, %v1477
  %v1556 = vmul.f32 %v552, %v1477
  %v1557 = vmul.f32 %v553, %v1477
  %v1558 = vmul.f32 %v554, %v1477
  %v1559 = vmul.f32 %v555, %v1477
  %v1560 = vmul.f32 %v556, %v1477
  %v1561 = vmul.f32 %v557, %v1477
  %v1562 = vmul.f32 %v558, %v1477
  %v1563 = vmul.f32 %v559, %v1477
  %v1564 = vmul.f32 %v560, %v1477
  %v1565 = vmul.f32 %v561, %v1477
  %v1566 = vmul.f32 %v562, %v1477
  %v1567 = vmul.f32 %v563, %v1477
  %v1568 = vmul.f32 %v564, %v1477
  %v1569 = vmul.f32 %v565, %v1477
  %v1570 = vmul.f32 %v566, %v1477
  %v1571 = vmul.f32 %v567, %v1477
  %v1572 = vmul.f32 %v568, %v1477
  %v1573 = vmul.f32 %v569, %v1477
  %v1574 = vmul.f32 %v570, %v1477
  %v1575 = vmul.f32 %v571, %v1477
  %v1576 = vmul.f32 %v572, %v1477
  %v1577 = vmul.f32 %v573, %v1477
  %v1578 = vmul.f32 %v574, %v1477
  %v1579 = vmul.f32 %v575, %v1477
  %v1580 = vmul.f32 %v576, %v1477
  %v1581 = vmul.f32 %v577, %v1477
  %v1582 = vmul.f32 %v578, %v1477
  %v1583 = vmul.f32 %v579, %v1477
  %v1584 = vmul.f32 %v580, %v1477
  %v1585 = vmul.f32 %v581, %v1477
  %v1586 = vmul.f32 %v582, %v1477
  %v1587 = vmul.f32 %v583, %v1477
  %v1588 = vmul.f32 %v584, %v1477
  %v1589 = vmul.f32 %v585, %v1477
  %vm1702 = vcmask 1045504
  %v1703 = vrot.slane %v1478, 2
  %v1704 = vrot.slane %v1479, 2
  %v1705 = vsel %vm1702, %v1703, %v1704
  %v1706 = vrot.slane %v1480, 2
  %v1707 = vsel %vm1702, %v1704, %v1706
  %v1708 = vrot.slane %v1481, 2
  %v1709 = vsel %vm1702, %v1706, %v1708
  %v1710 = vrot.slane %v1482, 2
  %v1711 = vrot.slane %v1483, 2
  %v1712 = vsel %vm1702, %v1710, %v1711
  %v1713 = vrot.slane %v1484, 2
  %v1714 = vsel %vm1702, %v1711, %v1713
  %v1715 = vrot.slane %v1485, 2
  %v1716 = vsel %vm1702, %v1713, %v1715
  %v1717 = vrot.slane %v1486, 2
  %v1718 = vrot.slane %v1487, 2
  %v1719 = vsel %vm1702, %v1717, %v1718
  %v1720 = vrot.slane %v1488, 2
  %v1721 = vsel %vm1702, %v1718, %v1720
  %v1722 = vrot.slane %v1489, 2
  %v1723 = vsel %vm1702, %v1720, %v1722
  %v1724 = vrot.slane %v1490, 2
  %v1725 = vrot.slane %v1491, 2
  %v1726 = vsel %vm1702, %v1724, %v1725
  %v1727 = vrot.slane %v1492, 2
  %v1728 = vsel %vm1702, %v1725, %v1727
  %v1729 = vrot.slane %v1493, 2
  %v1730 = vsel %vm1702, %v1727, %v1729
  %v1731 = vrot.slane %v1494, 2
  %v1732 = vrot.slane %v1495, 2
  %v1733 = vsel %vm1702, %v1731, %v1732
  %v1734 = vrot.slane %v1496, 2
  %v1735 = vsel %vm1702, %v1732, %v1734
  %v1736 = vrot.slane %v1497, 2
  %v1737 = vsel %vm1702, %v1734, %v1736
  %v1738 = vrot.slane %v1498, 2
  %v1739 = vrot.slane %v1499, 2
  %v1740 = vsel %vm1702, %v1738, %v1739
  %v1741 = vrot.slane %v1500, 2
  %v1742 = vsel %vm1702, %v1739, %v1741
  %v1743 = vrot.slane %v1501, 2
  %v1744 = vsel %vm1702, %v1741, %v1743
  %v1745 = vrot.slane %v1502, 2
  %v1746 = vrot.slane %v1503, 2
  %v1747 = vsel %vm1702, %v1745, %v1746
  %v1748 = vrot.slane %v1504, 2
  %v1749 = vsel %vm1702, %v1746, %v1748
  %v1750 = vrot.slane %v1505, 2
  %v1751 = vsel %vm1702, %v1748, %v1750
  %v1752 = vrot.slane %v1506, 2
  %v1753 = vrot.slane %v1507, 2
  %v1754 = vsel %vm1702, %v1752, %v1753
  %v1755 = vrot.slane %v1508, 2
  %v1756 = vsel %vm1702, %v1753, %v1755
  %v1757 = vrot.slane %v1509, 2
  %v1758 = vsel %vm1702, %v1755, %v1757
  %v1759 = vrot.slane %v1510, 2
  %v1760 = vrot.slane %v1511, 2
  %v1761 = vsel %vm1702, %v1759, %v1760
  %v1762 = vrot.slane %v1512, 2
  %v1763 = vsel %vm1702, %v1760, %v1762
  %v1764 = vrot.slane %v1513, 2
  %v1765 = vsel %vm1702, %v1762, %v1764
  %v1766 = vrot.slane %v1514, 2
  %v1767 = vrot.slane %v1515, 2
  %v1768 = vsel %vm1702, %v1766, %v1767
  %v1769 = vrot.slane %v1516, 2
  %v1770 = vsel %vm1702, %v1767, %v1769
  %v1771 = vrot.slane %v1517, 2
  %v1772 = vsel %vm1702, %v1769, %v1771
  %v1773 = vrot.slane %v1518, 2
  %v1774 = vrot.slane %v1519, 2
  %v1775 = vsel %vm1702, %v1773, %v1774
  %v1776 = vrot.slane %v1520, 2
  %v1777 = vsel %vm1702, %v1774, %v1776
  %v1778 = vrot.slane %v1521, 2
  %v1779 = vsel %vm1702, %v1776, %v1778
  %v1780 = vrot.slane %v1522, 2
  %v1781 = vrot.slane %v1523, 2
  %v1782 = vsel %vm1702, %v1780, %v1781
  %v1783 = vrot.slane %v1524, 2
  %v1784 = vsel %vm1702, %v1781, %v1783
  %v1785 = vrot.slane %v1525, 2
  %v1786 = vsel %vm1702, %v1783, %v1785
  %v1787 = vrot.slane %v1526, 2
  %v1788 = vrot.slane %v1527, 2
  %v1789 = vsel %vm1702, %v1787, %v1788
  %v1790 = vrot.slane %v1528, 2
  %v1791 = vsel %vm1702, %v1788, %v1790
  %v1792 = vrot.slane %v1529, 2
  %v1793 = vsel %vm1702, %v1790, %v1792
  %v1794 = vrot.slane %v1530, 2
  %v1795 = vrot.slane %v1531, 2
  %v1796 = vsel %vm1702, %v1794, %v1795
  %v1797 = vrot.slane %v1532, 2
  %v1798 = vsel %vm1702, %v1795, %v1797
  %v1799 = vrot.slane %v1533, 2
  %v1800 = vsel %vm1702, %v1797, %v1799
  %v1801 = vrot.slane %v1534, 2
  %v1802 = vrot.slane %v1535, 2
  %v1803 = vsel %vm1702, %v1801, %v1802
  %v1804 = vrot.slane %v1536, 2
  %v1805 = vsel %vm1702, %v1802, %v1804
  %v1806 = vrot.slane %v1537, 2
  %v1807 = vsel %vm1702, %v1804, %v1806
  %v1808 = vrot.slane %v1538, 2
  %v1809 = vrot.slane %v1539, 2
  %v1810 = vsel %vm1702, %v1808, %v1809
  %v1811 = vrot.slane %v1540, 2
  %v1812 = vsel %vm1702, %v1809, %v1811
  %v1813 = vrot.slane %v1541, 2
  %v1814 = vsel %vm1702, %v1811, %v1813
  %v1815 = vrot.slane %v1542, 2
  %v1816 = vrot.slane %v1543, 2
  %v1817 = vsel %vm1702, %v1815, %v1816
  %v1818 = vrot.slane %v1544, 2
  %v1819 = vsel %vm1702, %v1816, %v1818
  %v1820 = vrot.slane %v1545, 2
  %v1821 = vsel %vm1702, %v1818, %v1820
  %v1822 = vrot.slane %v1546, 2
  %v1823 = vrot.slane %v1547, 2
  %v1824 = vsel %vm1702, %v1822, %v1823
  %v1825 = vrot.slane %v1548, 2
  %v1826 = vsel %vm1702, %v1823, %v1825
  %v1827 = vrot.slane %v1549, 2
  %v1828 = vsel %vm1702, %v1825, %v1827
  %v1829 = vrot.slane %v1550, 2
  %v1830 = vrot.slane %v1551, 2
  %v1831 = vsel %vm1702, %v1829, %v1830
  %v1832 = vrot.slane %v1552, 2
  %v1833 = vsel %vm1702, %v1830, %v1832
  %v1834 = vrot.slane %v1553, 2
  %v1835 = vsel %vm1702, %v1832, %v1834
  %v1836 = vrot.slane %v1554, 2
  %v1837 = vrot.slane %v1555, 2
  %v1838 = vsel %vm1702, %v1836, %v1837
  %v1839 = vrot.slane %v1556, 2
  %v1840 = vsel %vm1702, %v1837, %v1839
  %v1841 = vrot.slane %v1557, 2
  %v1842 = vsel %vm1702, %v1839, %v1841
  %v1843 = vrot.slane %v1558, 2
  %v1844 = vrot.slane %v1559, 2
  %v1845 = vsel %vm1702, %v1843, %v1844
  %v1846 = vrot.slane %v1560, 2
  %v1847 = vsel %vm1702, %v1844, %v1846
  %v1848 = vrot.slane %v1561, 2
  %v1849 = vsel %vm1702, %v1846, %v1848
  %v1850 = vrot.slane %v1562, 2
  %v1851 = vrot.slane %v1563, 2
  %v1852 = vsel %vm1702, %v1850, %v1851
  %v1853 = vrot.slane %v1564, 2
  %v1854 = vsel %vm1702, %v1851, %v1853
  %v1855 = vrot.slane %v1565, 2
  %v1856 = vsel %vm1702, %v1853, %v1855
  %v1857 = vrot.slane %v1566, 2
  %v1858 = vrot.slane %v1567, 2
  %v1859 = vsel %vm1702, %v1857, %v1858
  %v1860 = vrot.slane %v1568, 2
  %v1861 = vsel %vm1702, %v1858, %v1860
  %v1862 = vrot.slane %v1569, 2
  %v1863 = vsel %vm1702, %v1860, %v1862
  %v1864 = vrot.slane %v1570, 2
  %v1865 = vrot.slane %v1571, 2
  %v1866 = vsel %vm1702, %v1864, %v1865
  %v1867 = vrot.slane %v1572, 2
  %v1868 = vsel %vm1702, %v1865, %v1867
  %v1869 = vrot.slane %v1573, 2
  %v1870 = vsel %vm1702, %v1867, %v1869
  %v1871 = vrot.slane %v1574, 2
  %v1872 = vrot.slane %v1575, 2
  %v1873 = vsel %vm1702, %v1871, %v1872
  %v1874 = vrot.slane %v1576, 2
  %v1875 = vsel %vm1702, %v1872, %v1874
  %v1876 = vrot.slane %v1577, 2
  %v1877 = vsel %vm1702, %v1874, %v1876
  %v1878 = vrot.slane %v1578, 2
  %v1879 = vrot.slane %v1579, 2
  %v1880 = vsel %vm1702, %v1878, %v1879
  %v1881 = vrot.slane %v1580, 2
  %v1882 = vsel %vm1702, %v1879, %v1881
  %v1883 = vrot.slane %v1581, 2
  %v1884 = vsel %vm1702, %v1881, %v1883
  %v1885 = vrot.slane %v1582, 2
  %v1886 = vrot.slane %v1583, 2
  %v1887 = vsel %vm1702, %v1885, %v1886
  %v1888 = vrot.slane %v1584, 2
  %v1889 = vsel %vm1702, %v1886, %v1888
  %v1890 = vrot.slane %v1585, 2
  %v1891 = vsel %vm1702, %v1888, %v1890
  %v1892 = vrot.slane %v1586, 2
  %v1893 = vrot.slane %v1587, 2
  %v1894 = vsel %vm1702, %v1892, %v1893
  %v1895 = vrot.slane %v1588, 2
  %v1896 = vsel %vm1702, %v1893, %v1895
  %v1897 = vrot.slane %v1589, 2
  %v1898 = vsel %vm1702, %v1895, %v1897
  %v2011 = vadd.f32 %v1362, %v1705
  %v2012 = vadd.f32 %v1363, %v1707
  %v2013 = vadd.f32 %v1364, %v1709
  %v2014 = vadd.f32 %v1365, %v1708
  %v2015 = vadd.f32 %v1366, %v1712
  %v2016 = vadd.f32 %v1367, %v1714
  %v2017 = vadd.f32 %v1368, %v1716
  %v2018 = vadd.f32 %v1369, %v1715
  %v2019 = vadd.f32 %v1370, %v1719
  %v2020 = vadd.f32 %v1371, %v1721
  %v2021 = vadd.f32 %v1372, %v1723
  %v2022 = vadd.f32 %v1373, %v1722
  %v2023 = vadd.f32 %v1374, %v1726
  %v2024 = vadd.f32 %v1375, %v1728
  %v2025 = vadd.f32 %v1376, %v1730
  %v2026 = vadd.f32 %v1377, %v1729
  %v2027 = vadd.f32 %v1378, %v1733
  %v2028 = vadd.f32 %v1379, %v1735
  %v2029 = vadd.f32 %v1380, %v1737
  %v2030 = vadd.f32 %v1381, %v1736
  %v2031 = vadd.f32 %v1382, %v1740
  %v2032 = vadd.f32 %v1383, %v1742
  %v2033 = vadd.f32 %v1384, %v1744
  %v2034 = vadd.f32 %v1385, %v1743
  %v2035 = vadd.f32 %v1386, %v1747
  %v2036 = vadd.f32 %v1387, %v1749
  %v2037 = vadd.f32 %v1388, %v1751
  %v2038 = vadd.f32 %v1389, %v1750
  %v2039 = vadd.f32 %v1390, %v1754
  %v2040 = vadd.f32 %v1391, %v1756
  %v2041 = vadd.f32 %v1392, %v1758
  %v2042 = vadd.f32 %v1393, %v1757
  %v2043 = vadd.f32 %v1394, %v1761
  %v2044 = vadd.f32 %v1395, %v1763
  %v2045 = vadd.f32 %v1396, %v1765
  %v2046 = vadd.f32 %v1397, %v1764
  %v2047 = vadd.f32 %v1398, %v1768
  %v2048 = vadd.f32 %v1399, %v1770
  %v2049 = vadd.f32 %v1400, %v1772
  %v2050 = vadd.f32 %v1401, %v1771
  %v2051 = vadd.f32 %v1402, %v1775
  %v2052 = vadd.f32 %v1403, %v1777
  %v2053 = vadd.f32 %v1404, %v1779
  %v2054 = vadd.f32 %v1405, %v1778
  %v2055 = vadd.f32 %v1406, %v1782
  %v2056 = vadd.f32 %v1407, %v1784
  %v2057 = vadd.f32 %v1408, %v1786
  %v2058 = vadd.f32 %v1409, %v1785
  %v2059 = vadd.f32 %v1410, %v1789
  %v2060 = vadd.f32 %v1411, %v1791
  %v2061 = vadd.f32 %v1412, %v1793
  %v2062 = vadd.f32 %v1413, %v1792
  %v2063 = vadd.f32 %v1414, %v1796
  %v2064 = vadd.f32 %v1415, %v1798
  %v2065 = vadd.f32 %v1416, %v1800
  %v2066 = vadd.f32 %v1417, %v1799
  %v2067 = vadd.f32 %v1418, %v1803
  %v2068 = vadd.f32 %v1419, %v1805
  %v2069 = vadd.f32 %v1420, %v1807
  %v2070 = vadd.f32 %v1421, %v1806
  %v2071 = vadd.f32 %v1422, %v1810
  %v2072 = vadd.f32 %v1423, %v1812
  %v2073 = vadd.f32 %v1424, %v1814
  %v2074 = vadd.f32 %v1425, %v1813
  %v2075 = vadd.f32 %v1426, %v1817
  %v2076 = vadd.f32 %v1427, %v1819
  %v2077 = vadd.f32 %v1428, %v1821
  %v2078 = vadd.f32 %v1429, %v1820
  %v2079 = vadd.f32 %v1430, %v1824
  %v2080 = vadd.f32 %v1431, %v1826
  %v2081 = vadd.f32 %v1432, %v1828
  %v2082 = vadd.f32 %v1433, %v1827
  %v2083 = vadd.f32 %v1434, %v1831
  %v2084 = vadd.f32 %v1435, %v1833
  %v2085 = vadd.f32 %v1436, %v1835
  %v2086 = vadd.f32 %v1437, %v1834
  %v2087 = vadd.f32 %v1438, %v1838
  %v2088 = vadd.f32 %v1439, %v1840
  %v2089 = vadd.f32 %v1440, %v1842
  %v2090 = vadd.f32 %v1441, %v1841
  %v2091 = vadd.f32 %v1442, %v1845
  %v2092 = vadd.f32 %v1443, %v1847
  %v2093 = vadd.f32 %v1444, %v1849
  %v2094 = vadd.f32 %v1445, %v1848
  %v2095 = vadd.f32 %v1446, %v1852
  %v2096 = vadd.f32 %v1447, %v1854
  %v2097 = vadd.f32 %v1448, %v1856
  %v2098 = vadd.f32 %v1449, %v1855
  %v2099 = vadd.f32 %v1450, %v1859
  %v2100 = vadd.f32 %v1451, %v1861
  %v2101 = vadd.f32 %v1452, %v1863
  %v2102 = vadd.f32 %v1453, %v1862
  %v2103 = vadd.f32 %v1454, %v1866
  %v2104 = vadd.f32 %v1455, %v1868
  %v2105 = vadd.f32 %v1456, %v1870
  %v2106 = vadd.f32 %v1457, %v1869
  %v2107 = vadd.f32 %v1458, %v1873
  %v2108 = vadd.f32 %v1459, %v1875
  %v2109 = vadd.f32 %v1460, %v1877
  %v2110 = vadd.f32 %v1461, %v1876
  %v2111 = vadd.f32 %v1462, %v1880
  %v2112 = vadd.f32 %v1463, %v1882
  %v2113 = vadd.f32 %v1464, %v1884
  %v2114 = vadd.f32 %v1465, %v1883
  %v2115 = vadd.f32 %v1466, %v1887
  %v2116 = vadd.f32 %v1467, %v1889
  %v2117 = vadd.f32 %v1468, %v1891
  %v2118 = vadd.f32 %v1469, %v1890
  %v2119 = vadd.f32 %v1470, %v1894
  %v2120 = vadd.f32 %v1471, %v1896
  %v2121 = vadd.f32 %v1472, %v1898
  %v2122 = vadd.f32 %v1473, %v1897
  %v2123 = vlaneseq
  %v2124 = vshrl.u32 %v2123, 7
  %v2125 = vsub.s32 0, %v2124
  %v2126 = vrot.slane %v595, %v2125
  %v2127 = vmul.f32 %v478, %v2126
  %v2128 = vmul.f32 %v479, %v2126
  %v2129 = vmul.f32 %v480, %v2126
  %v2130 = vmul.f32 %v481, %v2126
  %v2131 = vmul.f32 %v482, %v2126
  %v2132 = vmul.f32 %v483, %v2126
  %v2133 = vmul.f32 %v484, %v2126
  %v2134 = vmul.f32 %v485, %v2126
  %v2135 = vmul.f32 %v486, %v2126
  %v2136 = vmul.f32 %v487, %v2126
  %v2137 = vmul.f32 %v488, %v2126
  %v2138 = vmul.f32 %v489, %v2126
  %v2139 = vmul.f32 %v490, %v2126
  %v2140 = vmul.f32 %v491, %v2126
  %v2141 = vmul.f32 %v492, %v2126
  %v2142 = vmul.f32 %v493, %v2126
  %v2143 = vmul.f32 %v494, %v2126
  %v2144 = vmul.f32 %v495, %v2126
  %v2145 = vmul.f32 %v496, %v2126
  %v2146 = vmul.f32 %v497, %v2126
  %v2147 = vmul.f32 %v498, %v2126
  %v2148 = vmul.f32 %v499, %v2126
  %v2149 = vmul.f32 %v500, %v2126
  %v2150 = vmul.f32 %v501, %v2126
  %v2151 = vmul.f32 %v502, %v2126
  %v2152 = vmul.f32 %v503, %v2126
  %v2153 = vmul.f32 %v504, %v2126
  %v2154 = vmul.f32 %v505, %v2126
  %v2155 = vmul.f32 %v506, %v2126
  %v2156 = vmul.f32 %v507, %v2126
  %v2157 = vmul.f32 %v508, %v2126
  %v2158 = vmul.f32 %v509, %v2126
  %v2159 = vmul.f32 %v510, %v2126
  %v2160 = vmul.f32 %v511, %v2126
  %v2161 = vmul.f32 %v512, %v2126
  %v2162 = vmul.f32 %v513, %v2126
  %v2163 = vmul.f32 %v514, %v2126
  %v2164 = vmul.f32 %v515, %v2126
  %v2165 = vmul.f32 %v516, %v2126
  %v2166 = vmul.f32 %v517, %v2126
  %v2167 = vmul.f32 %v518, %v2126
  %v2168 = vmul.f32 %v519, %v2126
  %v2169 = vmul.f32 %v520, %v2126
  %v2170 = vmul.f32 %v521, %v2126
  %v2171 = vmul.f32 %v522, %v2126
  %v2172 = vmul.f32 %v523, %v2126
  %v2173 = vmul.f32 %v524, %v2126
  %v2174 = vmul.f32 %v525, %v2126
  %v2175 = vmul.f32 %v526, %v2126
  %v2176 = vmul.f32 %v527, %v2126
  %v2177 = vmul.f32 %v528, %v2126
  %v2178 = vmul.f32 %v529, %v2126
  %v2179 = vmul.f32 %v530, %v2126
  %v2180 = vmul.f32 %v531, %v2126
  %v2181 = vmul.f32 %v532, %v2126
  %v2182 = vmul.f32 %v533, %v2126
  %v2183 = vmul.f32 %v534, %v2126
  %v2184 = vmul.f32 %v535, %v2126
  %v2185 = vmul.f32 %v536, %v2126
  %v2186 = vmul.f32 %v537, %v2126
  %v2187 = vmul.f32 %v538, %v2126
  %v2188 = vmul.f32 %v539, %v2126
  %v2189 = vmul.f32 %v540, %v2126
  %v2190 = vmul.f32 %v541, %v2126
  %v2191 = vmul.f32 %v542, %v2126
  %v2192 = vmul.f32 %v543, %v2126
  %v2193 = vmul.f32 %v544, %v2126
  %v2194 = vmul.f32 %v545, %v2126
  %v2195 = vmul.f32 %v546, %v2126
  %v2196 = vmul.f32 %v547, %v2126
  %v2197 = vmul.f32 %v548, %v2126
  %v2198 = vmul.f32 %v549, %v2126
  %v2199 = vmul.f32 %v550, %v2126
  %v2200 = vmul.f32 %v551, %v2126
  %v2201 = vmul.f32 %v552, %v2126
  %v2202 = vmul.f32 %v553, %v2126
  %v2203 = vmul.f32 %v554, %v2126
  %v2204 = vmul.f32 %v555, %v2126
  %v2205 = vmul.f32 %v556, %v2126
  %v2206 = vmul.f32 %v557, %v2126
  %v2207 = vmul.f32 %v558, %v2126
  %v2208 = vmul.f32 %v559, %v2126
  %v2209 = vmul.f32 %v560, %v2126
  %v2210 = vmul.f32 %v561, %v2126
  %v2211 = vmul.f32 %v562, %v2126
  %v2212 = vmul.f32 %v563, %v2126
  %v2213 = vmul.f32 %v564, %v2126
  %v2214 = vmul.f32 %v565, %v2126
  %v2215 = vmul.f32 %v566, %v2126
  %v2216 = vmul.f32 %v567, %v2126
  %v2217 = vmul.f32 %v568, %v2126
  %v2218 = vmul.f32 %v569, %v2126
  %v2219 = vmul.f32 %v570, %v2126
  %v2220 = vmul.f32 %v571, %v2126
  %v2221 = vmul.f32 %v572, %v2126
  %v2222 = vmul.f32 %v573, %v2126
  %v2223 = vmul.f32 %v574, %v2126
  %v2224 = vmul.f32 %v575, %v2126
  %v2225 = vmul.f32 %v576, %v2126
  %v2226 = vmul.f32 %v577, %v2126
  %v2227 = vmul.f32 %v578, %v2126
  %v2228 = vmul.f32 %v579, %v2126
  %v2229 = vmul.f32 %v580, %v2126
  %v2230 = vmul.f32 %v581, %v2126
  %v2231 = vmul.f32 %v582, %v2126
  %v2232 = vmul.f32 %v583, %v2126
  %v2233 = vmul.f32 %v584, %v2126
  %v2234 = vmul.f32 %v585, %v2126
  %v2235 = vmul.f32 %v586, %v2126
  %v2236 = vmul.f32 %v587, %v2126
  %v2237 = vmul.f32 %v588, %v2126
  %v2238 = vmul.f32 %v589, %v2126
  %v2239 = vadd.f32 %v2011, %v2127
  %v2240 = vadd.f32 %v2012, %v2128
  %v2241 = vadd.f32 %v2013, %v2129
  %v2242 = vadd.f32 %v2014, %v2130
  %v2243 = vadd.f32 %v2015, %v2131
  %v2244 = vadd.f32 %v2016, %v2132
  %v2245 = vadd.f32 %v2017, %v2133
  %v2246 = vadd.f32 %v2018, %v2134
  %v2247 = vadd.f32 %v2019, %v2135
  %v2248 = vadd.f32 %v2020, %v2136
  %v2249 = vadd.f32 %v2021, %v2137
  %v2250 = vadd.f32 %v2022, %v2138
  %v2251 = vadd.f32 %v2023, %v2139
  %v2252 = vadd.f32 %v2024, %v2140
  %v2253 = vadd.f32 %v2025, %v2141
  %v2254 = vadd.f32 %v2026, %v2142
  %v2255 = vadd.f32 %v2027, %v2143
  %v2256 = vadd.f32 %v2028, %v2144
  %v2257 = vadd.f32 %v2029, %v2145
  %v2258 = vadd.f32 %v2030, %v2146
  %v2259 = vadd.f32 %v2031, %v2147
  %v2260 = vadd.f32 %v2032, %v2148
  %v2261 = vadd.f32 %v2033, %v2149
  %v2262 = vadd.f32 %v2034, %v2150
  %v2263 = vadd.f32 %v2035, %v2151
  %v2264 = vadd.f32 %v2036, %v2152
  %v2265 = vadd.f32 %v2037, %v2153
  %v2266 = vadd.f32 %v2038, %v2154
  %v2267 = vadd.f32 %v2039, %v2155
  %v2268 = vadd.f32 %v2040, %v2156
  %v2269 = vadd.f32 %v2041, %v2157
  %v2270 = vadd.f32 %v2042, %v2158
  %v2271 = vadd.f32 %v2043, %v2159
  %v2272 = vadd.f32 %v2044, %v2160
  %v2273 = vadd.f32 %v2045, %v2161
  %v2274 = vadd.f32 %v2046, %v2162
  %v2275 = vadd.f32 %v2047, %v2163
  %v2276 = vadd.f32 %v2048, %v2164
  %v2277 = vadd.f32 %v2049, %v2165
  %v2278 = vadd.f32 %v2050, %v2166
  %v2279 = vadd.f32 %v2051, %v2167
  %v2280 = vadd.f32 %v2052, %v2168
  %v2281 = vadd.f32 %v2053, %v2169
  %v2282 = vadd.f32 %v2054, %v2170
  %v2283 = vadd.f32 %v2055, %v2171
  %v2284 = vadd.f32 %v2056, %v2172
  %v2285 = vadd.f32 %v2057, %v2173
  %v2286 = vadd.f32 %v2058, %v2174
  %v2287 = vadd.f32 %v2059, %v2175
  %v2288 = vadd.f32 %v2060, %v2176
  %v2289 = vadd.f32 %v2061, %v2177
  %v2290 = vadd.f32 %v2062, %v2178
  %v2291 = vadd.f32 %v2063, %v2179
  %v2292 = vadd.f32 %v2064, %v2180
  %v2293 = vadd.f32 %v2065, %v2181
  %v2294 = vadd.f32 %v2066, %v2182
  %v2295 = vadd.f32 %v2067, %v2183
  %v2296 = vadd.f32 %v2068, %v2184
  %v2297 = vadd.f32 %v2069, %v2185
  %v2298 = vadd.f32 %v2070, %v2186
  %v2299 = vadd.f32 %v2071, %v2187
  %v2300 = vadd.f32 %v2072, %v2188
  %v2301 = vadd.f32 %v2073, %v2189
  %v2302 = vadd.f32 %v2074, %v2190
  %v2303 = vadd.f32 %v2075, %v2191
  %v2304 = vadd.f32 %v2076, %v2192
  %v2305 = vadd.f32 %v2077, %v2193
  %v2306 = vadd.f32 %v2078, %v2194
  %v2307 = vadd.f32 %v2079, %v2195
  %v2308 = vadd.f32 %v2080, %v2196
  %v2309 = vadd.f32 %v2081, %v2197
  %v2310 = vadd.f32 %v2082, %v2198
  %v2311 = vadd.f32 %v2083, %v2199
  %v2312 = vadd.f32 %v2084, %v2200
  %v2313 = vadd.f32 %v2085, %v2201
  %v2314 = vadd.f32 %v2086, %v2202
  %v2315 = vadd.f32 %v2087, %v2203
  %v2316 = vadd.f32 %v2088, %v2204
  %v2317 = vadd.f32 %v2089, %v2205
  %v2318 = vadd.f32 %v2090, %v2206
  %v2319 = vadd.f32 %v2091, %v2207
  %v2320 = vadd.f32 %v2092, %v2208
  %v2321 = vadd.f32 %v2093, %v2209
  %v2322 = vadd.f32 %v2094, %v2210
  %v2323 = vadd.f32 %v2095, %v2211
  %v2324 = vadd.f32 %v2096, %v2212
  %v2325 = vadd.f32 %v2097, %v2213
  %v2326 = vadd.f32 %v2098, %v2214
  %v2327 = vadd.f32 %v2099, %v2215
  %v2328 = vadd.f32 %v2100, %v2216
  %v2329 = vadd.f32 %v2101, %v2217
  %v2330 = vadd.f32 %v2102, %v2218
  %v2331 = vadd.f32 %v2103, %v2219
  %v2332 = vadd.f32 %v2104, %v2220
  %v2333 = vadd.f32 %v2105, %v2221
  %v2334 = vadd.f32 %v2106, %v2222
  %v2335 = vadd.f32 %v2107, %v2223
  %v2336 = vadd.f32 %v2108, %v2224
  %v2337 = vadd.f32 %v2109, %v2225
  %v2338 = vadd.f32 %v2110, %v2226
  %v2339 = vadd.f32 %v2111, %v2227
  %v2340 = vadd.f32 %v2112, %v2228
  %v2341 = vadd.f32 %v2113, %v2229
  %v2342 = vadd.f32 %v2114, %v2230
  %v2343 = vadd.f32 %v2115, %v2231
  %v2344 = vadd.f32 %v2116, %v2232
  %v2345 = vadd.f32 %v2117, %v2233
  %v2346 = vadd.f32 %v2118, %v2234
  %v2347 = vadd.f32 %v2119, %v2235
  %v2348 = vadd.f32 %v2120, %v2236
  %v2349 = vadd.f32 %v2121, %v2237
  %v2350 = vadd.f32 %v2122, %v2238
  %v2351 = vlaneseq
  %v2352 = vshrl.u32 %v2351, 7
  %v2353 = vsub.s32 1, %v2352
  %v2354 = vrot.slane %v595, %v2353
  %v2355 = vmul.f32 %v478, %v2354
  %v2356 = vmul.f32 %v479, %v2354
  %v2357 = vmul.f32 %v480, %v2354
  %v2358 = vmul.f32 %v481, %v2354
  %v2359 = vmul.f32 %v482, %v2354
  %v2360 = vmul.f32 %v483, %v2354
  %v2361 = vmul.f32 %v484, %v2354
  %v2362 = vmul.f32 %v485, %v2354
  %v2363 = vmul.f32 %v486, %v2354
  %v2364 = vmul.f32 %v487, %v2354
  %v2365 = vmul.f32 %v488, %v2354
  %v2366 = vmul.f32 %v489, %v2354
  %v2367 = vmul.f32 %v490, %v2354
  %v2368 = vmul.f32 %v491, %v2354
  %v2369 = vmul.f32 %v492, %v2354
  %v2370 = vmul.f32 %v493, %v2354
  %v2371 = vmul.f32 %v494, %v2354
  %v2372 = vmul.f32 %v495, %v2354
  %v2373 = vmul.f32 %v496, %v2354
  %v2374 = vmul.f32 %v497, %v2354
  %v2375 = vmul.f32 %v498, %v2354
  %v2376 = vmul.f32 %v499, %v2354
  %v2377 = vmul.f32 %v500, %v2354
  %v2378 = vmul.f32 %v501, %v2354
  %v2379 = vmul.f32 %v502, %v2354
  %v2380 = vmul.f32 %v503, %v2354
  %v2381 = vmul.f32 %v504, %v2354
  %v2382 = vmul.f32 %v505, %v2354
  %v2383 = vmul.f32 %v506, %v2354
  %v2384 = vmul.f32 %v507, %v2354
  %v2385 = vmul.f32 %v508, %v2354
  %v2386 = vmul.f32 %v509, %v2354
  %v2387 = vmul.f32 %v510, %v2354
  %v2388 = vmul.f32 %v511, %v2354
  %v2389 = vmul.f32 %v512, %v2354
  %v2390 = vmul.f32 %v513, %v2354
  %v2391 = vmul.f32 %v514, %v2354
  %v2392 = vmul.f32 %v515, %v2354
  %v2393 = vmul.f32 %v516, %v2354
  %v2394 = vmul.f32 %v517, %v2354
  %v2395 = vmul.f32 %v518, %v2354
  %v2396 = vmul.f32 %v519, %v2354
  %v2397 = vmul.f32 %v520, %v2354
  %v2398 = vmul.f32 %v521, %v2354
  %v2399 = vmul.f32 %v522, %v2354
  %v2400 = vmul.f32 %v523, %v2354
  %v2401 = vmul.f32 %v524, %v2354
  %v2402 = vmul.f32 %v525, %v2354
  %v2403 = vmul.f32 %v526, %v2354
  %v2404 = vmul.f32 %v527, %v2354
  %v2405 = vmul.f32 %v528, %v2354
  %v2406 = vmul.f32 %v529, %v2354
  %v2407 = vmul.f32 %v530, %v2354
  %v2408 = vmul.f32 %v531, %v2354
  %v2409 = vmul.f32 %v532, %v2354
  %v2410 = vmul.f32 %v533, %v2354
  %v2411 = vmul.f32 %v534, %v2354
  %v2412 = vmul.f32 %v535, %v2354
  %v2413 = vmul.f32 %v536, %v2354
  %v2414 = vmul.f32 %v537, %v2354
  %v2415 = vmul.f32 %v538, %v2354
  %v2416 = vmul.f32 %v539, %v2354
  %v2417 = vmul.f32 %v540, %v2354
  %v2418 = vmul.f32 %v541, %v2354
  %v2419 = vmul.f32 %v542, %v2354
  %v2420 = vmul.f32 %v543, %v2354
  %v2421 = vmul.f32 %v544, %v2354
  %v2422 = vmul.f32 %v545, %v2354
  %v2423 = vmul.f32 %v546, %v2354
  %v2424 = vmul.f32 %v547, %v2354
  %v2425 = vmul.f32 %v548, %v2354
  %v2426 = vmul.f32 %v549, %v2354
  %v2427 = vmul.f32 %v550, %v2354
  %v2428 = vmul.f32 %v551, %v2354
  %v2429 = vmul.f32 %v552, %v2354
  %v2430 = vmul.f32 %v553, %v2354
  %v2431 = vmul.f32 %v554, %v2354
  %v2432 = vmul.f32 %v555, %v2354
  %v2433 = vmul.f32 %v556, %v2354
  %v2434 = vmul.f32 %v557, %v2354
  %v2435 = vmul.f32 %v558, %v2354
  %v2436 = vmul.f32 %v559, %v2354
  %v2437 = vmul.f32 %v560, %v2354
  %v2438 = vmul.f32 %v561, %v2354
  %v2439 = vmul.f32 %v562, %v2354
  %v2440 = vmul.f32 %v563, %v2354
  %v2441 = vmul.f32 %v564, %v2354
  %v2442 = vmul.f32 %v565, %v2354
  %v2443 = vmul.f32 %v566, %v2354
  %v2444 = vmul.f32 %v567, %v2354
  %v2445 = vmul.f32 %v568, %v2354
  %v2446 = vmul.f32 %v569, %v2354
  %v2447 = vmul.f32 %v570, %v2354
  %v2448 = vmul.f32 %v571, %v2354
  %v2449 = vmul.f32 %v572, %v2354
  %v2450 = vmul.f32 %v573, %v2354
  %v2451 = vmul.f32 %v574, %v2354
  %v2452 = vmul.f32 %v575, %v2354
  %v2453 = vmul.f32 %v576, %v2354
  %v2454 = vmul.f32 %v577, %v2354
  %v2455 = vmul.f32 %v578, %v2354
  %v2456 = vmul.f32 %v579, %v2354
  %v2457 = vmul.f32 %v580, %v2354
  %v2458 = vmul.f32 %v581, %v2354
  %v2459 = vmul.f32 %v582, %v2354
  %v2460 = vmul.f32 %v583, %v2354
  %v2461 = vmul.f32 %v584, %v2354
  %v2462 = vmul.f32 %v585, %v2354
  %v2463 = vmul.f32 %v586, %v2354
  %v2464 = vmul.f32 %v587, %v2354
  %v2465 = vmul.f32 %v588, %v2354
  %v2466 = vmul.f32 %v589, %v2354
  %v2579 = vrot.slane %v2355, 1
  %v2580 = vrot.slane %v2356, 1
  %v2581 = vsel %vm1053, %v2579, %v2580
  %v2582 = vrot.slane %v2357, 1
  %v2583 = vsel %vm1053, %v2580, %v2582
  %v2584 = vrot.slane %v2358, 1
  %v2585 = vsel %vm1053, %v2582, %v2584
  %v2586 = vrot.slane %v2359, 1
  %v2587 = vrot.slane %v2360, 1
  %v2588 = vsel %vm1053, %v2586, %v2587
  %v2589 = vrot.slane %v2361, 1
  %v2590 = vsel %vm1053, %v2587, %v2589
  %v2591 = vrot.slane %v2362, 1
  %v2592 = vsel %vm1053, %v2589, %v2591
  %v2593 = vrot.slane %v2363, 1
  %v2594 = vrot.slane %v2364, 1
  %v2595 = vsel %vm1053, %v2593, %v2594
  %v2596 = vrot.slane %v2365, 1
  %v2597 = vsel %vm1053, %v2594, %v2596
  %v2598 = vrot.slane %v2366, 1
  %v2599 = vsel %vm1053, %v2596, %v2598
  %v2600 = vrot.slane %v2367, 1
  %v2601 = vrot.slane %v2368, 1
  %v2602 = vsel %vm1053, %v2600, %v2601
  %v2603 = vrot.slane %v2369, 1
  %v2604 = vsel %vm1053, %v2601, %v2603
  %v2605 = vrot.slane %v2370, 1
  %v2606 = vsel %vm1053, %v2603, %v2605
  %v2607 = vrot.slane %v2371, 1
  %v2608 = vrot.slane %v2372, 1
  %v2609 = vsel %vm1053, %v2607, %v2608
  %v2610 = vrot.slane %v2373, 1
  %v2611 = vsel %vm1053, %v2608, %v2610
  %v2612 = vrot.slane %v2374, 1
  %v2613 = vsel %vm1053, %v2610, %v2612
  %v2614 = vrot.slane %v2375, 1
  %v2615 = vrot.slane %v2376, 1
  %v2616 = vsel %vm1053, %v2614, %v2615
  %v2617 = vrot.slane %v2377, 1
  %v2618 = vsel %vm1053, %v2615, %v2617
  %v2619 = vrot.slane %v2378, 1
  %v2620 = vsel %vm1053, %v2617, %v2619
  %v2621 = vrot.slane %v2379, 1
  %v2622 = vrot.slane %v2380, 1
  %v2623 = vsel %vm1053, %v2621, %v2622
  %v2624 = vrot.slane %v2381, 1
  %v2625 = vsel %vm1053, %v2622, %v2624
  %v2626 = vrot.slane %v2382, 1
  %v2627 = vsel %vm1053, %v2624, %v2626
  %v2628 = vrot.slane %v2383, 1
  %v2629 = vrot.slane %v2384, 1
  %v2630 = vsel %vm1053, %v2628, %v2629
  %v2631 = vrot.slane %v2385, 1
  %v2632 = vsel %vm1053, %v2629, %v2631
  %v2633 = vrot.slane %v2386, 1
  %v2634 = vsel %vm1053, %v2631, %v2633
  %v2635 = vrot.slane %v2387, 1
  %v2636 = vrot.slane %v2388, 1
  %v2637 = vsel %vm1053, %v2635, %v2636
  %v2638 = vrot.slane %v2389, 1
  %v2639 = vsel %vm1053, %v2636, %v2638
  %v2640 = vrot.slane %v2390, 1
  %v2641 = vsel %vm1053, %v2638, %v2640
  %v2642 = vrot.slane %v2391, 1
  %v2643 = vrot.slane %v2392, 1
  %v2644 = vsel %vm1053, %v2642, %v2643
  %v2645 = vrot.slane %v2393, 1
  %v2646 = vsel %vm1053, %v2643, %v2645
  %v2647 = vrot.slane %v2394, 1
  %v2648 = vsel %vm1053, %v2645, %v2647
  %v2649 = vrot.slane %v2395, 1
  %v2650 = vrot.slane %v2396, 1
  %v2651 = vsel %vm1053, %v2649, %v2650
  %v2652 = vrot.slane %v2397, 1
  %v2653 = vsel %vm1053, %v2650, %v2652
  %v2654 = vrot.slane %v2398, 1
  %v2655 = vsel %vm1053, %v2652, %v2654
  %v2656 = vrot.slane %v2399, 1
  %v2657 = vrot.slane %v2400, 1
  %v2658 = vsel %vm1053, %v2656, %v2657
  %v2659 = vrot.slane %v2401, 1
  %v2660 = vsel %vm1053, %v2657, %v2659
  %v2661 = vrot.slane %v2402, 1
  %v2662 = vsel %vm1053, %v2659, %v2661
  %v2663 = vrot.slane %v2403, 1
  %v2664 = vrot.slane %v2404, 1
  %v2665 = vsel %vm1053, %v2663, %v2664
  %v2666 = vrot.slane %v2405, 1
  %v2667 = vsel %vm1053, %v2664, %v2666
  %v2668 = vrot.slane %v2406, 1
  %v2669 = vsel %vm1053, %v2666, %v2668
  %v2670 = vrot.slane %v2407, 1
  %v2671 = vrot.slane %v2408, 1
  %v2672 = vsel %vm1053, %v2670, %v2671
  %v2673 = vrot.slane %v2409, 1
  %v2674 = vsel %vm1053, %v2671, %v2673
  %v2675 = vrot.slane %v2410, 1
  %v2676 = vsel %vm1053, %v2673, %v2675
  %v2677 = vrot.slane %v2411, 1
  %v2678 = vrot.slane %v2412, 1
  %v2679 = vsel %vm1053, %v2677, %v2678
  %v2680 = vrot.slane %v2413, 1
  %v2681 = vsel %vm1053, %v2678, %v2680
  %v2682 = vrot.slane %v2414, 1
  %v2683 = vsel %vm1053, %v2680, %v2682
  %v2684 = vrot.slane %v2415, 1
  %v2685 = vrot.slane %v2416, 1
  %v2686 = vsel %vm1053, %v2684, %v2685
  %v2687 = vrot.slane %v2417, 1
  %v2688 = vsel %vm1053, %v2685, %v2687
  %v2689 = vrot.slane %v2418, 1
  %v2690 = vsel %vm1053, %v2687, %v2689
  %v2691 = vrot.slane %v2419, 1
  %v2692 = vrot.slane %v2420, 1
  %v2693 = vsel %vm1053, %v2691, %v2692
  %v2694 = vrot.slane %v2421, 1
  %v2695 = vsel %vm1053, %v2692, %v2694
  %v2696 = vrot.slane %v2422, 1
  %v2697 = vsel %vm1053, %v2694, %v2696
  %v2698 = vrot.slane %v2423, 1
  %v2699 = vrot.slane %v2424, 1
  %v2700 = vsel %vm1053, %v2698, %v2699
  %v2701 = vrot.slane %v2425, 1
  %v2702 = vsel %vm1053, %v2699, %v2701
  %v2703 = vrot.slane %v2426, 1
  %v2704 = vsel %vm1053, %v2701, %v2703
  %v2705 = vrot.slane %v2427, 1
  %v2706 = vrot.slane %v2428, 1
  %v2707 = vsel %vm1053, %v2705, %v2706
  %v2708 = vrot.slane %v2429, 1
  %v2709 = vsel %vm1053, %v2706, %v2708
  %v2710 = vrot.slane %v2430, 1
  %v2711 = vsel %vm1053, %v2708, %v2710
  %v2712 = vrot.slane %v2431, 1
  %v2713 = vrot.slane %v2432, 1
  %v2714 = vsel %vm1053, %v2712, %v2713
  %v2715 = vrot.slane %v2433, 1
  %v2716 = vsel %vm1053, %v2713, %v2715
  %v2717 = vrot.slane %v2434, 1
  %v2718 = vsel %vm1053, %v2715, %v2717
  %v2719 = vrot.slane %v2435, 1
  %v2720 = vrot.slane %v2436, 1
  %v2721 = vsel %vm1053, %v2719, %v2720
  %v2722 = vrot.slane %v2437, 1
  %v2723 = vsel %vm1053, %v2720, %v2722
  %v2724 = vrot.slane %v2438, 1
  %v2725 = vsel %vm1053, %v2722, %v2724
  %v2726 = vrot.slane %v2439, 1
  %v2727 = vrot.slane %v2440, 1
  %v2728 = vsel %vm1053, %v2726, %v2727
  %v2729 = vrot.slane %v2441, 1
  %v2730 = vsel %vm1053, %v2727, %v2729
  %v2731 = vrot.slane %v2442, 1
  %v2732 = vsel %vm1053, %v2729, %v2731
  %v2733 = vrot.slane %v2443, 1
  %v2734 = vrot.slane %v2444, 1
  %v2735 = vsel %vm1053, %v2733, %v2734
  %v2736 = vrot.slane %v2445, 1
  %v2737 = vsel %vm1053, %v2734, %v2736
  %v2738 = vrot.slane %v2446, 1
  %v2739 = vsel %vm1053, %v2736, %v2738
  %v2740 = vrot.slane %v2447, 1
  %v2741 = vrot.slane %v2448, 1
  %v2742 = vsel %vm1053, %v2740, %v2741
  %v2743 = vrot.slane %v2449, 1
  %v2744 = vsel %vm1053, %v2741, %v2743
  %v2745 = vrot.slane %v2450, 1
  %v2746 = vsel %vm1053, %v2743, %v2745
  %v2747 = vrot.slane %v2451, 1
  %v2748 = vrot.slane %v2452, 1
  %v2749 = vsel %vm1053, %v2747, %v2748
  %v2750 = vrot.slane %v2453, 1
  %v2751 = vsel %vm1053, %v2748, %v2750
  %v2752 = vrot.slane %v2454, 1
  %v2753 = vsel %vm1053, %v2750, %v2752
  %v2754 = vrot.slane %v2455, 1
  %v2755 = vrot.slane %v2456, 1
  %v2756 = vsel %vm1053, %v2754, %v2755
  %v2757 = vrot.slane %v2457, 1
  %v2758 = vsel %vm1053, %v2755, %v2757
  %v2759 = vrot.slane %v2458, 1
  %v2760 = vsel %vm1053, %v2757, %v2759
  %v2761 = vrot.slane %v2459, 1
  %v2762 = vrot.slane %v2460, 1
  %v2763 = vsel %vm1053, %v2761, %v2762
  %v2764 = vrot.slane %v2461, 1
  %v2765 = vsel %vm1053, %v2762, %v2764
  %v2766 = vrot.slane %v2462, 1
  %v2767 = vsel %vm1053, %v2764, %v2766
  %v2768 = vrot.slane %v2463, 1
  %v2769 = vrot.slane %v2464, 1
  %v2770 = vsel %vm1053, %v2768, %v2769
  %v2771 = vrot.slane %v2465, 1
  %v2772 = vsel %vm1053, %v2769, %v2771
  %v2773 = vrot.slane %v2466, 1
  %v2774 = vsel %vm1053, %v2771, %v2773
  %v2887 = vadd.f32 %v2239, %v2581
  %v2888 = vadd.f32 %v2240, %v2583
  %v2889 = vadd.f32 %v2241, %v2585
  %v2890 = vadd.f32 %v2242, %v2584
  %v2891 = vadd.f32 %v2243, %v2588
  %v2892 = vadd.f32 %v2244, %v2590
  %v2893 = vadd.f32 %v2245, %v2592
  %v2894 = vadd.f32 %v2246, %v2591
  %v2895 = vadd.f32 %v2247, %v2595
  %v2896 = vadd.f32 %v2248, %v2597
  %v2897 = vadd.f32 %v2249, %v2599
  %v2898 = vadd.f32 %v2250, %v2598
  %v2899 = vadd.f32 %v2251, %v2602
  %v2900 = vadd.f32 %v2252, %v2604
  %v2901 = vadd.f32 %v2253, %v2606
  %v2902 = vadd.f32 %v2254, %v2605
  %v2903 = vadd.f32 %v2255, %v2609
  %v2904 = vadd.f32 %v2256, %v2611
  %v2905 = vadd.f32 %v2257, %v2613
  %v2906 = vadd.f32 %v2258, %v2612
  %v2907 = vadd.f32 %v2259, %v2616
  %v2908 = vadd.f32 %v2260, %v2618
  %v2909 = vadd.f32 %v2261, %v2620
  %v2910 = vadd.f32 %v2262, %v2619
  %v2911 = vadd.f32 %v2263, %v2623
  %v2912 = vadd.f32 %v2264, %v2625
  %v2913 = vadd.f32 %v2265, %v2627
  %v2914 = vadd.f32 %v2266, %v2626
  %v2915 = vadd.f32 %v2267, %v2630
  %v2916 = vadd.f32 %v2268, %v2632
  %v2917 = vadd.f32 %v2269, %v2634
  %v2918 = vadd.f32 %v2270, %v2633
  %v2919 = vadd.f32 %v2271, %v2637
  %v2920 = vadd.f32 %v2272, %v2639
  %v2921 = vadd.f32 %v2273, %v2641
  %v2922 = vadd.f32 %v2274, %v2640
  %v2923 = vadd.f32 %v2275, %v2644
  %v2924 = vadd.f32 %v2276, %v2646
  %v2925 = vadd.f32 %v2277, %v2648
  %v2926 = vadd.f32 %v2278, %v2647
  %v2927 = vadd.f32 %v2279, %v2651
  %v2928 = vadd.f32 %v2280, %v2653
  %v2929 = vadd.f32 %v2281, %v2655
  %v2930 = vadd.f32 %v2282, %v2654
  %v2931 = vadd.f32 %v2283, %v2658
  %v2932 = vadd.f32 %v2284, %v2660
  %v2933 = vadd.f32 %v2285, %v2662
  %v2934 = vadd.f32 %v2286, %v2661
  %v2935 = vadd.f32 %v2287, %v2665
  %v2936 = vadd.f32 %v2288, %v2667
  %v2937 = vadd.f32 %v2289, %v2669
  %v2938 = vadd.f32 %v2290, %v2668
  %v2939 = vadd.f32 %v2291, %v2672
  %v2940 = vadd.f32 %v2292, %v2674
  %v2941 = vadd.f32 %v2293, %v2676
  %v2942 = vadd.f32 %v2294, %v2675
  %v2943 = vadd.f32 %v2295, %v2679
  %v2944 = vadd.f32 %v2296, %v2681
  %v2945 = vadd.f32 %v2297, %v2683
  %v2946 = vadd.f32 %v2298, %v2682
  %v2947 = vadd.f32 %v2299, %v2686
  %v2948 = vadd.f32 %v2300, %v2688
  %v2949 = vadd.f32 %v2301, %v2690
  %v2950 = vadd.f32 %v2302, %v2689
  %v2951 = vadd.f32 %v2303, %v2693
  %v2952 = vadd.f32 %v2304, %v2695
  %v2953 = vadd.f32 %v2305, %v2697
  %v2954 = vadd.f32 %v2306, %v2696
  %v2955 = vadd.f32 %v2307, %v2700
  %v2956 = vadd.f32 %v2308, %v2702
  %v2957 = vadd.f32 %v2309, %v2704
  %v2958 = vadd.f32 %v2310, %v2703
  %v2959 = vadd.f32 %v2311, %v2707
  %v2960 = vadd.f32 %v2312, %v2709
  %v2961 = vadd.f32 %v2313, %v2711
  %v2962 = vadd.f32 %v2314, %v2710
  %v2963 = vadd.f32 %v2315, %v2714
  %v2964 = vadd.f32 %v2316, %v2716
  %v2965 = vadd.f32 %v2317, %v2718
  %v2966 = vadd.f32 %v2318, %v2717
  %v2967 = vadd.f32 %v2319, %v2721
  %v2968 = vadd.f32 %v2320, %v2723
  %v2969 = vadd.f32 %v2321, %v2725
  %v2970 = vadd.f32 %v2322, %v2724
  %v2971 = vadd.f32 %v2323, %v2728
  %v2972 = vadd.f32 %v2324, %v2730
  %v2973 = vadd.f32 %v2325, %v2732
  %v2974 = vadd.f32 %v2326, %v2731
  %v2975 = vadd.f32 %v2327, %v2735
  %v2976 = vadd.f32 %v2328, %v2737
  %v2977 = vadd.f32 %v2329, %v2739
  %v2978 = vadd.f32 %v2330, %v2738
  %v2979 = vadd.f32 %v2331, %v2742
  %v2980 = vadd.f32 %v2332, %v2744
  %v2981 = vadd.f32 %v2333, %v2746
  %v2982 = vadd.f32 %v2334, %v2745
  %v2983 = vadd.f32 %v2335, %v2749
  %v2984 = vadd.f32 %v2336, %v2751
  %v2985 = vadd.f32 %v2337, %v2753
  %v2986 = vadd.f32 %v2338, %v2752
  %v2987 = vadd.f32 %v2339, %v2756
  %v2988 = vadd.f32 %v2340, %v2758
  %v2989 = vadd.f32 %v2341, %v2760
  %v2990 = vadd.f32 %v2342, %v2759
  %v2991 = vadd.f32 %v2343, %v2763
  %v2992 = vadd.f32 %v2344, %v2765
  %v2993 = vadd.f32 %v2345, %v2767
  %v2994 = vadd.f32 %v2346, %v2766
  %v2995 = vadd.f32 %v2347, %v2770
  %v2996 = vadd.f32 %v2348, %v2772
  %v2997 = vadd.f32 %v2349, %v2774
  %v2998 = vadd.f32 %v2350, %v2773
  %v2999 = vlaneseq
  %v3000 = vshrl.u32 %v2999, 7
  %v3001 = vsub.s32 2, %v3000
  %v3002 = vrot.slane %v595, %v3001
  %v3003 = vmul.f32 %v478, %v3002
  %v3004 = vmul.f32 %v479, %v3002
  %v3005 = vmul.f32 %v480, %v3002
  %v3006 = vmul.f32 %v481, %v3002
  %v3007 = vmul.f32 %v482, %v3002
  %v3008 = vmul.f32 %v483, %v3002
  %v3009 = vmul.f32 %v484, %v3002
  %v3010 = vmul.f32 %v485, %v3002
  %v3011 = vmul.f32 %v486, %v3002
  %v3012 = vmul.f32 %v487, %v3002
  %v3013 = vmul.f32 %v488, %v3002
  %v3014 = vmul.f32 %v489, %v3002
  %v3015 = vmul.f32 %v490, %v3002
  %v3016 = vmul.f32 %v491, %v3002
  %v3017 = vmul.f32 %v492, %v3002
  %v3018 = vmul.f32 %v493, %v3002
  %v3019 = vmul.f32 %v494, %v3002
  %v3020 = vmul.f32 %v495, %v3002
  %v3021 = vmul.f32 %v496, %v3002
  %v3022 = vmul.f32 %v497, %v3002
  %v3023 = vmul.f32 %v498, %v3002
  %v3024 = vmul.f32 %v499, %v3002
  %v3025 = vmul.f32 %v500, %v3002
  %v3026 = vmul.f32 %v501, %v3002
  %v3027 = vmul.f32 %v502, %v3002
  %v3028 = vmul.f32 %v503, %v3002
  %v3029 = vmul.f32 %v504, %v3002
  %v3030 = vmul.f32 %v505, %v3002
  %v3031 = vmul.f32 %v506, %v3002
  %v3032 = vmul.f32 %v507, %v3002
  %v3033 = vmul.f32 %v508, %v3002
  %v3034 = vmul.f32 %v509, %v3002
  %v3035 = vmul.f32 %v510, %v3002
  %v3036 = vmul.f32 %v511, %v3002
  %v3037 = vmul.f32 %v512, %v3002
  %v3038 = vmul.f32 %v513, %v3002
  %v3039 = vmul.f32 %v514, %v3002
  %v3040 = vmul.f32 %v515, %v3002
  %v3041 = vmul.f32 %v516, %v3002
  %v3042 = vmul.f32 %v517, %v3002
  %v3043 = vmul.f32 %v518, %v3002
  %v3044 = vmul.f32 %v519, %v3002
  %v3045 = vmul.f32 %v520, %v3002
  %v3046 = vmul.f32 %v521, %v3002
  %v3047 = vmul.f32 %v522, %v3002
  %v3048 = vmul.f32 %v523, %v3002
  %v3049 = vmul.f32 %v524, %v3002
  %v3050 = vmul.f32 %v525, %v3002
  %v3051 = vmul.f32 %v526, %v3002
  %v3052 = vmul.f32 %v527, %v3002
  %v3053 = vmul.f32 %v528, %v3002
  %v3054 = vmul.f32 %v529, %v3002
  %v3055 = vmul.f32 %v530, %v3002
  %v3056 = vmul.f32 %v531, %v3002
  %v3057 = vmul.f32 %v532, %v3002
  %v3058 = vmul.f32 %v533, %v3002
  %v3059 = vmul.f32 %v534, %v3002
  %v3060 = vmul.f32 %v535, %v3002
  %v3061 = vmul.f32 %v536, %v3002
  %v3062 = vmul.f32 %v537, %v3002
  %v3063 = vmul.f32 %v538, %v3002
  %v3064 = vmul.f32 %v539, %v3002
  %v3065 = vmul.f32 %v540, %v3002
  %v3066 = vmul.f32 %v541, %v3002
  %v3067 = vmul.f32 %v542, %v3002
  %v3068 = vmul.f32 %v543, %v3002
  %v3069 = vmul.f32 %v544, %v3002
  %v3070 = vmul.f32 %v545, %v3002
  %v3071 = vmul.f32 %v546, %v3002
  %v3072 = vmul.f32 %v547, %v3002
  %v3073 = vmul.f32 %v548, %v3002
  %v3074 = vmul.f32 %v549, %v3002
  %v3075 = vmul.f32 %v550, %v3002
  %v3076 = vmul.f32 %v551, %v3002
  %v3077 = vmul.f32 %v552, %v3002
  %v3078 = vmul.f32 %v553, %v3002
  %v3079 = vmul.f32 %v554, %v3002
  %v3080 = vmul.f32 %v555, %v3002
  %v3081 = vmul.f32 %v556, %v3002
  %v3082 = vmul.f32 %v557, %v3002
  %v3083 = vmul.f32 %v558, %v3002
  %v3084 = vmul.f32 %v559, %v3002
  %v3085 = vmul.f32 %v560, %v3002
  %v3086 = vmul.f32 %v561, %v3002
  %v3087 = vmul.f32 %v562, %v3002
  %v3088 = vmul.f32 %v563, %v3002
  %v3089 = vmul.f32 %v564, %v3002
  %v3090 = vmul.f32 %v565, %v3002
  %v3091 = vmul.f32 %v566, %v3002
  %v3092 = vmul.f32 %v567, %v3002
  %v3093 = vmul.f32 %v568, %v3002
  %v3094 = vmul.f32 %v569, %v3002
  %v3095 = vmul.f32 %v570, %v3002
  %v3096 = vmul.f32 %v571, %v3002
  %v3097 = vmul.f32 %v572, %v3002
  %v3098 = vmul.f32 %v573, %v3002
  %v3099 = vmul.f32 %v574, %v3002
  %v3100 = vmul.f32 %v575, %v3002
  %v3101 = vmul.f32 %v576, %v3002
  %v3102 = vmul.f32 %v577, %v3002
  %v3103 = vmul.f32 %v578, %v3002
  %v3104 = vmul.f32 %v579, %v3002
  %v3105 = vmul.f32 %v580, %v3002
  %v3106 = vmul.f32 %v581, %v3002
  %v3107 = vmul.f32 %v582, %v3002
  %v3108 = vmul.f32 %v583, %v3002
  %v3109 = vmul.f32 %v584, %v3002
  %v3110 = vmul.f32 %v585, %v3002
  %v3111 = vmul.f32 %v586, %v3002
  %v3112 = vmul.f32 %v587, %v3002
  %v3113 = vmul.f32 %v588, %v3002
  %v3114 = vmul.f32 %v589, %v3002
  %v3227 = vrot.slane %v3003, 2
  %v3228 = vrot.slane %v3004, 2
  %v3229 = vsel %vm1702, %v3227, %v3228
  %v3230 = vrot.slane %v3005, 2
  %v3231 = vsel %vm1702, %v3228, %v3230
  %v3232 = vrot.slane %v3006, 2
  %v3233 = vsel %vm1702, %v3230, %v3232
  %v3234 = vrot.slane %v3007, 2
  %v3235 = vrot.slane %v3008, 2
  %v3236 = vsel %vm1702, %v3234, %v3235
  %v3237 = vrot.slane %v3009, 2
  %v3238 = vsel %vm1702, %v3235, %v3237
  %v3239 = vrot.slane %v3010, 2
  %v3240 = vsel %vm1702, %v3237, %v3239
  %v3241 = vrot.slane %v3011, 2
  %v3242 = vrot.slane %v3012, 2
  %v3243 = vsel %vm1702, %v3241, %v3242
  %v3244 = vrot.slane %v3013, 2
  %v3245 = vsel %vm1702, %v3242, %v3244
  %v3246 = vrot.slane %v3014, 2
  %v3247 = vsel %vm1702, %v3244, %v3246
  %v3248 = vrot.slane %v3015, 2
  %v3249 = vrot.slane %v3016, 2
  %v3250 = vsel %vm1702, %v3248, %v3249
  %v3251 = vrot.slane %v3017, 2
  %v3252 = vsel %vm1702, %v3249, %v3251
  %v3253 = vrot.slane %v3018, 2
  %v3254 = vsel %vm1702, %v3251, %v3253
  %v3255 = vrot.slane %v3019, 2
  %v3256 = vrot.slane %v3020, 2
  %v3257 = vsel %vm1702, %v3255, %v3256
  %v3258 = vrot.slane %v3021, 2
  %v3259 = vsel %vm1702, %v3256, %v3258
  %v3260 = vrot.slane %v3022, 2
  %v3261 = vsel %vm1702, %v3258, %v3260
  %v3262 = vrot.slane %v3023, 2
  %v3263 = vrot.slane %v3024, 2
  %v3264 = vsel %vm1702, %v3262, %v3263
  %v3265 = vrot.slane %v3025, 2
  %v3266 = vsel %vm1702, %v3263, %v3265
  %v3267 = vrot.slane %v3026, 2
  %v3268 = vsel %vm1702, %v3265, %v3267
  %v3269 = vrot.slane %v3027, 2
  %v3270 = vrot.slane %v3028, 2
  %v3271 = vsel %vm1702, %v3269, %v3270
  %v3272 = vrot.slane %v3029, 2
  %v3273 = vsel %vm1702, %v3270, %v3272
  %v3274 = vrot.slane %v3030, 2
  %v3275 = vsel %vm1702, %v3272, %v3274
  %v3276 = vrot.slane %v3031, 2
  %v3277 = vrot.slane %v3032, 2
  %v3278 = vsel %vm1702, %v3276, %v3277
  %v3279 = vrot.slane %v3033, 2
  %v3280 = vsel %vm1702, %v3277, %v3279
  %v3281 = vrot.slane %v3034, 2
  %v3282 = vsel %vm1702, %v3279, %v3281
  %v3283 = vrot.slane %v3035, 2
  %v3284 = vrot.slane %v3036, 2
  %v3285 = vsel %vm1702, %v3283, %v3284
  %v3286 = vrot.slane %v3037, 2
  %v3287 = vsel %vm1702, %v3284, %v3286
  %v3288 = vrot.slane %v3038, 2
  %v3289 = vsel %vm1702, %v3286, %v3288
  %v3290 = vrot.slane %v3039, 2
  %v3291 = vrot.slane %v3040, 2
  %v3292 = vsel %vm1702, %v3290, %v3291
  %v3293 = vrot.slane %v3041, 2
  %v3294 = vsel %vm1702, %v3291, %v3293
  %v3295 = vrot.slane %v3042, 2
  %v3296 = vsel %vm1702, %v3293, %v3295
  %v3297 = vrot.slane %v3043, 2
  %v3298 = vrot.slane %v3044, 2
  %v3299 = vsel %vm1702, %v3297, %v3298
  %v3300 = vrot.slane %v3045, 2
  %v3301 = vsel %vm1702, %v3298, %v3300
  %v3302 = vrot.slane %v3046, 2
  %v3303 = vsel %vm1702, %v3300, %v3302
  %v3304 = vrot.slane %v3047, 2
  %v3305 = vrot.slane %v3048, 2
  %v3306 = vsel %vm1702, %v3304, %v3305
  %v3307 = vrot.slane %v3049, 2
  %v3308 = vsel %vm1702, %v3305, %v3307
  %v3309 = vrot.slane %v3050, 2
  %v3310 = vsel %vm1702, %v3307, %v3309
  %v3311 = vrot.slane %v3051, 2
  %v3312 = vrot.slane %v3052, 2
  %v3313 = vsel %vm1702, %v3311, %v3312
  %v3314 = vrot.slane %v3053, 2
  %v3315 = vsel %vm1702, %v3312, %v3314
  %v3316 = vrot.slane %v3054, 2
  %v3317 = vsel %vm1702, %v3314, %v3316
  %v3318 = vrot.slane %v3055, 2
  %v3319 = vrot.slane %v3056, 2
  %v3320 = vsel %vm1702, %v3318, %v3319
  %v3321 = vrot.slane %v3057, 2
  %v3322 = vsel %vm1702, %v3319, %v3321
  %v3323 = vrot.slane %v3058, 2
  %v3324 = vsel %vm1702, %v3321, %v3323
  %v3325 = vrot.slane %v3059, 2
  %v3326 = vrot.slane %v3060, 2
  %v3327 = vsel %vm1702, %v3325, %v3326
  %v3328 = vrot.slane %v3061, 2
  %v3329 = vsel %vm1702, %v3326, %v3328
  %v3330 = vrot.slane %v3062, 2
  %v3331 = vsel %vm1702, %v3328, %v3330
  %v3332 = vrot.slane %v3063, 2
  %v3333 = vrot.slane %v3064, 2
  %v3334 = vsel %vm1702, %v3332, %v3333
  %v3335 = vrot.slane %v3065, 2
  %v3336 = vsel %vm1702, %v3333, %v3335
  %v3337 = vrot.slane %v3066, 2
  %v3338 = vsel %vm1702, %v3335, %v3337
  %v3339 = vrot.slane %v3067, 2
  %v3340 = vrot.slane %v3068, 2
  %v3341 = vsel %vm1702, %v3339, %v3340
  %v3342 = vrot.slane %v3069, 2
  %v3343 = vsel %vm1702, %v3340, %v3342
  %v3344 = vrot.slane %v3070, 2
  %v3345 = vsel %vm1702, %v3342, %v3344
  %v3346 = vrot.slane %v3071, 2
  %v3347 = vrot.slane %v3072, 2
  %v3348 = vsel %vm1702, %v3346, %v3347
  %v3349 = vrot.slane %v3073, 2
  %v3350 = vsel %vm1702, %v3347, %v3349
  %v3351 = vrot.slane %v3074, 2
  %v3352 = vsel %vm1702, %v3349, %v3351
  %v3353 = vrot.slane %v3075, 2
  %v3354 = vrot.slane %v3076, 2
  %v3355 = vsel %vm1702, %v3353, %v3354
  %v3356 = vrot.slane %v3077, 2
  %v3357 = vsel %vm1702, %v3354, %v3356
  %v3358 = vrot.slane %v3078, 2
  %v3359 = vsel %vm1702, %v3356, %v3358
  %v3360 = vrot.slane %v3079, 2
  %v3361 = vrot.slane %v3080, 2
  %v3362 = vsel %vm1702, %v3360, %v3361
  %v3363 = vrot.slane %v3081, 2
  %v3364 = vsel %vm1702, %v3361, %v3363
  %v3365 = vrot.slane %v3082, 2
  %v3366 = vsel %vm1702, %v3363, %v3365
  %v3367 = vrot.slane %v3083, 2
  %v3368 = vrot.slane %v3084, 2
  %v3369 = vsel %vm1702, %v3367, %v3368
  %v3370 = vrot.slane %v3085, 2
  %v3371 = vsel %vm1702, %v3368, %v3370
  %v3372 = vrot.slane %v3086, 2
  %v3373 = vsel %vm1702, %v3370, %v3372
  %v3374 = vrot.slane %v3087, 2
  %v3375 = vrot.slane %v3088, 2
  %v3376 = vsel %vm1702, %v3374, %v3375
  %v3377 = vrot.slane %v3089, 2
  %v3378 = vsel %vm1702, %v3375, %v3377
  %v3379 = vrot.slane %v3090, 2
  %v3380 = vsel %vm1702, %v3377, %v3379
  %v3381 = vrot.slane %v3091, 2
  %v3382 = vrot.slane %v3092, 2
  %v3383 = vsel %vm1702, %v3381, %v3382
  %v3384 = vrot.slane %v3093, 2
  %v3385 = vsel %vm1702, %v3382, %v3384
  %v3386 = vrot.slane %v3094, 2
  %v3387 = vsel %vm1702, %v3384, %v3386
  %v3388 = vrot.slane %v3095, 2
  %v3389 = vrot.slane %v3096, 2
  %v3390 = vsel %vm1702, %v3388, %v3389
  %v3391 = vrot.slane %v3097, 2
  %v3392 = vsel %vm1702, %v3389, %v3391
  %v3393 = vrot.slane %v3098, 2
  %v3394 = vsel %vm1702, %v3391, %v3393
  %v3395 = vrot.slane %v3099, 2
  %v3396 = vrot.slane %v3100, 2
  %v3397 = vsel %vm1702, %v3395, %v3396
  %v3398 = vrot.slane %v3101, 2
  %v3399 = vsel %vm1702, %v3396, %v3398
  %v3400 = vrot.slane %v3102, 2
  %v3401 = vsel %vm1702, %v3398, %v3400
  %v3402 = vrot.slane %v3103, 2
  %v3403 = vrot.slane %v3104, 2
  %v3404 = vsel %vm1702, %v3402, %v3403
  %v3405 = vrot.slane %v3105, 2
  %v3406 = vsel %vm1702, %v3403, %v3405
  %v3407 = vrot.slane %v3106, 2
  %v3408 = vsel %vm1702, %v3405, %v3407
  %v3409 = vrot.slane %v3107, 2
  %v3410 = vrot.slane %v3108, 2
  %v3411 = vsel %vm1702, %v3409, %v3410
  %v3412 = vrot.slane %v3109, 2
  %v3413 = vsel %vm1702, %v3410, %v3412
  %v3414 = vrot.slane %v3110, 2
  %v3415 = vsel %vm1702, %v3412, %v3414
  %v3416 = vrot.slane %v3111, 2
  %v3417 = vrot.slane %v3112, 2
  %v3418 = vsel %vm1702, %v3416, %v3417
  %v3419 = vrot.slane %v3113, 2
  %v3420 = vsel %vm1702, %v3417, %v3419
  %v3421 = vrot.slane %v3114, 2
  %v3422 = vsel %vm1702, %v3419, %v3421
  %v3535 = vadd.f32 %v2887, %v3229
  %v3536 = vadd.f32 %v2888, %v3231
  %v3537 = vadd.f32 %v2889, %v3233
  %v3538 = vadd.f32 %v2890, %v3232
  %v3539 = vadd.f32 %v2891, %v3236
  %v3540 = vadd.f32 %v2892, %v3238
  %v3541 = vadd.f32 %v2893, %v3240
  %v3542 = vadd.f32 %v2894, %v3239
  %v3543 = vadd.f32 %v2895, %v3243
  %v3544 = vadd.f32 %v2896, %v3245
  %v3545 = vadd.f32 %v2897, %v3247
  %v3546 = vadd.f32 %v2898, %v3246
  %v3547 = vadd.f32 %v2899, %v3250
  %v3548 = vadd.f32 %v2900, %v3252
  %v3549 = vadd.f32 %v2901, %v3254
  %v3550 = vadd.f32 %v2902, %v3253
  %v3551 = vadd.f32 %v2903, %v3257
  %v3552 = vadd.f32 %v2904, %v3259
  %v3553 = vadd.f32 %v2905, %v3261
  %v3554 = vadd.f32 %v2906, %v3260
  %v3555 = vadd.f32 %v2907, %v3264
  %v3556 = vadd.f32 %v2908, %v3266
  %v3557 = vadd.f32 %v2909, %v3268
  %v3558 = vadd.f32 %v2910, %v3267
  %v3559 = vadd.f32 %v2911, %v3271
  %v3560 = vadd.f32 %v2912, %v3273
  %v3561 = vadd.f32 %v2913, %v3275
  %v3562 = vadd.f32 %v2914, %v3274
  %v3563 = vadd.f32 %v2915, %v3278
  %v3564 = vadd.f32 %v2916, %v3280
  %v3565 = vadd.f32 %v2917, %v3282
  %v3566 = vadd.f32 %v2918, %v3281
  %v3567 = vadd.f32 %v2919, %v3285
  %v3568 = vadd.f32 %v2920, %v3287
  %v3569 = vadd.f32 %v2921, %v3289
  %v3570 = vadd.f32 %v2922, %v3288
  %v3571 = vadd.f32 %v2923, %v3292
  %v3572 = vadd.f32 %v2924, %v3294
  %v3573 = vadd.f32 %v2925, %v3296
  %v3574 = vadd.f32 %v2926, %v3295
  %v3575 = vadd.f32 %v2927, %v3299
  %v3576 = vadd.f32 %v2928, %v3301
  %v3577 = vadd.f32 %v2929, %v3303
  %v3578 = vadd.f32 %v2930, %v3302
  %v3579 = vadd.f32 %v2931, %v3306
  %v3580 = vadd.f32 %v2932, %v3308
  %v3581 = vadd.f32 %v2933, %v3310
  %v3582 = vadd.f32 %v2934, %v3309
  %v3583 = vadd.f32 %v2935, %v3313
  %v3584 = vadd.f32 %v2936, %v3315
  %v3585 = vadd.f32 %v2937, %v3317
  %v3586 = vadd.f32 %v2938, %v3316
  %v3587 = vadd.f32 %v2939, %v3320
  %v3588 = vadd.f32 %v2940, %v3322
  %v3589 = vadd.f32 %v2941, %v3324
  %v3590 = vadd.f32 %v2942, %v3323
  %v3591 = vadd.f32 %v2943, %v3327
  %v3592 = vadd.f32 %v2944, %v3329
  %v3593 = vadd.f32 %v2945, %v3331
  %v3594 = vadd.f32 %v2946, %v3330
  %v3595 = vadd.f32 %v2947, %v3334
  %v3596 = vadd.f32 %v2948, %v3336
  %v3597 = vadd.f32 %v2949, %v3338
  %v3598 = vadd.f32 %v2950, %v3337
  %v3599 = vadd.f32 %v2951, %v3341
  %v3600 = vadd.f32 %v2952, %v3343
  %v3601 = vadd.f32 %v2953, %v3345
  %v3602 = vadd.f32 %v2954, %v3344
  %v3603 = vadd.f32 %v2955, %v3348
  %v3604 = vadd.f32 %v2956, %v3350
  %v3605 = vadd.f32 %v2957, %v3352
  %v3606 = vadd.f32 %v2958, %v3351
  %v3607 = vadd.f32 %v2959, %v3355
  %v3608 = vadd.f32 %v2960, %v3357
  %v3609 = vadd.f32 %v2961, %v3359
  %v3610 = vadd.f32 %v2962, %v3358
  %v3611 = vadd.f32 %v2963, %v3362
  %v3612 = vadd.f32 %v2964, %v3364
  %v3613 = vadd.f32 %v2965, %v3366
  %v3614 = vadd.f32 %v2966, %v3365
  %v3615 = vadd.f32 %v2967, %v3369
  %v3616 = vadd.f32 %v2968, %v3371
  %v3617 = vadd.f32 %v2969, %v3373
  %v3618 = vadd.f32 %v2970, %v3372
  %v3619 = vadd.f32 %v2971, %v3376
  %v3620 = vadd.f32 %v2972, %v3378
  %v3621 = vadd.f32 %v2973, %v3380
  %v3622 = vadd.f32 %v2974, %v3379
  %v3623 = vadd.f32 %v2975, %v3383
  %v3624 = vadd.f32 %v2976, %v3385
  %v3625 = vadd.f32 %v2977, %v3387
  %v3626 = vadd.f32 %v2978, %v3386
  %v3627 = vadd.f32 %v2979, %v3390
  %v3628 = vadd.f32 %v2980, %v3392
  %v3629 = vadd.f32 %v2981, %v3394
  %v3630 = vadd.f32 %v2982, %v3393
  %v3631 = vadd.f32 %v2983, %v3397
  %v3632 = vadd.f32 %v2984, %v3399
  %v3633 = vadd.f32 %v2985, %v3401
  %v3634 = vadd.f32 %v2986, %v3400
  %v3635 = vadd.f32 %v2987, %v3404
  %v3636 = vadd.f32 %v2988, %v3406
  %v3637 = vadd.f32 %v2989, %v3408
  %v3638 = vadd.f32 %v2990, %v3407
  %v3639 = vadd.f32 %v2991, %v3411
  %v3640 = vadd.f32 %v2992, %v3413
  %v3641 = vadd.f32 %v2993, %v3415
  %v3642 = vadd.f32 %v2994, %v3414
  %v3643 = vadd.f32 %v2995, %v3418
  %v3644 = vadd.f32 %v2996, %v3420
  %v3645 = vadd.f32 %v2997, %v3422
  %v3646 = vadd.f32 %v2998, %v3421
  %v3647 = vlaneseq
  %v3648 = vshrl.u32 %v3647, 7
  %v3649 = vsub.s32 0, %v3648
  %v3650 = vrot.slane %v596, %v3649
  %v3651 = vmul.f32 %v482, %v3650
  %v3652 = vmul.f32 %v483, %v3650
  %v3653 = vmul.f32 %v484, %v3650
  %v3654 = vmul.f32 %v485, %v3650
  %v3655 = vmul.f32 %v486, %v3650
  %v3656 = vmul.f32 %v487, %v3650
  %v3657 = vmul.f32 %v488, %v3650
  %v3658 = vmul.f32 %v489, %v3650
  %v3659 = vmul.f32 %v490, %v3650
  %v3660 = vmul.f32 %v491, %v3650
  %v3661 = vmul.f32 %v492, %v3650
  %v3662 = vmul.f32 %v493, %v3650
  %v3663 = vmul.f32 %v494, %v3650
  %v3664 = vmul.f32 %v495, %v3650
  %v3665 = vmul.f32 %v496, %v3650
  %v3666 = vmul.f32 %v497, %v3650
  %v3667 = vmul.f32 %v498, %v3650
  %v3668 = vmul.f32 %v499, %v3650
  %v3669 = vmul.f32 %v500, %v3650
  %v3670 = vmul.f32 %v501, %v3650
  %v3671 = vmul.f32 %v502, %v3650
  %v3672 = vmul.f32 %v503, %v3650
  %v3673 = vmul.f32 %v504, %v3650
  %v3674 = vmul.f32 %v505, %v3650
  %v3675 = vmul.f32 %v506, %v3650
  %v3676 = vmul.f32 %v507, %v3650
  %v3677 = vmul.f32 %v508, %v3650
  %v3678 = vmul.f32 %v509, %v3650
  %v3679 = vmul.f32 %v510, %v3650
  %v3680 = vmul.f32 %v511, %v3650
  %v3681 = vmul.f32 %v512, %v3650
  %v3682 = vmul.f32 %v513, %v3650
  %v3683 = vmul.f32 %v514, %v3650
  %v3684 = vmul.f32 %v515, %v3650
  %v3685 = vmul.f32 %v516, %v3650
  %v3686 = vmul.f32 %v517, %v3650
  %v3687 = vmul.f32 %v518, %v3650
  %v3688 = vmul.f32 %v519, %v3650
  %v3689 = vmul.f32 %v520, %v3650
  %v3690 = vmul.f32 %v521, %v3650
  %v3691 = vmul.f32 %v522, %v3650
  %v3692 = vmul.f32 %v523, %v3650
  %v3693 = vmul.f32 %v524, %v3650
  %v3694 = vmul.f32 %v525, %v3650
  %v3695 = vmul.f32 %v526, %v3650
  %v3696 = vmul.f32 %v527, %v3650
  %v3697 = vmul.f32 %v528, %v3650
  %v3698 = vmul.f32 %v529, %v3650
  %v3699 = vmul.f32 %v530, %v3650
  %v3700 = vmul.f32 %v531, %v3650
  %v3701 = vmul.f32 %v532, %v3650
  %v3702 = vmul.f32 %v533, %v3650
  %v3703 = vmul.f32 %v534, %v3650
  %v3704 = vmul.f32 %v535, %v3650
  %v3705 = vmul.f32 %v536, %v3650
  %v3706 = vmul.f32 %v537, %v3650
  %v3707 = vmul.f32 %v538, %v3650
  %v3708 = vmul.f32 %v539, %v3650
  %v3709 = vmul.f32 %v540, %v3650
  %v3710 = vmul.f32 %v541, %v3650
  %v3711 = vmul.f32 %v542, %v3650
  %v3712 = vmul.f32 %v543, %v3650
  %v3713 = vmul.f32 %v544, %v3650
  %v3714 = vmul.f32 %v545, %v3650
  %v3715 = vmul.f32 %v546, %v3650
  %v3716 = vmul.f32 %v547, %v3650
  %v3717 = vmul.f32 %v548, %v3650
  %v3718 = vmul.f32 %v549, %v3650
  %v3719 = vmul.f32 %v550, %v3650
  %v3720 = vmul.f32 %v551, %v3650
  %v3721 = vmul.f32 %v552, %v3650
  %v3722 = vmul.f32 %v553, %v3650
  %v3723 = vmul.f32 %v554, %v3650
  %v3724 = vmul.f32 %v555, %v3650
  %v3725 = vmul.f32 %v556, %v3650
  %v3726 = vmul.f32 %v557, %v3650
  %v3727 = vmul.f32 %v558, %v3650
  %v3728 = vmul.f32 %v559, %v3650
  %v3729 = vmul.f32 %v560, %v3650
  %v3730 = vmul.f32 %v561, %v3650
  %v3731 = vmul.f32 %v562, %v3650
  %v3732 = vmul.f32 %v563, %v3650
  %v3733 = vmul.f32 %v564, %v3650
  %v3734 = vmul.f32 %v565, %v3650
  %v3735 = vmul.f32 %v566, %v3650
  %v3736 = vmul.f32 %v567, %v3650
  %v3737 = vmul.f32 %v568, %v3650
  %v3738 = vmul.f32 %v569, %v3650
  %v3739 = vmul.f32 %v570, %v3650
  %v3740 = vmul.f32 %v571, %v3650
  %v3741 = vmul.f32 %v572, %v3650
  %v3742 = vmul.f32 %v573, %v3650
  %v3743 = vmul.f32 %v574, %v3650
  %v3744 = vmul.f32 %v575, %v3650
  %v3745 = vmul.f32 %v576, %v3650
  %v3746 = vmul.f32 %v577, %v3650
  %v3747 = vmul.f32 %v578, %v3650
  %v3748 = vmul.f32 %v579, %v3650
  %v3749 = vmul.f32 %v580, %v3650
  %v3750 = vmul.f32 %v581, %v3650
  %v3751 = vmul.f32 %v582, %v3650
  %v3752 = vmul.f32 %v583, %v3650
  %v3753 = vmul.f32 %v584, %v3650
  %v3754 = vmul.f32 %v585, %v3650
  %v3755 = vmul.f32 %v586, %v3650
  %v3756 = vmul.f32 %v587, %v3650
  %v3757 = vmul.f32 %v588, %v3650
  %v3758 = vmul.f32 %v589, %v3650
  %v3759 = vmul.f32 %v590, %v3650
  %v3760 = vmul.f32 %v591, %v3650
  %v3761 = vmul.f32 %v592, %v3650
  %v3762 = vmul.f32 %v593, %v3650
  %v3763 = vadd.f32 %v3535, %v3651
  %v3764 = vadd.f32 %v3536, %v3652
  %v3765 = vadd.f32 %v3537, %v3653
  %v3766 = vadd.f32 %v3538, %v3654
  %v3767 = vadd.f32 %v3539, %v3655
  %v3768 = vadd.f32 %v3540, %v3656
  %v3769 = vadd.f32 %v3541, %v3657
  %v3770 = vadd.f32 %v3542, %v3658
  %v3771 = vadd.f32 %v3543, %v3659
  %v3772 = vadd.f32 %v3544, %v3660
  %v3773 = vadd.f32 %v3545, %v3661
  %v3774 = vadd.f32 %v3546, %v3662
  %v3775 = vadd.f32 %v3547, %v3663
  %v3776 = vadd.f32 %v3548, %v3664
  %v3777 = vadd.f32 %v3549, %v3665
  %v3778 = vadd.f32 %v3550, %v3666
  %v3779 = vadd.f32 %v3551, %v3667
  %v3780 = vadd.f32 %v3552, %v3668
  %v3781 = vadd.f32 %v3553, %v3669
  %v3782 = vadd.f32 %v3554, %v3670
  %v3783 = vadd.f32 %v3555, %v3671
  %v3784 = vadd.f32 %v3556, %v3672
  %v3785 = vadd.f32 %v3557, %v3673
  %v3786 = vadd.f32 %v3558, %v3674
  %v3787 = vadd.f32 %v3559, %v3675
  %v3788 = vadd.f32 %v3560, %v3676
  %v3789 = vadd.f32 %v3561, %v3677
  %v3790 = vadd.f32 %v3562, %v3678
  %v3791 = vadd.f32 %v3563, %v3679
  %v3792 = vadd.f32 %v3564, %v3680
  %v3793 = vadd.f32 %v3565, %v3681
  %v3794 = vadd.f32 %v3566, %v3682
  %v3795 = vadd.f32 %v3567, %v3683
  %v3796 = vadd.f32 %v3568, %v3684
  %v3797 = vadd.f32 %v3569, %v3685
  %v3798 = vadd.f32 %v3570, %v3686
  %v3799 = vadd.f32 %v3571, %v3687
  %v3800 = vadd.f32 %v3572, %v3688
  %v3801 = vadd.f32 %v3573, %v3689
  %v3802 = vadd.f32 %v3574, %v3690
  %v3803 = vadd.f32 %v3575, %v3691
  %v3804 = vadd.f32 %v3576, %v3692
  %v3805 = vadd.f32 %v3577, %v3693
  %v3806 = vadd.f32 %v3578, %v3694
  %v3807 = vadd.f32 %v3579, %v3695
  %v3808 = vadd.f32 %v3580, %v3696
  %v3809 = vadd.f32 %v3581, %v3697
  %v3810 = vadd.f32 %v3582, %v3698
  %v3811 = vadd.f32 %v3583, %v3699
  %v3812 = vadd.f32 %v3584, %v3700
  %v3813 = vadd.f32 %v3585, %v3701
  %v3814 = vadd.f32 %v3586, %v3702
  %v3815 = vadd.f32 %v3587, %v3703
  %v3816 = vadd.f32 %v3588, %v3704
  %v3817 = vadd.f32 %v3589, %v3705
  %v3818 = vadd.f32 %v3590, %v3706
  %v3819 = vadd.f32 %v3591, %v3707
  %v3820 = vadd.f32 %v3592, %v3708
  %v3821 = vadd.f32 %v3593, %v3709
  %v3822 = vadd.f32 %v3594, %v3710
  %v3823 = vadd.f32 %v3595, %v3711
  %v3824 = vadd.f32 %v3596, %v3712
  %v3825 = vadd.f32 %v3597, %v3713
  %v3826 = vadd.f32 %v3598, %v3714
  %v3827 = vadd.f32 %v3599, %v3715
  %v3828 = vadd.f32 %v3600, %v3716
  %v3829 = vadd.f32 %v3601, %v3717
  %v3830 = vadd.f32 %v3602, %v3718
  %v3831 = vadd.f32 %v3603, %v3719
  %v3832 = vadd.f32 %v3604, %v3720
  %v3833 = vadd.f32 %v3605, %v3721
  %v3834 = vadd.f32 %v3606, %v3722
  %v3835 = vadd.f32 %v3607, %v3723
  %v3836 = vadd.f32 %v3608, %v3724
  %v3837 = vadd.f32 %v3609, %v3725
  %v3838 = vadd.f32 %v3610, %v3726
  %v3839 = vadd.f32 %v3611, %v3727
  %v3840 = vadd.f32 %v3612, %v3728
  %v3841 = vadd.f32 %v3613, %v3729
  %v3842 = vadd.f32 %v3614, %v3730
  %v3843 = vadd.f32 %v3615, %v3731
  %v3844 = vadd.f32 %v3616, %v3732
  %v3845 = vadd.f32 %v3617, %v3733
  %v3846 = vadd.f32 %v3618, %v3734
  %v3847 = vadd.f32 %v3619, %v3735
  %v3848 = vadd.f32 %v3620, %v3736
  %v3849 = vadd.f32 %v3621, %v3737
  %v3850 = vadd.f32 %v3622, %v3738
  %v3851 = vadd.f32 %v3623, %v3739
  %v3852 = vadd.f32 %v3624, %v3740
  %v3853 = vadd.f32 %v3625, %v3741
  %v3854 = vadd.f32 %v3626, %v3742
  %v3855 = vadd.f32 %v3627, %v3743
  %v3856 = vadd.f32 %v3628, %v3744
  %v3857 = vadd.f32 %v3629, %v3745
  %v3858 = vadd.f32 %v3630, %v3746
  %v3859 = vadd.f32 %v3631, %v3747
  %v3860 = vadd.f32 %v3632, %v3748
  %v3861 = vadd.f32 %v3633, %v3749
  %v3862 = vadd.f32 %v3634, %v3750
  %v3863 = vadd.f32 %v3635, %v3751
  %v3864 = vadd.f32 %v3636, %v3752
  %v3865 = vadd.f32 %v3637, %v3753
  %v3866 = vadd.f32 %v3638, %v3754
  %v3867 = vadd.f32 %v3639, %v3755
  %v3868 = vadd.f32 %v3640, %v3756
  %v3869 = vadd.f32 %v3641, %v3757
  %v3870 = vadd.f32 %v3642, %v3758
  %v3871 = vadd.f32 %v3643, %v3759
  %v3872 = vadd.f32 %v3644, %v3760
  %v3873 = vadd.f32 %v3645, %v3761
  %v3874 = vadd.f32 %v3646, %v3762
  %v3875 = vlaneseq
  %v3876 = vshrl.u32 %v3875, 7
  %v3877 = vsub.s32 1, %v3876
  %v3878 = vrot.slane %v596, %v3877
  %v3879 = vmul.f32 %v482, %v3878
  %v3880 = vmul.f32 %v483, %v3878
  %v3881 = vmul.f32 %v484, %v3878
  %v3882 = vmul.f32 %v485, %v3878
  %v3883 = vmul.f32 %v486, %v3878
  %v3884 = vmul.f32 %v487, %v3878
  %v3885 = vmul.f32 %v488, %v3878
  %v3886 = vmul.f32 %v489, %v3878
  %v3887 = vmul.f32 %v490, %v3878
  %v3888 = vmul.f32 %v491, %v3878
  %v3889 = vmul.f32 %v492, %v3878
  %v3890 = vmul.f32 %v493, %v3878
  %v3891 = vmul.f32 %v494, %v3878
  %v3892 = vmul.f32 %v495, %v3878
  %v3893 = vmul.f32 %v496, %v3878
  %v3894 = vmul.f32 %v497, %v3878
  %v3895 = vmul.f32 %v498, %v3878
  %v3896 = vmul.f32 %v499, %v3878
  %v3897 = vmul.f32 %v500, %v3878
  %v3898 = vmul.f32 %v501, %v3878
  %v3899 = vmul.f32 %v502, %v3878
  %v3900 = vmul.f32 %v503, %v3878
  %v3901 = vmul.f32 %v504, %v3878
  %v3902 = vmul.f32 %v505, %v3878
  %v3903 = vmul.f32 %v506, %v3878
  %v3904 = vmul.f32 %v507, %v3878
  %v3905 = vmul.f32 %v508, %v3878
  %v3906 = vmul.f32 %v509, %v3878
  %v3907 = vmul.f32 %v510, %v3878
  %v3908 = vmul.f32 %v511, %v3878
  %v3909 = vmul.f32 %v512, %v3878
  %v3910 = vmul.f32 %v513, %v3878
  %v3911 = vmul.f32 %v514, %v3878
  %v3912 = vmul.f32 %v515, %v3878
  %v3913 = vmul.f32 %v516, %v3878
  %v3914 = vmul.f32 %v517, %v3878
  %v3915 = vmul.f32 %v518, %v3878
  %v3916 = vmul.f32 %v519, %v3878
  %v3917 = vmul.f32 %v520, %v3878
  %v3918 = vmul.f32 %v521, %v3878
  %v3919 = vmul.f32 %v522, %v3878
  %v3920 = vmul.f32 %v523, %v3878
  %v3921 = vmul.f32 %v524, %v3878
  %v3922 = vmul.f32 %v525, %v3878
  %v3923 = vmul.f32 %v526, %v3878
  %v3924 = vmul.f32 %v527, %v3878
  %v3925 = vmul.f32 %v528, %v3878
  %v3926 = vmul.f32 %v529, %v3878
  %v3927 = vmul.f32 %v530, %v3878
  %v3928 = vmul.f32 %v531, %v3878
  %v3929 = vmul.f32 %v532, %v3878
  %v3930 = vmul.f32 %v533, %v3878
  %v3931 = vmul.f32 %v534, %v3878
  %v3932 = vmul.f32 %v535, %v3878
  %v3933 = vmul.f32 %v536, %v3878
  %v3934 = vmul.f32 %v537, %v3878
  %v3935 = vmul.f32 %v538, %v3878
  %v3936 = vmul.f32 %v539, %v3878
  %v3937 = vmul.f32 %v540, %v3878
  %v3938 = vmul.f32 %v541, %v3878
  %v3939 = vmul.f32 %v542, %v3878
  %v3940 = vmul.f32 %v543, %v3878
  %v3941 = vmul.f32 %v544, %v3878
  %v3942 = vmul.f32 %v545, %v3878
  %v3943 = vmul.f32 %v546, %v3878
  %v3944 = vmul.f32 %v547, %v3878
  %v3945 = vmul.f32 %v548, %v3878
  %v3946 = vmul.f32 %v549, %v3878
  %v3947 = vmul.f32 %v550, %v3878
  %v3948 = vmul.f32 %v551, %v3878
  %v3949 = vmul.f32 %v552, %v3878
  %v3950 = vmul.f32 %v553, %v3878
  %v3951 = vmul.f32 %v554, %v3878
  %v3952 = vmul.f32 %v555, %v3878
  %v3953 = vmul.f32 %v556, %v3878
  %v3954 = vmul.f32 %v557, %v3878
  %v3955 = vmul.f32 %v558, %v3878
  %v3956 = vmul.f32 %v559, %v3878
  %v3957 = vmul.f32 %v560, %v3878
  %v3958 = vmul.f32 %v561, %v3878
  %v3959 = vmul.f32 %v562, %v3878
  %v3960 = vmul.f32 %v563, %v3878
  %v3961 = vmul.f32 %v564, %v3878
  %v3962 = vmul.f32 %v565, %v3878
  %v3963 = vmul.f32 %v566, %v3878
  %v3964 = vmul.f32 %v567, %v3878
  %v3965 = vmul.f32 %v568, %v3878
  %v3966 = vmul.f32 %v569, %v3878
  %v3967 = vmul.f32 %v570, %v3878
  %v3968 = vmul.f32 %v571, %v3878
  %v3969 = vmul.f32 %v572, %v3878
  %v3970 = vmul.f32 %v573, %v3878
  %v3971 = vmul.f32 %v574, %v3878
  %v3972 = vmul.f32 %v575, %v3878
  %v3973 = vmul.f32 %v576, %v3878
  %v3974 = vmul.f32 %v577, %v3878
  %v3975 = vmul.f32 %v578, %v3878
  %v3976 = vmul.f32 %v579, %v3878
  %v3977 = vmul.f32 %v580, %v3878
  %v3978 = vmul.f32 %v581, %v3878
  %v3979 = vmul.f32 %v582, %v3878
  %v3980 = vmul.f32 %v583, %v3878
  %v3981 = vmul.f32 %v584, %v3878
  %v3982 = vmul.f32 %v585, %v3878
  %v3983 = vmul.f32 %v586, %v3878
  %v3984 = vmul.f32 %v587, %v3878
  %v3985 = vmul.f32 %v588, %v3878
  %v3986 = vmul.f32 %v589, %v3878
  %v3987 = vmul.f32 %v590, %v3878
  %v3988 = vmul.f32 %v591, %v3878
  %v3989 = vmul.f32 %v592, %v3878
  %v3990 = vmul.f32 %v593, %v3878
  %v4103 = vrot.slane %v3879, 1
  %v4104 = vrot.slane %v3880, 1
  %v4105 = vsel %vm1053, %v4103, %v4104
  %v4106 = vrot.slane %v3881, 1
  %v4107 = vsel %vm1053, %v4104, %v4106
  %v4108 = vrot.slane %v3882, 1
  %v4109 = vsel %vm1053, %v4106, %v4108
  %v4110 = vrot.slane %v3883, 1
  %v4111 = vrot.slane %v3884, 1
  %v4112 = vsel %vm1053, %v4110, %v4111
  %v4113 = vrot.slane %v3885, 1
  %v4114 = vsel %vm1053, %v4111, %v4113
  %v4115 = vrot.slane %v3886, 1
  %v4116 = vsel %vm1053, %v4113, %v4115
  %v4117 = vrot.slane %v3887, 1
  %v4118 = vrot.slane %v3888, 1
  %v4119 = vsel %vm1053, %v4117, %v4118
  %v4120 = vrot.slane %v3889, 1
  %v4121 = vsel %vm1053, %v4118, %v4120
  %v4122 = vrot.slane %v3890, 1
  %v4123 = vsel %vm1053, %v4120, %v4122
  %v4124 = vrot.slane %v3891, 1
  %v4125 = vrot.slane %v3892, 1
  %v4126 = vsel %vm1053, %v4124, %v4125
  %v4127 = vrot.slane %v3893, 1
  %v4128 = vsel %vm1053, %v4125, %v4127
  %v4129 = vrot.slane %v3894, 1
  %v4130 = vsel %vm1053, %v4127, %v4129
  %v4131 = vrot.slane %v3895, 1
  %v4132 = vrot.slane %v3896, 1
  %v4133 = vsel %vm1053, %v4131, %v4132
  %v4134 = vrot.slane %v3897, 1
  %v4135 = vsel %vm1053, %v4132, %v4134
  %v4136 = vrot.slane %v3898, 1
  %v4137 = vsel %vm1053, %v4134, %v4136
  %v4138 = vrot.slane %v3899, 1
  %v4139 = vrot.slane %v3900, 1
  %v4140 = vsel %vm1053, %v4138, %v4139
  %v4141 = vrot.slane %v3901, 1
  %v4142 = vsel %vm1053, %v4139, %v4141
  %v4143 = vrot.slane %v3902, 1
  %v4144 = vsel %vm1053, %v4141, %v4143
  %v4145 = vrot.slane %v3903, 1
  %v4146 = vrot.slane %v3904, 1
  %v4147 = vsel %vm1053, %v4145, %v4146
  %v4148 = vrot.slane %v3905, 1
  %v4149 = vsel %vm1053, %v4146, %v4148
  %v4150 = vrot.slane %v3906, 1
  %v4151 = vsel %vm1053, %v4148, %v4150
  %v4152 = vrot.slane %v3907, 1
  %v4153 = vrot.slane %v3908, 1
  %v4154 = vsel %vm1053, %v4152, %v4153
  %v4155 = vrot.slane %v3909, 1
  %v4156 = vsel %vm1053, %v4153, %v4155
  %v4157 = vrot.slane %v3910, 1
  %v4158 = vsel %vm1053, %v4155, %v4157
  %v4159 = vrot.slane %v3911, 1
  %v4160 = vrot.slane %v3912, 1
  %v4161 = vsel %vm1053, %v4159, %v4160
  %v4162 = vrot.slane %v3913, 1
  %v4163 = vsel %vm1053, %v4160, %v4162
  %v4164 = vrot.slane %v3914, 1
  %v4165 = vsel %vm1053, %v4162, %v4164
  %v4166 = vrot.slane %v3915, 1
  %v4167 = vrot.slane %v3916, 1
  %v4168 = vsel %vm1053, %v4166, %v4167
  %v4169 = vrot.slane %v3917, 1
  %v4170 = vsel %vm1053, %v4167, %v4169
  %v4171 = vrot.slane %v3918, 1
  %v4172 = vsel %vm1053, %v4169, %v4171
  %v4173 = vrot.slane %v3919, 1
  %v4174 = vrot.slane %v3920, 1
  %v4175 = vsel %vm1053, %v4173, %v4174
  %v4176 = vrot.slane %v3921, 1
  %v4177 = vsel %vm1053, %v4174, %v4176
  %v4178 = vrot.slane %v3922, 1
  %v4179 = vsel %vm1053, %v4176, %v4178
  %v4180 = vrot.slane %v3923, 1
  %v4181 = vrot.slane %v3924, 1
  %v4182 = vsel %vm1053, %v4180, %v4181
  %v4183 = vrot.slane %v3925, 1
  %v4184 = vsel %vm1053, %v4181, %v4183
  %v4185 = vrot.slane %v3926, 1
  %v4186 = vsel %vm1053, %v4183, %v4185
  %v4187 = vrot.slane %v3927, 1
  %v4188 = vrot.slane %v3928, 1
  %v4189 = vsel %vm1053, %v4187, %v4188
  %v4190 = vrot.slane %v3929, 1
  %v4191 = vsel %vm1053, %v4188, %v4190
  %v4192 = vrot.slane %v3930, 1
  %v4193 = vsel %vm1053, %v4190, %v4192
  %v4194 = vrot.slane %v3931, 1
  %v4195 = vrot.slane %v3932, 1
  %v4196 = vsel %vm1053, %v4194, %v4195
  %v4197 = vrot.slane %v3933, 1
  %v4198 = vsel %vm1053, %v4195, %v4197
  %v4199 = vrot.slane %v3934, 1
  %v4200 = vsel %vm1053, %v4197, %v4199
  %v4201 = vrot.slane %v3935, 1
  %v4202 = vrot.slane %v3936, 1
  %v4203 = vsel %vm1053, %v4201, %v4202
  %v4204 = vrot.slane %v3937, 1
  %v4205 = vsel %vm1053, %v4202, %v4204
  %v4206 = vrot.slane %v3938, 1
  %v4207 = vsel %vm1053, %v4204, %v4206
  %v4208 = vrot.slane %v3939, 1
  %v4209 = vrot.slane %v3940, 1
  %v4210 = vsel %vm1053, %v4208, %v4209
  %v4211 = vrot.slane %v3941, 1
  %v4212 = vsel %vm1053, %v4209, %v4211
  %v4213 = vrot.slane %v3942, 1
  %v4214 = vsel %vm1053, %v4211, %v4213
  %v4215 = vrot.slane %v3943, 1
  %v4216 = vrot.slane %v3944, 1
  %v4217 = vsel %vm1053, %v4215, %v4216
  %v4218 = vrot.slane %v3945, 1
  %v4219 = vsel %vm1053, %v4216, %v4218
  %v4220 = vrot.slane %v3946, 1
  %v4221 = vsel %vm1053, %v4218, %v4220
  %v4222 = vrot.slane %v3947, 1
  %v4223 = vrot.slane %v3948, 1
  %v4224 = vsel %vm1053, %v4222, %v4223
  %v4225 = vrot.slane %v3949, 1
  %v4226 = vsel %vm1053, %v4223, %v4225
  %v4227 = vrot.slane %v3950, 1
  %v4228 = vsel %vm1053, %v4225, %v4227
  %v4229 = vrot.slane %v3951, 1
  %v4230 = vrot.slane %v3952, 1
  %v4231 = vsel %vm1053, %v4229, %v4230
  %v4232 = vrot.slane %v3953, 1
  %v4233 = vsel %vm1053, %v4230, %v4232
  %v4234 = vrot.slane %v3954, 1
  %v4235 = vsel %vm1053, %v4232, %v4234
  %v4236 = vrot.slane %v3955, 1
  %v4237 = vrot.slane %v3956, 1
  %v4238 = vsel %vm1053, %v4236, %v4237
  %v4239 = vrot.slane %v3957, 1
  %v4240 = vsel %vm1053, %v4237, %v4239
  %v4241 = vrot.slane %v3958, 1
  %v4242 = vsel %vm1053, %v4239, %v4241
  %v4243 = vrot.slane %v3959, 1
  %v4244 = vrot.slane %v3960, 1
  %v4245 = vsel %vm1053, %v4243, %v4244
  %v4246 = vrot.slane %v3961, 1
  %v4247 = vsel %vm1053, %v4244, %v4246
  %v4248 = vrot.slane %v3962, 1
  %v4249 = vsel %vm1053, %v4246, %v4248
  %v4250 = vrot.slane %v3963, 1
  %v4251 = vrot.slane %v3964, 1
  %v4252 = vsel %vm1053, %v4250, %v4251
  %v4253 = vrot.slane %v3965, 1
  %v4254 = vsel %vm1053, %v4251, %v4253
  %v4255 = vrot.slane %v3966, 1
  %v4256 = vsel %vm1053, %v4253, %v4255
  %v4257 = vrot.slane %v3967, 1
  %v4258 = vrot.slane %v3968, 1
  %v4259 = vsel %vm1053, %v4257, %v4258
  %v4260 = vrot.slane %v3969, 1
  %v4261 = vsel %vm1053, %v4258, %v4260
  %v4262 = vrot.slane %v3970, 1
  %v4263 = vsel %vm1053, %v4260, %v4262
  %v4264 = vrot.slane %v3971, 1
  %v4265 = vrot.slane %v3972, 1
  %v4266 = vsel %vm1053, %v4264, %v4265
  %v4267 = vrot.slane %v3973, 1
  %v4268 = vsel %vm1053, %v4265, %v4267
  %v4269 = vrot.slane %v3974, 1
  %v4270 = vsel %vm1053, %v4267, %v4269
  %v4271 = vrot.slane %v3975, 1
  %v4272 = vrot.slane %v3976, 1
  %v4273 = vsel %vm1053, %v4271, %v4272
  %v4274 = vrot.slane %v3977, 1
  %v4275 = vsel %vm1053, %v4272, %v4274
  %v4276 = vrot.slane %v3978, 1
  %v4277 = vsel %vm1053, %v4274, %v4276
  %v4278 = vrot.slane %v3979, 1
  %v4279 = vrot.slane %v3980, 1
  %v4280 = vsel %vm1053, %v4278, %v4279
  %v4281 = vrot.slane %v3981, 1
  %v4282 = vsel %vm1053, %v4279, %v4281
  %v4283 = vrot.slane %v3982, 1
  %v4284 = vsel %vm1053, %v4281, %v4283
  %v4285 = vrot.slane %v3983, 1
  %v4286 = vrot.slane %v3984, 1
  %v4287 = vsel %vm1053, %v4285, %v4286
  %v4288 = vrot.slane %v3985, 1
  %v4289 = vsel %vm1053, %v4286, %v4288
  %v4290 = vrot.slane %v3986, 1
  %v4291 = vsel %vm1053, %v4288, %v4290
  %v4292 = vrot.slane %v3987, 1
  %v4293 = vrot.slane %v3988, 1
  %v4294 = vsel %vm1053, %v4292, %v4293
  %v4295 = vrot.slane %v3989, 1
  %v4296 = vsel %vm1053, %v4293, %v4295
  %v4297 = vrot.slane %v3990, 1
  %v4298 = vsel %vm1053, %v4295, %v4297
  %v4411 = vadd.f32 %v3763, %v4105
  %v4412 = vadd.f32 %v3764, %v4107
  %v4413 = vadd.f32 %v3765, %v4109
  %v4414 = vadd.f32 %v3766, %v4108
  %v4415 = vadd.f32 %v3767, %v4112
  %v4416 = vadd.f32 %v3768, %v4114
  %v4417 = vadd.f32 %v3769, %v4116
  %v4418 = vadd.f32 %v3770, %v4115
  %v4419 = vadd.f32 %v3771, %v4119
  %v4420 = vadd.f32 %v3772, %v4121
  %v4421 = vadd.f32 %v3773, %v4123
  %v4422 = vadd.f32 %v3774, %v4122
  %v4423 = vadd.f32 %v3775, %v4126
  %v4424 = vadd.f32 %v3776, %v4128
  %v4425 = vadd.f32 %v3777, %v4130
  %v4426 = vadd.f32 %v3778, %v4129
  %v4427 = vadd.f32 %v3779, %v4133
  %v4428 = vadd.f32 %v3780, %v4135
  %v4429 = vadd.f32 %v3781, %v4137
  %v4430 = vadd.f32 %v3782, %v4136
  %v4431 = vadd.f32 %v3783, %v4140
  %v4432 = vadd.f32 %v3784, %v4142
  %v4433 = vadd.f32 %v3785, %v4144
  %v4434 = vadd.f32 %v3786, %v4143
  %v4435 = vadd.f32 %v3787, %v4147
  %v4436 = vadd.f32 %v3788, %v4149
  %v4437 = vadd.f32 %v3789, %v4151
  %v4438 = vadd.f32 %v3790, %v4150
  %v4439 = vadd.f32 %v3791, %v4154
  %v4440 = vadd.f32 %v3792, %v4156
  %v4441 = vadd.f32 %v3793, %v4158
  %v4442 = vadd.f32 %v3794, %v4157
  %v4443 = vadd.f32 %v3795, %v4161
  %v4444 = vadd.f32 %v3796, %v4163
  %v4445 = vadd.f32 %v3797, %v4165
  %v4446 = vadd.f32 %v3798, %v4164
  %v4447 = vadd.f32 %v3799, %v4168
  %v4448 = vadd.f32 %v3800, %v4170
  %v4449 = vadd.f32 %v3801, %v4172
  %v4450 = vadd.f32 %v3802, %v4171
  %v4451 = vadd.f32 %v3803, %v4175
  %v4452 = vadd.f32 %v3804, %v4177
  %v4453 = vadd.f32 %v3805, %v4179
  %v4454 = vadd.f32 %v3806, %v4178
  %v4455 = vadd.f32 %v3807, %v4182
  %v4456 = vadd.f32 %v3808, %v4184
  %v4457 = vadd.f32 %v3809, %v4186
  %v4458 = vadd.f32 %v3810, %v4185
  %v4459 = vadd.f32 %v3811, %v4189
  %v4460 = vadd.f32 %v3812, %v4191
  %v4461 = vadd.f32 %v3813, %v4193
  %v4462 = vadd.f32 %v3814, %v4192
  %v4463 = vadd.f32 %v3815, %v4196
  %v4464 = vadd.f32 %v3816, %v4198
  %v4465 = vadd.f32 %v3817, %v4200
  %v4466 = vadd.f32 %v3818, %v4199
  %v4467 = vadd.f32 %v3819, %v4203
  %v4468 = vadd.f32 %v3820, %v4205
  %v4469 = vadd.f32 %v3821, %v4207
  %v4470 = vadd.f32 %v3822, %v4206
  %v4471 = vadd.f32 %v3823, %v4210
  %v4472 = vadd.f32 %v3824, %v4212
  %v4473 = vadd.f32 %v3825, %v4214
  %v4474 = vadd.f32 %v3826, %v4213
  %v4475 = vadd.f32 %v3827, %v4217
  %v4476 = vadd.f32 %v3828, %v4219
  %v4477 = vadd.f32 %v3829, %v4221
  %v4478 = vadd.f32 %v3830, %v4220
  %v4479 = vadd.f32 %v3831, %v4224
  %v4480 = vadd.f32 %v3832, %v4226
  %v4481 = vadd.f32 %v3833, %v4228
  %v4482 = vadd.f32 %v3834, %v4227
  %v4483 = vadd.f32 %v3835, %v4231
  %v4484 = vadd.f32 %v3836, %v4233
  %v4485 = vadd.f32 %v3837, %v4235
  %v4486 = vadd.f32 %v3838, %v4234
  %v4487 = vadd.f32 %v3839, %v4238
  %v4488 = vadd.f32 %v3840, %v4240
  %v4489 = vadd.f32 %v3841, %v4242
  %v4490 = vadd.f32 %v3842, %v4241
  %v4491 = vadd.f32 %v3843, %v4245
  %v4492 = vadd.f32 %v3844, %v4247
  %v4493 = vadd.f32 %v3845, %v4249
  %v4494 = vadd.f32 %v3846, %v4248
  %v4495 = vadd.f32 %v3847, %v4252
  %v4496 = vadd.f32 %v3848, %v4254
  %v4497 = vadd.f32 %v3849, %v4256
  %v4498 = vadd.f32 %v3850, %v4255
  %v4499 = vadd.f32 %v3851, %v4259
  %v4500 = vadd.f32 %v3852, %v4261
  %v4501 = vadd.f32 %v3853, %v4263
  %v4502 = vadd.f32 %v3854, %v4262
  %v4503 = vadd.f32 %v3855, %v4266
  %v4504 = vadd.f32 %v3856, %v4268
  %v4505 = vadd.f32 %v3857, %v4270
  %v4506 = vadd.f32 %v3858, %v4269
  %v4507 = vadd.f32 %v3859, %v4273
  %v4508 = vadd.f32 %v3860, %v4275
  %v4509 = vadd.f32 %v3861, %v4277
  %v4510 = vadd.f32 %v3862, %v4276
  %v4511 = vadd.f32 %v3863, %v4280
  %v4512 = vadd.f32 %v3864, %v4282
  %v4513 = vadd.f32 %v3865, %v4284
  %v4514 = vadd.f32 %v3866, %v4283
  %v4515 = vadd.f32 %v3867, %v4287
  %v4516 = vadd.f32 %v3868, %v4289
  %v4517 = vadd.f32 %v3869, %v4291
  %v4518 = vadd.f32 %v3870, %v4290
  %v4519 = vadd.f32 %v3871, %v4294
  %v4520 = vadd.f32 %v3872, %v4296
  %v4521 = vadd.f32 %v3873, %v4298
  %v4522 = vadd.f32 %v3874, %v4297
  %v4523 = vlaneseq
  %v4524 = vshrl.u32 %v4523, 7
  %v4525 = vsub.s32 2, %v4524
  %v4526 = vrot.slane %v596, %v4525
  %v4527 = vmul.f32 %v482, %v4526
  %v4528 = vmul.f32 %v483, %v4526
  %v4529 = vmul.f32 %v484, %v4526
  %v4530 = vmul.f32 %v485, %v4526
  %v4531 = vmul.f32 %v486, %v4526
  %v4532 = vmul.f32 %v487, %v4526
  %v4533 = vmul.f32 %v488, %v4526
  %v4534 = vmul.f32 %v489, %v4526
  %v4535 = vmul.f32 %v490, %v4526
  %v4536 = vmul.f32 %v491, %v4526
  %v4537 = vmul.f32 %v492, %v4526
  %v4538 = vmul.f32 %v493, %v4526
  %v4539 = vmul.f32 %v494, %v4526
  %v4540 = vmul.f32 %v495, %v4526
  %v4541 = vmul.f32 %v496, %v4526
  %v4542 = vmul.f32 %v497, %v4526
  %v4543 = vmul.f32 %v498, %v4526
  %v4544 = vmul.f32 %v499, %v4526
  %v4545 = vmul.f32 %v500, %v4526
  %v4546 = vmul.f32 %v501, %v4526
  %v4547 = vmul.f32 %v502, %v4526
  %v4548 = vmul.f32 %v503, %v4526
  %v4549 = vmul.f32 %v504, %v4526
  %v4550 = vmul.f32 %v505, %v4526
  %v4551 = vmul.f32 %v506, %v4526
  %v4552 = vmul.f32 %v507, %v4526
  %v4553 = vmul.f32 %v508, %v4526
  %v4554 = vmul.f32 %v509, %v4526
  %v4555 = vmul.f32 %v510, %v4526
  %v4556 = vmul.f32 %v511, %v4526
  %v4557 = vmul.f32 %v512, %v4526
  %v4558 = vmul.f32 %v513, %v4526
  %v4559 = vmul.f32 %v514, %v4526
  %v4560 = vmul.f32 %v515, %v4526
  %v4561 = vmul.f32 %v516, %v4526
  %v4562 = vmul.f32 %v517, %v4526
  %v4563 = vmul.f32 %v518, %v4526
  %v4564 = vmul.f32 %v519, %v4526
  %v4565 = vmul.f32 %v520, %v4526
  %v4566 = vmul.f32 %v521, %v4526
  %v4567 = vmul.f32 %v522, %v4526
  %v4568 = vmul.f32 %v523, %v4526
  %v4569 = vmul.f32 %v524, %v4526
  %v4570 = vmul.f32 %v525, %v4526
  %v4571 = vmul.f32 %v526, %v4526
  %v4572 = vmul.f32 %v527, %v4526
  %v4573 = vmul.f32 %v528, %v4526
  %v4574 = vmul.f32 %v529, %v4526
  %v4575 = vmul.f32 %v530, %v4526
  %v4576 = vmul.f32 %v531, %v4526
  %v4577 = vmul.f32 %v532, %v4526
  %v4578 = vmul.f32 %v533, %v4526
  %v4579 = vmul.f32 %v534, %v4526
  %v4580 = vmul.f32 %v535, %v4526
  %v4581 = vmul.f32 %v536, %v4526
  %v4582 = vmul.f32 %v537, %v4526
  %v4583 = vmul.f32 %v538, %v4526
  %v4584 = vmul.f32 %v539, %v4526
  %v4585 = vmul.f32 %v540, %v4526
  %v4586 = vmul.f32 %v541, %v4526
  %v4587 = vmul.f32 %v542, %v4526
  %v4588 = vmul.f32 %v543, %v4526
  %v4589 = vmul.f32 %v544, %v4526
  %v4590 = vmul.f32 %v545, %v4526
  %v4591 = vmul.f32 %v546, %v4526
  %v4592 = vmul.f32 %v547, %v4526
  %v4593 = vmul.f32 %v548, %v4526
  %v4594 = vmul.f32 %v549, %v4526
  %v4595 = vmul.f32 %v550, %v4526
  %v4596 = vmul.f32 %v551, %v4526
  %v4597 = vmul.f32 %v552, %v4526
  %v4598 = vmul.f32 %v553, %v4526
  %v4599 = vmul.f32 %v554, %v4526
  %v4600 = vmul.f32 %v555, %v4526
  %v4601 = vmul.f32 %v556, %v4526
  %v4602 = vmul.f32 %v557, %v4526
  %v4603 = vmul.f32 %v558, %v4526
  %v4604 = vmul.f32 %v559, %v4526
  %v4605 = vmul.f32 %v560, %v4526
  %v4606 = vmul.f32 %v561, %v4526
  %v4607 = vmul.f32 %v562, %v4526
  %v4608 = vmul.f32 %v563, %v4526
  %v4609 = vmul.f32 %v564, %v4526
  %v4610 = vmul.f32 %v565, %v4526
  %v4611 = vmul.f32 %v566, %v4526
  %v4612 = vmul.f32 %v567, %v4526
  %v4613 = vmul.f32 %v568, %v4526
  %v4614 = vmul.f32 %v569, %v4526
  %v4615 = vmul.f32 %v570, %v4526
  %v4616 = vmul.f32 %v571, %v4526
  %v4617 = vmul.f32 %v572, %v4526
  %v4618 = vmul.f32 %v573, %v4526
  %v4619 = vmul.f32 %v574, %v4526
  %v4620 = vmul.f32 %v575, %v4526
  %v4621 = vmul.f32 %v576, %v4526
  %v4622 = vmul.f32 %v577, %v4526
  %v4623 = vmul.f32 %v578, %v4526
  %v4624 = vmul.f32 %v579, %v4526
  %v4625 = vmul.f32 %v580, %v4526
  %v4626 = vmul.f32 %v581, %v4526
  %v4627 = vmul.f32 %v582, %v4526
  %v4628 = vmul.f32 %v583, %v4526
  %v4629 = vmul.f32 %v584, %v4526
  %v4630 = vmul.f32 %v585, %v4526
  %v4631 = vmul.f32 %v586, %v4526
  %v4632 = vmul.f32 %v587, %v4526
  %v4633 = vmul.f32 %v588, %v4526
  %v4634 = vmul.f32 %v589, %v4526
  %v4635 = vmul.f32 %v590, %v4526
  %v4636 = vmul.f32 %v591, %v4526
  %v4637 = vmul.f32 %v592, %v4526
  %v4638 = vmul.f32 %v593, %v4526
  %v4751 = vrot.slane %v4527, 2
  %v4752 = vrot.slane %v4528, 2
  %v4753 = vsel %vm1702, %v4751, %v4752
  %v4754 = vrot.slane %v4529, 2
  %v4755 = vsel %vm1702, %v4752, %v4754
  %v4756 = vrot.slane %v4530, 2
  %v4757 = vsel %vm1702, %v4754, %v4756
  %v4758 = vrot.slane %v4531, 2
  %v4759 = vrot.slane %v4532, 2
  %v4760 = vsel %vm1702, %v4758, %v4759
  %v4761 = vrot.slane %v4533, 2
  %v4762 = vsel %vm1702, %v4759, %v4761
  %v4763 = vrot.slane %v4534, 2
  %v4764 = vsel %vm1702, %v4761, %v4763
  %v4765 = vrot.slane %v4535, 2
  %v4766 = vrot.slane %v4536, 2
  %v4767 = vsel %vm1702, %v4765, %v4766
  %v4768 = vrot.slane %v4537, 2
  %v4769 = vsel %vm1702, %v4766, %v4768
  %v4770 = vrot.slane %v4538, 2
  %v4771 = vsel %vm1702, %v4768, %v4770
  %v4772 = vrot.slane %v4539, 2
  %v4773 = vrot.slane %v4540, 2
  %v4774 = vsel %vm1702, %v4772, %v4773
  %v4775 = vrot.slane %v4541, 2
  %v4776 = vsel %vm1702, %v4773, %v4775
  %v4777 = vrot.slane %v4542, 2
  %v4778 = vsel %vm1702, %v4775, %v4777
  %v4779 = vrot.slane %v4543, 2
  %v4780 = vrot.slane %v4544, 2
  %v4781 = vsel %vm1702, %v4779, %v4780
  %v4782 = vrot.slane %v4545, 2
  %v4783 = vsel %vm1702, %v4780, %v4782
  %v4784 = vrot.slane %v4546, 2
  %v4785 = vsel %vm1702, %v4782, %v4784
  %v4786 = vrot.slane %v4547, 2
  %v4787 = vrot.slane %v4548, 2
  %v4788 = vsel %vm1702, %v4786, %v4787
  %v4789 = vrot.slane %v4549, 2
  %v4790 = vsel %vm1702, %v4787, %v4789
  %v4791 = vrot.slane %v4550, 2
  %v4792 = vsel %vm1702, %v4789, %v4791
  %v4793 = vrot.slane %v4551, 2
  %v4794 = vrot.slane %v4552, 2
  %v4795 = vsel %vm1702, %v4793, %v4794
  %v4796 = vrot.slane %v4553, 2
  %v4797 = vsel %vm1702, %v4794, %v4796
  %v4798 = vrot.slane %v4554, 2
  %v4799 = vsel %vm1702, %v4796, %v4798
  %v4800 = vrot.slane %v4555, 2
  %v4801 = vrot.slane %v4556, 2
  %v4802 = vsel %vm1702, %v4800, %v4801
  %v4803 = vrot.slane %v4557, 2
  %v4804 = vsel %vm1702, %v4801, %v4803
  %v4805 = vrot.slane %v4558, 2
  %v4806 = vsel %vm1702, %v4803, %v4805
  %v4807 = vrot.slane %v4559, 2
  %v4808 = vrot.slane %v4560, 2
  %v4809 = vsel %vm1702, %v4807, %v4808
  %v4810 = vrot.slane %v4561, 2
  %v4811 = vsel %vm1702, %v4808, %v4810
  %v4812 = vrot.slane %v4562, 2
  %v4813 = vsel %vm1702, %v4810, %v4812
  %v4814 = vrot.slane %v4563, 2
  %v4815 = vrot.slane %v4564, 2
  %v4816 = vsel %vm1702, %v4814, %v4815
  %v4817 = vrot.slane %v4565, 2
  %v4818 = vsel %vm1702, %v4815, %v4817
  %v4819 = vrot.slane %v4566, 2
  %v4820 = vsel %vm1702, %v4817, %v4819
  %v4821 = vrot.slane %v4567, 2
  %v4822 = vrot.slane %v4568, 2
  %v4823 = vsel %vm1702, %v4821, %v4822
  %v4824 = vrot.slane %v4569, 2
  %v4825 = vsel %vm1702, %v4822, %v4824
  %v4826 = vrot.slane %v4570, 2
  %v4827 = vsel %vm1702, %v4824, %v4826
  %v4828 = vrot.slane %v4571, 2
  %v4829 = vrot.slane %v4572, 2
  %v4830 = vsel %vm1702, %v4828, %v4829
  %v4831 = vrot.slane %v4573, 2
  %v4832 = vsel %vm1702, %v4829, %v4831
  %v4833 = vrot.slane %v4574, 2
  %v4834 = vsel %vm1702, %v4831, %v4833
  %v4835 = vrot.slane %v4575, 2
  %v4836 = vrot.slane %v4576, 2
  %v4837 = vsel %vm1702, %v4835, %v4836
  %v4838 = vrot.slane %v4577, 2
  %v4839 = vsel %vm1702, %v4836, %v4838
  %v4840 = vrot.slane %v4578, 2
  %v4841 = vsel %vm1702, %v4838, %v4840
  %v4842 = vrot.slane %v4579, 2
  %v4843 = vrot.slane %v4580, 2
  %v4844 = vsel %vm1702, %v4842, %v4843
  %v4845 = vrot.slane %v4581, 2
  %v4846 = vsel %vm1702, %v4843, %v4845
  %v4847 = vrot.slane %v4582, 2
  %v4848 = vsel %vm1702, %v4845, %v4847
  %v4849 = vrot.slane %v4583, 2
  %v4850 = vrot.slane %v4584, 2
  %v4851 = vsel %vm1702, %v4849, %v4850
  %v4852 = vrot.slane %v4585, 2
  %v4853 = vsel %vm1702, %v4850, %v4852
  %v4854 = vrot.slane %v4586, 2
  %v4855 = vsel %vm1702, %v4852, %v4854
  %v4856 = vrot.slane %v4587, 2
  %v4857 = vrot.slane %v4588, 2
  %v4858 = vsel %vm1702, %v4856, %v4857
  %v4859 = vrot.slane %v4589, 2
  %v4860 = vsel %vm1702, %v4857, %v4859
  %v4861 = vrot.slane %v4590, 2
  %v4862 = vsel %vm1702, %v4859, %v4861
  %v4863 = vrot.slane %v4591, 2
  %v4864 = vrot.slane %v4592, 2
  %v4865 = vsel %vm1702, %v4863, %v4864
  %v4866 = vrot.slane %v4593, 2
  %v4867 = vsel %vm1702, %v4864, %v4866
  %v4868 = vrot.slane %v4594, 2
  %v4869 = vsel %vm1702, %v4866, %v4868
  %v4870 = vrot.slane %v4595, 2
  %v4871 = vrot.slane %v4596, 2
  %v4872 = vsel %vm1702, %v4870, %v4871
  %v4873 = vrot.slane %v4597, 2
  %v4874 = vsel %vm1702, %v4871, %v4873
  %v4875 = vrot.slane %v4598, 2
  %v4876 = vsel %vm1702, %v4873, %v4875
  %v4877 = vrot.slane %v4599, 2
  %v4878 = vrot.slane %v4600, 2
  %v4879 = vsel %vm1702, %v4877, %v4878
  %v4880 = vrot.slane %v4601, 2
  %v4881 = vsel %vm1702, %v4878, %v4880
  %v4882 = vrot.slane %v4602, 2
  %v4883 = vsel %vm1702, %v4880, %v4882
  %v4884 = vrot.slane %v4603, 2
  %v4885 = vrot.slane %v4604, 2
  %v4886 = vsel %vm1702, %v4884, %v4885
  %v4887 = vrot.slane %v4605, 2
  %v4888 = vsel %vm1702, %v4885, %v4887
  %v4889 = vrot.slane %v4606, 2
  %v4890 = vsel %vm1702, %v4887, %v4889
  %v4891 = vrot.slane %v4607, 2
  %v4892 = vrot.slane %v4608, 2
  %v4893 = vsel %vm1702, %v4891, %v4892
  %v4894 = vrot.slane %v4609, 2
  %v4895 = vsel %vm1702, %v4892, %v4894
  %v4896 = vrot.slane %v4610, 2
  %v4897 = vsel %vm1702, %v4894, %v4896
  %v4898 = vrot.slane %v4611, 2
  %v4899 = vrot.slane %v4612, 2
  %v4900 = vsel %vm1702, %v4898, %v4899
  %v4901 = vrot.slane %v4613, 2
  %v4902 = vsel %vm1702, %v4899, %v4901
  %v4903 = vrot.slane %v4614, 2
  %v4904 = vsel %vm1702, %v4901, %v4903
  %v4905 = vrot.slane %v4615, 2
  %v4906 = vrot.slane %v4616, 2
  %v4907 = vsel %vm1702, %v4905, %v4906
  %v4908 = vrot.slane %v4617, 2
  %v4909 = vsel %vm1702, %v4906, %v4908
  %v4910 = vrot.slane %v4618, 2
  %v4911 = vsel %vm1702, %v4908, %v4910
  %v4912 = vrot.slane %v4619, 2
  %v4913 = vrot.slane %v4620, 2
  %v4914 = vsel %vm1702, %v4912, %v4913
  %v4915 = vrot.slane %v4621, 2
  %v4916 = vsel %vm1702, %v4913, %v4915
  %v4917 = vrot.slane %v4622, 2
  %v4918 = vsel %vm1702, %v4915, %v4917
  %v4919 = vrot.slane %v4623, 2
  %v4920 = vrot.slane %v4624, 2
  %v4921 = vsel %vm1702, %v4919, %v4920
  %v4922 = vrot.slane %v4625, 2
  %v4923 = vsel %vm1702, %v4920, %v4922
  %v4924 = vrot.slane %v4626, 2
  %v4925 = vsel %vm1702, %v4922, %v4924
  %v4926 = vrot.slane %v4627, 2
  %v4927 = vrot.slane %v4628, 2
  %v4928 = vsel %vm1702, %v4926, %v4927
  %v4929 = vrot.slane %v4629, 2
  %v4930 = vsel %vm1702, %v4927, %v4929
  %v4931 = vrot.slane %v4630, 2
  %v4932 = vsel %vm1702, %v4929, %v4931
  %v4933 = vrot.slane %v4631, 2
  %v4934 = vrot.slane %v4632, 2
  %v4935 = vsel %vm1702, %v4933, %v4934
  %v4936 = vrot.slane %v4633, 2
  %v4937 = vsel %vm1702, %v4934, %v4936
  %v4938 = vrot.slane %v4634, 2
  %v4939 = vsel %vm1702, %v4936, %v4938
  %v4940 = vrot.slane %v4635, 2
  %v4941 = vrot.slane %v4636, 2
  %v4942 = vsel %vm1702, %v4940, %v4941
  %v4943 = vrot.slane %v4637, 2
  %v4944 = vsel %vm1702, %v4941, %v4943
  %v4945 = vrot.slane %v4638, 2
  %v4946 = vsel %vm1702, %v4943, %v4945
  %v5059 = vadd.f32 %v4411, %v4753
  %v5060 = vadd.f32 %v4412, %v4755
  %v5061 = vadd.f32 %v4413, %v4757
  %v5062 = vadd.f32 %v4414, %v4756
  %v5063 = vadd.f32 %v4415, %v4760
  %v5064 = vadd.f32 %v4416, %v4762
  %v5065 = vadd.f32 %v4417, %v4764
  %v5066 = vadd.f32 %v4418, %v4763
  %v5067 = vadd.f32 %v4419, %v4767
  %v5068 = vadd.f32 %v4420, %v4769
  %v5069 = vadd.f32 %v4421, %v4771
  %v5070 = vadd.f32 %v4422, %v4770
  %v5071 = vadd.f32 %v4423, %v4774
  %v5072 = vadd.f32 %v4424, %v4776
  %v5073 = vadd.f32 %v4425, %v4778
  %v5074 = vadd.f32 %v4426, %v4777
  %v5075 = vadd.f32 %v4427, %v4781
  %v5076 = vadd.f32 %v4428, %v4783
  %v5077 = vadd.f32 %v4429, %v4785
  %v5078 = vadd.f32 %v4430, %v4784
  %v5079 = vadd.f32 %v4431, %v4788
  %v5080 = vadd.f32 %v4432, %v4790
  %v5081 = vadd.f32 %v4433, %v4792
  %v5082 = vadd.f32 %v4434, %v4791
  %v5083 = vadd.f32 %v4435, %v4795
  %v5084 = vadd.f32 %v4436, %v4797
  %v5085 = vadd.f32 %v4437, %v4799
  %v5086 = vadd.f32 %v4438, %v4798
  %v5087 = vadd.f32 %v4439, %v4802
  %v5088 = vadd.f32 %v4440, %v4804
  %v5089 = vadd.f32 %v4441, %v4806
  %v5090 = vadd.f32 %v4442, %v4805
  %v5091 = vadd.f32 %v4443, %v4809
  %v5092 = vadd.f32 %v4444, %v4811
  %v5093 = vadd.f32 %v4445, %v4813
  %v5094 = vadd.f32 %v4446, %v4812
  %v5095 = vadd.f32 %v4447, %v4816
  %v5096 = vadd.f32 %v4448, %v4818
  %v5097 = vadd.f32 %v4449, %v4820
  %v5098 = vadd.f32 %v4450, %v4819
  %v5099 = vadd.f32 %v4451, %v4823
  %v5100 = vadd.f32 %v4452, %v4825
  %v5101 = vadd.f32 %v4453, %v4827
  %v5102 = vadd.f32 %v4454, %v4826
  %v5103 = vadd.f32 %v4455, %v4830
  %v5104 = vadd.f32 %v4456, %v4832
  %v5105 = vadd.f32 %v4457, %v4834
  %v5106 = vadd.f32 %v4458, %v4833
  %v5107 = vadd.f32 %v4459, %v4837
  %v5108 = vadd.f32 %v4460, %v4839
  %v5109 = vadd.f32 %v4461, %v4841
  %v5110 = vadd.f32 %v4462, %v4840
  %v5111 = vadd.f32 %v4463, %v4844
  %v5112 = vadd.f32 %v4464, %v4846
  %v5113 = vadd.f32 %v4465, %v4848
  %v5114 = vadd.f32 %v4466, %v4847
  %v5115 = vadd.f32 %v4467, %v4851
  %v5116 = vadd.f32 %v4468, %v4853
  %v5117 = vadd.f32 %v4469, %v4855
  %v5118 = vadd.f32 %v4470, %v4854
  %v5119 = vadd.f32 %v4471, %v4858
  %v5120 = vadd.f32 %v4472, %v4860
  %v5121 = vadd.f32 %v4473, %v4862
  %v5122 = vadd.f32 %v4474, %v4861
  %v5123 = vadd.f32 %v4475, %v4865
  %v5124 = vadd.f32 %v4476, %v4867
  %v5125 = vadd.f32 %v4477, %v4869
  %v5126 = vadd.f32 %v4478, %v4868
  %v5127 = vadd.f32 %v4479, %v4872
  %v5128 = vadd.f32 %v4480, %v4874
  %v5129 = vadd.f32 %v4481, %v4876
  %v5130 = vadd.f32 %v4482, %v4875
  %v5131 = vadd.f32 %v4483, %v4879
  %v5132 = vadd.f32 %v4484, %v4881
  %v5133 = vadd.f32 %v4485, %v4883
  %v5134 = vadd.f32 %v4486, %v4882
  %v5135 = vadd.f32 %v4487, %v4886
  %v5136 = vadd.f32 %v4488, %v4888
  %v5137 = vadd.f32 %v4489, %v4890
  %v5138 = vadd.f32 %v4490, %v4889
  %v5139 = vadd.f32 %v4491, %v4893
  %v5140 = vadd.f32 %v4492, %v4895
  %v5141 = vadd.f32 %v4493, %v4897
  %v5142 = vadd.f32 %v4494, %v4896
  %v5143 = vadd.f32 %v4495, %v4900
  %v5144 = vadd.f32 %v4496, %v4902
  %v5145 = vadd.f32 %v4497, %v4904
  %v5146 = vadd.f32 %v4498, %v4903
  %v5147 = vadd.f32 %v4499, %v4907
  %v5148 = vadd.f32 %v4500, %v4909
  %v5149 = vadd.f32 %v4501, %v4911
  %v5150 = vadd.f32 %v4502, %v4910
  %v5151 = vadd.f32 %v4503, %v4914
  %v5152 = vadd.f32 %v4504, %v4916
  %v5153 = vadd.f32 %v4505, %v4918
  %v5154 = vadd.f32 %v4506, %v4917
  %v5155 = vadd.f32 %v4507, %v4921
  %v5156 = vadd.f32 %v4508, %v4923
  %v5157 = vadd.f32 %v4509, %v4925
  %v5158 = vadd.f32 %v4510, %v4924
  %v5159 = vadd.f32 %v4511, %v4928
  %v5160 = vadd.f32 %v4512, %v4930
  %v5161 = vadd.f32 %v4513, %v4932
  %v5162 = vadd.f32 %v4514, %v4931
  %v5163 = vadd.f32 %v4515, %v4935
  %v5164 = vadd.f32 %v4516, %v4937
  %v5165 = vadd.f32 %v4517, %v4939
  %v5166 = vadd.f32 %v4518, %v4938
  %v5167 = vadd.f32 %v4519, %v4942
  %v5168 = vadd.f32 %v4520, %v4944
  %v5169 = vadd.f32 %v4521, %v4946
  %v5170 = vadd.f32 %v4522, %v4945
  %v5171 = vadd.f32 %v5059, %v5060
  %v5172 = vadd.f32 %v5171, %v5061
  %vm5173 = vcmask 1043456
  %v5174 = vsel %vm5173, %v5062, 0.0
  %v5175 = vadd.f32 %v5172, %v5174
  %v5176 = vadd.f32 %v5175, %v5063
  %v5177 = vadd.f32 %v5176, %v5064
  %v5178 = vadd.f32 %v5177, %v5065
  %v5179 = vsel %vm5173, %v5066, 0.0
  %v5180 = vadd.f32 %v5178, %v5179
  %v5181 = vadd.f32 %v5180, %v5067
  %v5182 = vadd.f32 %v5181, %v5068
  %v5183 = vadd.f32 %v5182, %v5069
  %v5184 = vsel %vm5173, %v5070, 0.0
  %v5185 = vadd.f32 %v5183, %v5184
  %v5186 = vadd.f32 %v5185, %v5071
  %v5187 = vadd.f32 %v5186, %v5072
  %v5188 = vadd.f32 %v5187, %v5073
  %v5189 = vsel %vm5173, %v5074, 0.0
  %v5190 = vadd.f32 %v5188, %v5189
  %v5191 = vadd.f32 %v5190, %v5075
  %v5192 = vadd.f32 %v5191, %v5076
  %v5193 = vadd.f32 %v5192, %v5077
  %v5194 = vsel %vm5173, %v5078, 0.0
  %v5195 = vadd.f32 %v5193, %v5194
  %v5196 = vadd.f32 %v5195, %v5079
  %v5197 = vadd.f32 %v5196, %v5080
  %v5198 = vadd.f32 %v5197, %v5081
  %v5199 = vsel %vm5173, %v5082, 0.0
  %v5200 = vadd.f32 %v5198, %v5199
  %v5201 = vadd.f32 %v5200, %v5083
  %v5202 = vadd.f32 %v5201, %v5084
  %v5203 = vadd.f32 %v5202, %v5085
  %v5204 = vsel %vm5173, %v5086, 0.0
  %v5205 = vadd.f32 %v5203, %v5204
  %v5206 = vadd.f32 %v5205, %v5087
  %v5207 = vadd.f32 %v5206, %v5088
  %v5208 = vadd.f32 %v5207, %v5089
  %v5209 = vsel %vm5173, %v5090, 0.0
  %v5210 = vadd.f32 %v5208, %v5209
  %v5211 = vadd.f32 %v5210, %v5091
  %v5212 = vadd.f32 %v5211, %v5092
  %v5213 = vadd.f32 %v5212, %v5093
  %v5214 = vsel %vm5173, %v5094, 0.0
  %v5215 = vadd.f32 %v5213, %v5214
  %v5216 = vadd.f32 %v5215, %v5095
  %v5217 = vadd.f32 %v5216, %v5096
  %v5218 = vadd.f32 %v5217, %v5097
  %v5219 = vsel %vm5173, %v5098, 0.0
  %v5220 = vadd.f32 %v5218, %v5219
  %v5221 = vadd.f32 %v5220, %v5099
  %v5222 = vadd.f32 %v5221, %v5100
  %v5223 = vadd.f32 %v5222, %v5101
  %v5224 = vsel %vm5173, %v5102, 0.0
  %v5225 = vadd.f32 %v5223, %v5224
  %v5226 = vadd.f32 %v5225, %v5103
  %v5227 = vadd.f32 %v5226, %v5104
  %v5228 = vadd.f32 %v5227, %v5105
  %v5229 = vsel %vm5173, %v5106, 0.0
  %v5230 = vadd.f32 %v5228, %v5229
  %v5231 = vadd.f32 %v5230, %v5107
  %v5232 = vadd.f32 %v5231, %v5108
  %v5233 = vadd.f32 %v5232, %v5109
  %v5234 = vsel %vm5173, %v5110, 0.0
  %v5235 = vadd.f32 %v5233, %v5234
  %v5236 = vadd.f32 %v5235, %v5111
  %v5237 = vadd.f32 %v5236, %v5112
  %v5238 = vadd.f32 %v5237, %v5113
  %v5239 = vsel %vm5173, %v5114, 0.0
  %v5240 = vadd.f32 %v5238, %v5239
  %v5241 = vadd.f32 %v5240, %v5115
  %v5242 = vadd.f32 %v5241, %v5116
  %v5243 = vadd.f32 %v5242, %v5117
  %v5244 = vsel %vm5173, %v5118, 0.0
  %v5245 = vadd.f32 %v5243, %v5244
  %v5246 = vadd.f32 %v5245, %v5119
  %v5247 = vadd.f32 %v5246, %v5120
  %v5248 = vadd.f32 %v5247, %v5121
  %v5249 = vsel %vm5173, %v5122, 0.0
  %v5250 = vadd.f32 %v5248, %v5249
  %v5251 = vadd.f32 %v5250, %v5123
  %v5252 = vadd.f32 %v5251, %v5124
  %v5253 = vadd.f32 %v5252, %v5125
  %v5254 = vsel %vm5173, %v5126, 0.0
  %v5255 = vadd.f32 %v5253, %v5254
  %v5256 = vadd.f32 %v5255, %v5127
  %v5257 = vadd.f32 %v5256, %v5128
  %v5258 = vadd.f32 %v5257, %v5129
  %v5259 = vsel %vm5173, %v5130, 0.0
  %v5260 = vadd.f32 %v5258, %v5259
  %v5261 = vadd.f32 %v5260, %v5131
  %v5262 = vadd.f32 %v5261, %v5132
  %v5263 = vadd.f32 %v5262, %v5133
  %v5264 = vsel %vm5173, %v5134, 0.0
  %v5265 = vadd.f32 %v5263, %v5264
  %v5266 = vadd.f32 %v5265, %v5135
  %v5267 = vadd.f32 %v5266, %v5136
  %v5268 = vadd.f32 %v5267, %v5137
  %v5269 = vsel %vm5173, %v5138, 0.0
  %v5270 = vadd.f32 %v5268, %v5269
  %v5271 = vadd.f32 %v5270, %v5139
  %v5272 = vadd.f32 %v5271, %v5140
  %v5273 = vadd.f32 %v5272, %v5141
  %v5274 = vsel %vm5173, %v5142, 0.0
  %v5275 = vadd.f32 %v5273, %v5274
  %v5276 = vadd.f32 %v5275, %v5143
  %v5277 = vadd.f32 %v5276, %v5144
  %v5278 = vadd.f32 %v5277, %v5145
  %v5279 = vsel %vm5173, %v5146, 0.0
  %v5280 = vadd.f32 %v5278, %v5279
  %v5281 = vadd.f32 %v5280, %v5147
  %v5282 = vadd.f32 %v5281, %v5148
  %v5283 = vadd.f32 %v5282, %v5149
  %v5284 = vsel %vm5173, %v5150, 0.0
  %v5285 = vadd.f32 %v5283, %v5284
  %v5286 = vadd.f32 %v5285, %v5151
  %v5287 = vadd.f32 %v5286, %v5152
  %v5288 = vadd.f32 %v5287, %v5153
  %v5289 = vsel %vm5173, %v5154, 0.0
  %v5290 = vadd.f32 %v5288, %v5289
  %v5291 = vadd.f32 %v5290, %v5155
  %v5292 = vadd.f32 %v5291, %v5156
  %v5293 = vadd.f32 %v5292, %v5157
  %v5294 = vsel %vm5173, %v5158, 0.0
  %v5295 = vadd.f32 %v5293, %v5294
  %v5296 = vadd.f32 %v5295, %v5159
  %v5297 = vadd.f32 %v5296, %v5160
  %v5298 = vadd.f32 %v5297, %v5161
  %v5299 = vsel %vm5173, %v5162, 0.0
  %v5300 = vadd.f32 %v5298, %v5299
  %v5301 = vadd.f32 %v5300, %v5163
  %v5302 = vadd.f32 %v5301, %v5164
  %v5303 = vadd.f32 %v5302, %v5165
  %v5304 = vsel %vm5173, %v5166, 0.0
  %v5305 = vadd.f32 %v5303, %v5304
  %v5306 = vadd.f32 %v5305, %v5167
  %v5307 = vadd.f32 %v5306, %v5168
  %v5308 = vadd.f32 %v5307, %v5169
  %v5309 = vsel %vm5173, %v5170, 0.0
  %v5310 = vadd.f32 %v5308, %v5309
  %v5311 = vrot.slane %v5310, 4
  %v5312 = vadd.f32 %v5310, %v5311
  %v5313 = vrot.slane %v5312, 2
  %v5314 = vadd.f32 %v5312, %v5313
  %v5315 = vrot.slane %v5314, 1
  %v5316 = vadd.f32 %v5314, %v5315
  %v5317 = vmul.f32 %v5059, %v5059
  %v5318 = vmul.f32 %v5060, %v5060
  %v5319 = vmul.f32 %v5061, %v5061
  %v5320 = vmul.f32 %v5062, %v5062
  %v5321 = vmul.f32 %v5063, %v5063
  %v5322 = vmul.f32 %v5064, %v5064
  %v5323 = vmul.f32 %v5065, %v5065
  %v5324 = vmul.f32 %v5066, %v5066
  %v5325 = vmul.f32 %v5067, %v5067
  %v5326 = vmul.f32 %v5068, %v5068
  %v5327 = vmul.f32 %v5069, %v5069
  %v5328 = vmul.f32 %v5070, %v5070
  %v5329 = vmul.f32 %v5071, %v5071
  %v5330 = vmul.f32 %v5072, %v5072
  %v5331 = vmul.f32 %v5073, %v5073
  %v5332 = vmul.f32 %v5074, %v5074
  %v5333 = vmul.f32 %v5075, %v5075
  %v5334 = vmul.f32 %v5076, %v5076
  %v5335 = vmul.f32 %v5077, %v5077
  %v5336 = vmul.f32 %v5078, %v5078
  %v5337 = vmul.f32 %v5079, %v5079
  %v5338 = vmul.f32 %v5080, %v5080
  %v5339 = vmul.f32 %v5081, %v5081
  %v5340 = vmul.f32 %v5082, %v5082
  %v5341 = vmul.f32 %v5083, %v5083
  %v5342 = vmul.f32 %v5084, %v5084
  %v5343 = vmul.f32 %v5085, %v5085
  %v5344 = vmul.f32 %v5086, %v5086
  %v5345 = vmul.f32 %v5087, %v5087
  %v5346 = vmul.f32 %v5088, %v5088
  %v5347 = vmul.f32 %v5089, %v5089
  %v5348 = vmul.f32 %v5090, %v5090
  %v5349 = vmul.f32 %v5091, %v5091
  %v5350 = vmul.f32 %v5092, %v5092
  %v5351 = vmul.f32 %v5093, %v5093
  %v5352 = vmul.f32 %v5094, %v5094
  %v5353 = vmul.f32 %v5095, %v5095
  %v5354 = vmul.f32 %v5096, %v5096
  %v5355 = vmul.f32 %v5097, %v5097
  %v5356 = vmul.f32 %v5098, %v5098
  %v5357 = vmul.f32 %v5099, %v5099
  %v5358 = vmul.f32 %v5100, %v5100
  %v5359 = vmul.f32 %v5101, %v5101
  %v5360 = vmul.f32 %v5102, %v5102
  %v5361 = vmul.f32 %v5103, %v5103
  %v5362 = vmul.f32 %v5104, %v5104
  %v5363 = vmul.f32 %v5105, %v5105
  %v5364 = vmul.f32 %v5106, %v5106
  %v5365 = vmul.f32 %v5107, %v5107
  %v5366 = vmul.f32 %v5108, %v5108
  %v5367 = vmul.f32 %v5109, %v5109
  %v5368 = vmul.f32 %v5110, %v5110
  %v5369 = vmul.f32 %v5111, %v5111
  %v5370 = vmul.f32 %v5112, %v5112
  %v5371 = vmul.f32 %v5113, %v5113
  %v5372 = vmul.f32 %v5114, %v5114
  %v5373 = vmul.f32 %v5115, %v5115
  %v5374 = vmul.f32 %v5116, %v5116
  %v5375 = vmul.f32 %v5117, %v5117
  %v5376 = vmul.f32 %v5118, %v5118
  %v5377 = vmul.f32 %v5119, %v5119
  %v5378 = vmul.f32 %v5120, %v5120
  %v5379 = vmul.f32 %v5121, %v5121
  %v5380 = vmul.f32 %v5122, %v5122
  %v5381 = vmul.f32 %v5123, %v5123
  %v5382 = vmul.f32 %v5124, %v5124
  %v5383 = vmul.f32 %v5125, %v5125
  %v5384 = vmul.f32 %v5126, %v5126
  %v5385 = vmul.f32 %v5127, %v5127
  %v5386 = vmul.f32 %v5128, %v5128
  %v5387 = vmul.f32 %v5129, %v5129
  %v5388 = vmul.f32 %v5130, %v5130
  %v5389 = vmul.f32 %v5131, %v5131
  %v5390 = vmul.f32 %v5132, %v5132
  %v5391 = vmul.f32 %v5133, %v5133
  %v5392 = vmul.f32 %v5134, %v5134
  %v5393 = vmul.f32 %v5135, %v5135
  %v5394 = vmul.f32 %v5136, %v5136
  %v5395 = vmul.f32 %v5137, %v5137
  %v5396 = vmul.f32 %v5138, %v5138
  %v5397 = vmul.f32 %v5139, %v5139
  %v5398 = vmul.f32 %v5140, %v5140
  %v5399 = vmul.f32 %v5141, %v5141
  %v5400 = vmul.f32 %v5142, %v5142
  %v5401 = vmul.f32 %v5143, %v5143
  %v5402 = vmul.f32 %v5144, %v5144
  %v5403 = vmul.f32 %v5145, %v5145
  %v5404 = vmul.f32 %v5146, %v5146
  %v5405 = vmul.f32 %v5147, %v5147
  %v5406 = vmul.f32 %v5148, %v5148
  %v5407 = vmul.f32 %v5149, %v5149
  %v5408 = vmul.f32 %v5150, %v5150
  %v5409 = vmul.f32 %v5151, %v5151
  %v5410 = vmul.f32 %v5152, %v5152
  %v5411 = vmul.f32 %v5153, %v5153
  %v5412 = vmul.f32 %v5154, %v5154
  %v5413 = vmul.f32 %v5155, %v5155
  %v5414 = vmul.f32 %v5156, %v5156
  %v5415 = vmul.f32 %v5157, %v5157
  %v5416 = vmul.f32 %v5158, %v5158
  %v5417 = vmul.f32 %v5159, %v5159
  %v5418 = vmul.f32 %v5160, %v5160
  %v5419 = vmul.f32 %v5161, %v5161
  %v5420 = vmul.f32 %v5162, %v5162
  %v5421 = vmul.f32 %v5163, %v5163
  %v5422 = vmul.f32 %v5164, %v5164
  %v5423 = vmul.f32 %v5165, %v5165
  %v5424 = vmul.f32 %v5166, %v5166
  %v5425 = vmul.f32 %v5167, %v5167
  %v5426 = vmul.f32 %v5168, %v5168
  %v5427 = vmul.f32 %v5169, %v5169
  %v5428 = vmul.f32 %v5170, %v5170
  %v5429 = vadd.f32 %v5317, %v5318
  %v5430 = vadd.f32 %v5429, %v5319
  %v5431 = vsel %vm5173, %v5320, 0.0
  %v5432 = vadd.f32 %v5430, %v5431
  %v5433 = vadd.f32 %v5432, %v5321
  %v5434 = vadd.f32 %v5433, %v5322
  %v5435 = vadd.f32 %v5434, %v5323
  %v5436 = vsel %vm5173, %v5324, 0.0
  %v5437 = vadd.f32 %v5435, %v5436
  %v5438 = vadd.f32 %v5437, %v5325
  %v5439 = vadd.f32 %v5438, %v5326
  %v5440 = vadd.f32 %v5439, %v5327
  %v5441 = vsel %vm5173, %v5328, 0.0
  %v5442 = vadd.f32 %v5440, %v5441
  %v5443 = vadd.f32 %v5442, %v5329
  %v5444 = vadd.f32 %v5443, %v5330
  %v5445 = vadd.f32 %v5444, %v5331
  %v5446 = vsel %vm5173, %v5332, 0.0
  %v5447 = vadd.f32 %v5445, %v5446
  %v5448 = vadd.f32 %v5447, %v5333
  %v5449 = vadd.f32 %v5448, %v5334
  %v5450 = vadd.f32 %v5449, %v5335
  %v5451 = vsel %vm5173, %v5336, 0.0
  %v5452 = vadd.f32 %v5450, %v5451
  %v5453 = vadd.f32 %v5452, %v5337
  %v5454 = vadd.f32 %v5453, %v5338
  %v5455 = vadd.f32 %v5454, %v5339
  %v5456 = vsel %vm5173, %v5340, 0.0
  %v5457 = vadd.f32 %v5455, %v5456
  %v5458 = vadd.f32 %v5457, %v5341
  %v5459 = vadd.f32 %v5458, %v5342
  %v5460 = vadd.f32 %v5459, %v5343
  %v5461 = vsel %vm5173, %v5344, 0.0
  %v5462 = vadd.f32 %v5460, %v5461
  %v5463 = vadd.f32 %v5462, %v5345
  %v5464 = vadd.f32 %v5463, %v5346
  %v5465 = vadd.f32 %v5464, %v5347
  %v5466 = vsel %vm5173, %v5348, 0.0
  %v5467 = vadd.f32 %v5465, %v5466
  %v5468 = vadd.f32 %v5467, %v5349
  %v5469 = vadd.f32 %v5468, %v5350
  %v5470 = vadd.f32 %v5469, %v5351
  %v5471 = vsel %vm5173, %v5352, 0.0
  %v5472 = vadd.f32 %v5470, %v5471
  %v5473 = vadd.f32 %v5472, %v5353
  %v5474 = vadd.f32 %v5473, %v5354
  %v5475 = vadd.f32 %v5474, %v5355
  %v5476 = vsel %vm5173, %v5356, 0.0
  %v5477 = vadd.f32 %v5475, %v5476
  %v5478 = vadd.f32 %v5477, %v5357
  %v5479 = vadd.f32 %v5478, %v5358
  %v5480 = vadd.f32 %v5479, %v5359
  %v5481 = vsel %vm5173, %v5360, 0.0
  %v5482 = vadd.f32 %v5480, %v5481
  %v5483 = vadd.f32 %v5482, %v5361
  %v5484 = vadd.f32 %v5483, %v5362
  %v5485 = vadd.f32 %v5484, %v5363
  %v5486 = vsel %vm5173, %v5364, 0.0
  %v5487 = vadd.f32 %v5485, %v5486
  %v5488 = vadd.f32 %v5487, %v5365
  %v5489 = vadd.f32 %v5488, %v5366
  %v5490 = vadd.f32 %v5489, %v5367
  %v5491 = vsel %vm5173, %v5368, 0.0
  %v5492 = vadd.f32 %v5490, %v5491
  %v5493 = vadd.f32 %v5492, %v5369
  %v5494 = vadd.f32 %v5493, %v5370
  %v5495 = vadd.f32 %v5494, %v5371
  %v5496 = vsel %vm5173, %v5372, 0.0
  %v5497 = vadd.f32 %v5495, %v5496
  %v5498 = vadd.f32 %v5497, %v5373
  %v5499 = vadd.f32 %v5498, %v5374
  %v5500 = vadd.f32 %v5499, %v5375
  %v5501 = vsel %vm5173, %v5376, 0.0
  %v5502 = vadd.f32 %v5500, %v5501
  %v5503 = vadd.f32 %v5502, %v5377
  %v5504 = vadd.f32 %v5503, %v5378
  %v5505 = vadd.f32 %v5504, %v5379
  %v5506 = vsel %vm5173, %v5380, 0.0
  %v5507 = vadd.f32 %v5505, %v5506
  %v5508 = vadd.f32 %v5507, %v5381
  %v5509 = vadd.f32 %v5508, %v5382
  %v5510 = vadd.f32 %v5509, %v5383
  %v5511 = vsel %vm5173, %v5384, 0.0
  %v5512 = vadd.f32 %v5510, %v5511
  %v5513 = vadd.f32 %v5512, %v5385
  %v5514 = vadd.f32 %v5513, %v5386
  %v5515 = vadd.f32 %v5514, %v5387
  %v5516 = vsel %vm5173, %v5388, 0.0
  %v5517 = vadd.f32 %v5515, %v5516
  %v5518 = vadd.f32 %v5517, %v5389
  %v5519 = vadd.f32 %v5518, %v5390
  %v5520 = vadd.f32 %v5519, %v5391
  %v5521 = vsel %vm5173, %v5392, 0.0
  %v5522 = vadd.f32 %v5520, %v5521
  %v5523 = vadd.f32 %v5522, %v5393
  %v5524 = vadd.f32 %v5523, %v5394
  %v5525 = vadd.f32 %v5524, %v5395
  %v5526 = vsel %vm5173, %v5396, 0.0
  %v5527 = vadd.f32 %v5525, %v5526
  %v5528 = vadd.f32 %v5527, %v5397
  %v5529 = vadd.f32 %v5528, %v5398
  %v5530 = vadd.f32 %v5529, %v5399
  %v5531 = vsel %vm5173, %v5400, 0.0
  %v5532 = vadd.f32 %v5530, %v5531
  %v5533 = vadd.f32 %v5532, %v5401
  %v5534 = vadd.f32 %v5533, %v5402
  %v5535 = vadd.f32 %v5534, %v5403
  %v5536 = vsel %vm5173, %v5404, 0.0
  %v5537 = vadd.f32 %v5535, %v5536
  %v5538 = vadd.f32 %v5537, %v5405
  %v5539 = vadd.f32 %v5538, %v5406
  %v5540 = vadd.f32 %v5539, %v5407
  %v5541 = vsel %vm5173, %v5408, 0.0
  %v5542 = vadd.f32 %v5540, %v5541
  %v5543 = vadd.f32 %v5542, %v5409
  %v5544 = vadd.f32 %v5543, %v5410
  %v5545 = vadd.f32 %v5544, %v5411
  %v5546 = vsel %vm5173, %v5412, 0.0
  %v5547 = vadd.f32 %v5545, %v5546
  %v5548 = vadd.f32 %v5547, %v5413
  %v5549 = vadd.f32 %v5548, %v5414
  %v5550 = vadd.f32 %v5549, %v5415
  %v5551 = vsel %vm5173, %v5416, 0.0
  %v5552 = vadd.f32 %v5550, %v5551
  %v5553 = vadd.f32 %v5552, %v5417
  %v5554 = vadd.f32 %v5553, %v5418
  %v5555 = vadd.f32 %v5554, %v5419
  %v5556 = vsel %vm5173, %v5420, 0.0
  %v5557 = vadd.f32 %v5555, %v5556
  %v5558 = vadd.f32 %v5557, %v5421
  %v5559 = vadd.f32 %v5558, %v5422
  %v5560 = vadd.f32 %v5559, %v5423
  %v5561 = vsel %vm5173, %v5424, 0.0
  %v5562 = vadd.f32 %v5560, %v5561
  %v5563 = vadd.f32 %v5562, %v5425
  %v5564 = vadd.f32 %v5563, %v5426
  %v5565 = vadd.f32 %v5564, %v5427
  %v5566 = vsel %vm5173, %v5428, 0.0
  %v5567 = vadd.f32 %v5565, %v5566
  %v5568 = vrot.slane %v5567, 4
  %v5569 = vadd.f32 %v5567, %v5568
  %v5570 = vrot.slane %v5569, 2
  %v5571 = vadd.f32 %v5569, %v5570
  %v5572 = vrot.slane %v5571, 1
  %v5573 = vadd.f32 %v5571, %v5572
  %v5574 = vrcp.pop 784.0
  %v5575 = vmul.f32 %v5316, %v5574
  %v5576 = vmul.f32 %v5573, %v5574
  %v5577 = vmul.f32 %v5575, %v5575
  %v5578 = vsub.f32 %v5576, %v5577
  %v5579 = vadd.f32 %v5578, 0.001
  %v5580 = vrsqrt.pop %v5579
  %v5581 = vld [vmem:[%s2] sm:$0x1]
  %v5582 = vmul.f32 %v5581, %v5580
  %v5583 = vld [vmem:[%s3] sm:$0x1]
  %v5584 = vmul.f32 %v5575, %v5582
  %v5585 = vsub.f32 %v5583, %v5584
  %v5587 = vlaneseq
  %v5588 = vshrl.u32 %v5587, 7
  %v5589 = vsub.s32 0, %v5588
  %v5590 = vrot.slane %v5582, %v5589
  %v5592 = vmul.f32 %v5059, %v5590
  %v5593 = vmul.f32 %v5060, %v5590
  %v5594 = vmul.f32 %v5061, %v5590
  %v5595 = vmul.f32 %v5062, %v5590
  %v5596 = vmul.f32 %v5063, %v5590
  %v5597 = vmul.f32 %v5064, %v5590
  %v5598 = vmul.f32 %v5065, %v5590
  %v5599 = vmul.f32 %v5066, %v5590
  %v5600 = vmul.f32 %v5067, %v5590
  %v5601 = vmul.f32 %v5068, %v5590
  %v5602 = vmul.f32 %v5069, %v5590
  %v5603 = vmul.f32 %v5070, %v5590
  %v5604 = vmul.f32 %v5071, %v5590
  %v5605 = vmul.f32 %v5072, %v5590
  %v5606 = vmul.f32 %v5073, %v5590
  %v5607 = vmul.f32 %v5074, %v5590
  %v5608 = vmul.f32 %v5075, %v5590
  %v5609 = vmul.f32 %v5076, %v5590
  %v5610 = vmul.f32 %v5077, %v5590
  %v5611 = vmul.f32 %v5078, %v5590
  %v5612 = vmul.f32 %v5079, %v5590
  %v5613 = vmul.f32 %v5080, %v5590
  %v5614 = vmul.f32 %v5081, %v5590
  %v5615 = vmul.f32 %v5082, %v5590
  %v5616 = vmul.f32 %v5083, %v5590
  %v5617 = vmul.f32 %v5084, %v5590
  %v5618 = vmul.f32 %v5085, %v5590
  %v5619 = vmul.f32 %v5086, %v5590
  %v5620 = vmul.f32 %v5087, %v5590
  %v5621 = vmul.f32 %v5088, %v5590
  %v5622 = vmul.f32 %v5089, %v5590
  %v5623 = vmul.f32 %v5090, %v5590
  %v5624 = vmul.f32 %v5091, %v5590
  %v5625 = vmul.f32 %v5092, %v5590
  %v5626 = vmul.f32 %v5093, %v5590
  %v5627 = vmul.f32 %v5094, %v5590
  %v5628 = vmul.f32 %v5095, %v5590
  %v5629 = vmul.f32 %v5096, %v5590
  %v5630 = vmul.f32 %v5097, %v5590
  %v5631 = vmul.f32 %v5098, %v5590
  %v5632 = vmul.f32 %v5099, %v5590
  %v5633 = vmul.f32 %v5100, %v5590
  %v5634 = vmul.f32 %v5101, %v5590
  %v5635 = vmul.f32 %v5102, %v5590
  %v5636 = vmul.f32 %v5103, %v5590
  %v5637 = vmul.f32 %v5104, %v5590
  %v5638 = vmul.f32 %v5105, %v5590
  %v5639 = vmul.f32 %v5106, %v5590
  %v5640 = vmul.f32 %v5107, %v5590
  %v5641 = vmul.f32 %v5108, %v5590
  %v5642 = vmul.f32 %v5109, %v5590
  %v5643 = vmul.f32 %v5110, %v5590
  %v5644 = vmul.f32 %v5111, %v5590
  %v5645 = vmul.f32 %v5112, %v5590
  %v5646 = vmul.f32 %v5113, %v5590
  %v5647 = vmul.f32 %v5114, %v5590
  %v5648 = vmul.f32 %v5115, %v5590
  %v5649 = vmul.f32 %v5116, %v5590
  %v5650 = vmul.f32 %v5117, %v5590
  %v5651 = vmul.f32 %v5118, %v5590
  %v5652 = vmul.f32 %v5119, %v5590
  %v5653 = vmul.f32 %v5120, %v5590
  %v5654 = vmul.f32 %v5121, %v5590
  %v5655 = vmul.f32 %v5122, %v5590
  %v5656 = vmul.f32 %v5123, %v5590
  %v5657 = vmul.f32 %v5124, %v5590
  %v5658 = vmul.f32 %v5125, %v5590
  %v5659 = vmul.f32 %v5126, %v5590
  %v5660 = vmul.f32 %v5127, %v5590
  %v5661 = vmul.f32 %v5128, %v5590
  %v5662 = vmul.f32 %v5129, %v5590
  %v5663 = vmul.f32 %v5130, %v5590
  %v5664 = vmul.f32 %v5131, %v5590
  %v5665 = vmul.f32 %v5132, %v5590
  %v5666 = vmul.f32 %v5133, %v5590
  %v5667 = vmul.f32 %v5134, %v5590
  %v5668 = vmul.f32 %v5135, %v5590
  %v5669 = vmul.f32 %v5136, %v5590
  %v5670 = vmul.f32 %v5137, %v5590
  %v5671 = vmul.f32 %v5138, %v5590
  %v5672 = vmul.f32 %v5139, %v5590
  %v5673 = vmul.f32 %v5140, %v5590
  %v5674 = vmul.f32 %v5141, %v5590
  %v5675 = vmul.f32 %v5142, %v5590
  %v5676 = vmul.f32 %v5143, %v5590
  %v5677 = vmul.f32 %v5144, %v5590
  %v5678 = vmul.f32 %v5145, %v5590
  %v5679 = vmul.f32 %v5146, %v5590
  %v5680 = vmul.f32 %v5147, %v5590
  %v5681 = vmul.f32 %v5148, %v5590
  %v5682 = vmul.f32 %v5149, %v5590
  %v5683 = vmul.f32 %v5150, %v5590
  %v5684 = vmul.f32 %v5151, %v5590
  %v5685 = vmul.f32 %v5152, %v5590
  %v5686 = vmul.f32 %v5153, %v5590
  %v5687 = vmul.f32 %v5154, %v5590
  %v5688 = vmul.f32 %v5155, %v5590
  %v5689 = vmul.f32 %v5156, %v5590
  %v5690 = vmul.f32 %v5157, %v5590
  %v5691 = vmul.f32 %v5158, %v5590
  %v5692 = vmul.f32 %v5159, %v5590
  %v5693 = vmul.f32 %v5160, %v5590
  %v5694 = vmul.f32 %v5161, %v5590
  %v5695 = vmul.f32 %v5162, %v5590
  %v5696 = vmul.f32 %v5163, %v5590
  %v5697 = vmul.f32 %v5164, %v5590
  %v5698 = vmul.f32 %v5165, %v5590
  %v5699 = vmul.f32 %v5166, %v5590
  %v5700 = vmul.f32 %v5167, %v5590
  %v5701 = vmul.f32 %v5168, %v5590
  %v5702 = vmul.f32 %v5169, %v5590
  %v5703 = vmul.f32 %v5170, %v5590
  %v5705 = vlaneseq
  %v5706 = vshrl.u32 %v5705, 7
  %v5707 = vsub.s32 0, %v5706
  %v5708 = vrot.slane %v5585, %v5707
  %v5710 = vadd.f32 %v5592, %v5708
  %v5711 = vadd.f32 %v5593, %v5708
  %v5712 = vadd.f32 %v5594, %v5708
  %v5713 = vadd.f32 %v5595, %v5708
  %v5714 = vadd.f32 %v5596, %v5708
  %v5715 = vadd.f32 %v5597, %v5708
  %v5716 = vadd.f32 %v5598, %v5708
  %v5717 = vadd.f32 %v5599, %v5708
  %v5718 = vadd.f32 %v5600, %v5708
  %v5719 = vadd.f32 %v5601, %v5708
  %v5720 = vadd.f32 %v5602, %v5708
  %v5721 = vadd.f32 %v5603, %v5708
  %v5722 = vadd.f32 %v5604, %v5708
  %v5723 = vadd.f32 %v5605, %v5708
  %v5724 = vadd.f32 %v5606, %v5708
  %v5725 = vadd.f32 %v5607, %v5708
  %v5726 = vadd.f32 %v5608, %v5708
  %v5727 = vadd.f32 %v5609, %v5708
  %v5728 = vadd.f32 %v5610, %v5708
  %v5729 = vadd.f32 %v5611, %v5708
  %v5730 = vadd.f32 %v5612, %v5708
  %v5731 = vadd.f32 %v5613, %v5708
  %v5732 = vadd.f32 %v5614, %v5708
  %v5733 = vadd.f32 %v5615, %v5708
  %v5734 = vadd.f32 %v5616, %v5708
  %v5735 = vadd.f32 %v5617, %v5708
  %v5736 = vadd.f32 %v5618, %v5708
  %v5737 = vadd.f32 %v5619, %v5708
  %v5738 = vadd.f32 %v5620, %v5708
  %v5739 = vadd.f32 %v5621, %v5708
  %v5740 = vadd.f32 %v5622, %v5708
  %v5741 = vadd.f32 %v5623, %v5708
  %v5742 = vadd.f32 %v5624, %v5708
  %v5743 = vadd.f32 %v5625, %v5708
  %v5744 = vadd.f32 %v5626, %v5708
  %v5745 = vadd.f32 %v5627, %v5708
  %v5746 = vadd.f32 %v5628, %v5708
  %v5747 = vadd.f32 %v5629, %v5708
  %v5748 = vadd.f32 %v5630, %v5708
  %v5749 = vadd.f32 %v5631, %v5708
  %v5750 = vadd.f32 %v5632, %v5708
  %v5751 = vadd.f32 %v5633, %v5708
  %v5752 = vadd.f32 %v5634, %v5708
  %v5753 = vadd.f32 %v5635, %v5708
  %v5754 = vadd.f32 %v5636, %v5708
  %v5755 = vadd.f32 %v5637, %v5708
  %v5756 = vadd.f32 %v5638, %v5708
  %v5757 = vadd.f32 %v5639, %v5708
  %v5758 = vadd.f32 %v5640, %v5708
  %v5759 = vadd.f32 %v5641, %v5708
  %v5760 = vadd.f32 %v5642, %v5708
  %v5761 = vadd.f32 %v5643, %v5708
  %v5762 = vadd.f32 %v5644, %v5708
  %v5763 = vadd.f32 %v5645, %v5708
  %v5764 = vadd.f32 %v5646, %v5708
  %v5765 = vadd.f32 %v5647, %v5708
  %v5766 = vadd.f32 %v5648, %v5708
  %v5767 = vadd.f32 %v5649, %v5708
  %v5768 = vadd.f32 %v5650, %v5708
  %v5769 = vadd.f32 %v5651, %v5708
  %v5770 = vadd.f32 %v5652, %v5708
  %v5771 = vadd.f32 %v5653, %v5708
  %v5772 = vadd.f32 %v5654, %v5708
  %v5773 = vadd.f32 %v5655, %v5708
  %v5774 = vadd.f32 %v5656, %v5708
  %v5775 = vadd.f32 %v5657, %v5708
  %v5776 = vadd.f32 %v5658, %v5708
  %v5777 = vadd.f32 %v5659, %v5708
  %v5778 = vadd.f32 %v5660, %v5708
  %v5779 = vadd.f32 %v5661, %v5708
  %v5780 = vadd.f32 %v5662, %v5708
  %v5781 = vadd.f32 %v5663, %v5708
  %v5782 = vadd.f32 %v5664, %v5708
  %v5783 = vadd.f32 %v5665, %v5708
  %v5784 = vadd.f32 %v5666, %v5708
  %v5785 = vadd.f32 %v5667, %v5708
  %v5786 = vadd.f32 %v5668, %v5708
  %v5787 = vadd.f32 %v5669, %v5708
  %v5788 = vadd.f32 %v5670, %v5708
  %v5789 = vadd.f32 %v5671, %v5708
  %v5790 = vadd.f32 %v5672, %v5708
  %v5791 = vadd.f32 %v5673, %v5708
  %v5792 = vadd.f32 %v5674, %v5708
  %v5793 = vadd.f32 %v5675, %v5708
  %v5794 = vadd.f32 %v5676, %v5708
  %v5795 = vadd.f32 %v5677, %v5708
  %v5796 = vadd.f32 %v5678, %v5708
  %v5797 = vadd.f32 %v5679, %v5708
  %v5798 = vadd.f32 %v5680, %v5708
  %v5799 = vadd.f32 %v5681, %v5708
  %v5800 = vadd.f32 %v5682, %v5708
  %v5801 = vadd.f32 %v5683, %v5708
  %v5802 = vadd.f32 %v5684, %v5708
  %v5803 = vadd.f32 %v5685, %v5708
  %v5804 = vadd.f32 %v5686, %v5708
  %v5805 = vadd.f32 %v5687, %v5708
  %v5806 = vadd.f32 %v5688, %v5708
  %v5807 = vadd.f32 %v5689, %v5708
  %v5808 = vadd.f32 %v5690, %v5708
  %v5809 = vadd.f32 %v5691, %v5708
  %v5810 = vadd.f32 %v5692, %v5708
  %v5811 = vadd.f32 %v5693, %v5708
  %v5812 = vadd.f32 %v5694, %v5708
  %v5813 = vadd.f32 %v5695, %v5708
  %v5814 = vadd.f32 %v5696, %v5708
  %v5815 = vadd.f32 %v5697, %v5708
  %v5816 = vadd.f32 %v5698, %v5708
  %v5817 = vadd.f32 %v5699, %v5708
  %v5818 = vadd.f32 %v5700, %v5708
  %v5819 = vadd.f32 %v5701, %v5708
  %v5820 = vadd.f32 %v5702, %v5708
  %v5821 = vadd.f32 %v5703, %v5708
  %v5822 = vmax.f32 %v5710, 0.0
  %v5823 = vmax.f32 %v5711, 0.0
  %v5824 = vmax.f32 %v5712, 0.0
  %v5825 = vmax.f32 %v5713, 0.0
  %v5826 = vmax.f32 %v5714, 0.0
  %v5827 = vmax.f32 %v5715, 0.0
  %v5828 = vmax.f32 %v5716, 0.0
  %v5829 = vmax.f32 %v5717, 0.0
  %v5830 = vmax.f32 %v5718, 0.0
  %v5831 = vmax.f32 %v5719, 0.0
  %v5832 = vmax.f32 %v5720, 0.0
  %v5833 = vmax.f32 %v5721, 0.0
  %v5834 = vmax.f32 %v5722, 0.0
  %v5835 = vmax.f32 %v5723, 0.0
  %v5836 = vmax.f32 %v5724, 0.0
  %v5837 = vmax.f32 %v5725, 0.0
  %v5838 = vmax.f32 %v5726, 0.0
  %v5839 = vmax.f32 %v5727, 0.0
  %v5840 = vmax.f32 %v5728, 0.0
  %v5841 = vmax.f32 %v5729, 0.0
  %v5842 = vmax.f32 %v5730, 0.0
  %v5843 = vmax.f32 %v5731, 0.0
  %v5844 = vmax.f32 %v5732, 0.0
  %v5845 = vmax.f32 %v5733, 0.0
  %v5846 = vmax.f32 %v5734, 0.0
  %v5847 = vmax.f32 %v5735, 0.0
  %v5848 = vmax.f32 %v5736, 0.0
  %v5849 = vmax.f32 %v5737, 0.0
  %v5850 = vmax.f32 %v5738, 0.0
  %v5851 = vmax.f32 %v5739, 0.0
  %v5852 = vmax.f32 %v5740, 0.0
  %v5853 = vmax.f32 %v5741, 0.0
  %v5854 = vmax.f32 %v5742, 0.0
  %v5855 = vmax.f32 %v5743, 0.0
  %v5856 = vmax.f32 %v5744, 0.0
  %v5857 = vmax.f32 %v5745, 0.0
  %v5858 = vmax.f32 %v5746, 0.0
  %v5859 = vmax.f32 %v5747, 0.0
  %v5860 = vmax.f32 %v5748, 0.0
  %v5861 = vmax.f32 %v5749, 0.0
  %v5862 = vmax.f32 %v5750, 0.0
  %v5863 = vmax.f32 %v5751, 0.0
  %v5864 = vmax.f32 %v5752, 0.0
  %v5865 = vmax.f32 %v5753, 0.0
  %v5866 = vmax.f32 %v5754, 0.0
  %v5867 = vmax.f32 %v5755, 0.0
  %v5868 = vmax.f32 %v5756, 0.0
  %v5869 = vmax.f32 %v5757, 0.0
  %v5870 = vmax.f32 %v5758, 0.0
  %v5871 = vmax.f32 %v5759, 0.0
  %v5872 = vmax.f32 %v5760, 0.0
  %v5873 = vmax.f32 %v5761, 0.0
  %v5874 = vmax.f32 %v5762, 0.0
  %v5875 = vmax.f32 %v5763, 0.0
  %v5876 = vmax.f32 %v5764, 0.0
  %v5877 = vmax.f32 %v5765, 0.0
  %v5878 = vmax.f32 %v5766, 0.0
  %v5879 = vmax.f32 %v5767, 0.0
  %v5880 = vmax.f32 %v5768, 0.0
  %v5881 = vmax.f32 %v5769, 0.0
  %v5882 = vmax.f32 %v5770, 0.0
  %v5883 = vmax.f32 %v5771, 0.0
  %v5884 = vmax.f32 %v5772, 0.0
  %v5885 = vmax.f32 %v5773, 0.0
  %v5886 = vmax.f32 %v5774, 0.0
  %v5887 = vmax.f32 %v5775, 0.0
  %v5888 = vmax.f32 %v5776, 0.0
  %v5889 = vmax.f32 %v5777, 0.0
  %v5890 = vmax.f32 %v5778, 0.0
  %v5891 = vmax.f32 %v5779, 0.0
  %v5892 = vmax.f32 %v5780, 0.0
  %v5893 = vmax.f32 %v5781, 0.0
  %v5894 = vmax.f32 %v5782, 0.0
  %v5895 = vmax.f32 %v5783, 0.0
  %v5896 = vmax.f32 %v5784, 0.0
  %v5897 = vmax.f32 %v5785, 0.0
  %v5898 = vmax.f32 %v5786, 0.0
  %v5899 = vmax.f32 %v5787, 0.0
  %v5900 = vmax.f32 %v5788, 0.0
  %v5901 = vmax.f32 %v5789, 0.0
  %v5902 = vmax.f32 %v5790, 0.0
  %v5903 = vmax.f32 %v5791, 0.0
  %v5904 = vmax.f32 %v5792, 0.0
  %v5905 = vmax.f32 %v5793, 0.0
  %v5906 = vmax.f32 %v5794, 0.0
  %v5907 = vmax.f32 %v5795, 0.0
  %v5908 = vmax.f32 %v5796, 0.0
  %v5909 = vmax.f32 %v5797, 0.0
  %v5910 = vmax.f32 %v5798, 0.0
  %v5911 = vmax.f32 %v5799, 0.0
  %v5912 = vmax.f32 %v5800, 0.0
  %v5913 = vmax.f32 %v5801, 0.0
  %v5914 = vmax.f32 %v5802, 0.0
  %v5915 = vmax.f32 %v5803, 0.0
  %v5916 = vmax.f32 %v5804, 0.0
  %v5917 = vmax.f32 %v5805, 0.0
  %v5918 = vmax.f32 %v5806, 0.0
  %v5919 = vmax.f32 %v5807, 0.0
  %v5920 = vmax.f32 %v5808, 0.0
  %v5921 = vmax.f32 %v5809, 0.0
  %v5922 = vmax.f32 %v5810, 0.0
  %v5923 = vmax.f32 %v5811, 0.0
  %v5924 = vmax.f32 %v5812, 0.0
  %v5925 = vmax.f32 %v5813, 0.0
  %v5926 = vmax.f32 %v5814, 0.0
  %v5927 = vmax.f32 %v5815, 0.0
  %v5928 = vmax.f32 %v5816, 0.0
  %v5929 = vmax.f32 %v5817, 0.0
  %v5930 = vmax.f32 %v5818, 0.0
  %v5931 = vmax.f32 %v5819, 0.0
  %v5932 = vmax.f32 %v5820, 0.0
  %v5933 = vmax.f32 %v5821, 0.0
  %5934 = vst [vmem:[%s4] sm:$0xff] %v5822
  %5935 = vst [vmem:[%s4 + $0x8] sm:$0xff] %v5823
  %5936 = vst [vmem:[%s4 + $0x10] sm:$0xff] %v5824
  %5937 = vst [vmem:[%s4 + $0x18] sm:$0xf] %v5825
  %5938 = vst [vmem:[%s4 + $0x20] sm:$0xff] %v5826
  %5939 = vst [vmem:[%s4 + $0x28] sm:$0xff] %v5827
  %5940 = vst [vmem:[%s4 + $0x30] sm:$0xff] %v5828
  %5941 = vst [vmem:[%s4 + $0x38] sm:$0xf] %v5829
  %5942 = vst [vmem:[%s4 + $0x40] sm:$0xff] %v5830
  %5943 = vst [vmem:[%s4 + $0x48] sm:$0xff] %v5831
  %5944 = vst [vmem:[%s4 + $0x50] sm:$0xff] %v5832
  %5945 = vst [vmem:[%s4 + $0x58] sm:$0xf] %v5833
  %5946 = vst [vmem:[%s4 + $0x60] sm:$0xff] %v5834
  %5947 = vst [vmem:[%s4 + $0x68] sm:$0xff] %v5835
  %5948 = vst [vmem:[%s4 + $0x70] sm:$0xff] %v5836
  %5949 = vst [vmem:[%s4 + $0x78] sm:$0xf] %v5837
  %5950 = vst [vmem:[%s4 + $0x80] sm:$0xff] %v5838
  %5951 = vst [vmem:[%s4 + $0x88] sm:$0xff] %v5839
  %5952 = vst [vmem:[%s4 + $0x90] sm:$0xff] %v5840
  %5953 = vst [vmem:[%s4 + $0x98] sm:$0xf] %v5841
  %5954 = vst [vmem:[%s4 + $0xa0] sm:$0xff] %v5842
  %5955 = vst [vmem:[%s4 + $0xa8] sm:$0xff] %v5843
  %5956 = vst [vmem:[%s4 + $0xb0] sm:$0xff] %v5844
  %5957 = vst [vmem:[%s4 + $0xb8] sm:$0xf] %v5845
  %5958 = vst [vmem:[%s4 + $0xc0] sm:$0xff] %v5846
  %5959 = vst [vmem:[%s4 + $0xc8] sm:$0xff] %v5847
  %5960 = vst [vmem:[%s4 + $0xd0] sm:$0xff] %v5848
  %5961 = vst [vmem:[%s4 + $0xd8] sm:$0xf] %v5849
  %5962 = vst [vmem:[%s4 + $0xe0] sm:$0xff] %v5850
  %5963 = vst [vmem:[%s4 + $0xe8] sm:$0xff] %v5851
  %5964 = vst [vmem:[%s4 + $0xf0] sm:$0xff] %v5852
  %5965 = vst [vmem:[%s4 + $0xf8] sm:$0xf] %v5853
  %5966 = vst [vmem:[%s4 + $0x100] sm:$0xff] %v5854
  %5967 = vst [vmem:[%s4 + $0x108] sm:$0xff] %v5855
  %5968 = vst [vmem:[%s4 + $0x110] sm:$0xff] %v5856
  %5969 = vst [vmem:[%s4 + $0x118] sm:$0xf] %v5857
  %5970 = vst [vmem:[%s4 + $0x120] sm:$0xff] %v5858
  %5971 = vst [vmem:[%s4 + $0x128] sm:$0xff] %v5859
  %5972 = vst [vmem:[%s4 + $0x130] sm:$0xff] %v5860
  %5973 = vst [vmem:[%s4 + $0x138] sm:$0xf] %v5861
  %5974 = vst [vmem:[%s4 + $0x140] sm:$0xff] %v5862
  %5975 = vst [vmem:[%s4 + $0x148] sm:$0xff] %v5863
  %5976 = vst [vmem:[%s4 + $0x150] sm:$0xff] %v5864
  %5977 = vst [vmem:[%s4 + $0x158] sm:$0xf] %v5865
  %5978 = vst [vmem:[%s4 + $0x160] sm:$0xff] %v5866
  %5979 = vst [vmem:[%s4 + $0x168] sm:$0xff] %v5867
  %5980 = vst [vmem:[%s4 + $0x170] sm:$0xff] %v5868
  %5981 = vst [vmem:[%s4 + $0x178] sm:$0xf] %v5869
  %5982 = vst [vmem:[%s4 + $0x180] sm:$0xff] %v5870
  %5983 = vst [vmem:[%s4 + $0x188] sm:$0xff] %v5871
  %5984 = vst [vmem:[%s4 + $0x190] sm:$0xff] %v5872
  %5985 = vst [vmem:[%s4 + $0x198] sm:$0xf] %v5873
  %5986 = vst [vmem:[%s4 + $0x1a0] sm:$0xff] %v5874
  %5987 = vst [vmem:[%s4 + $0x1a8] sm:$0xff] %v5875
  %5988 = vst [vmem:[%s4 + $0x1b0] sm:$0xff] %v5876
  %5989 = vst [vmem:[%s4 + $0x1b8] sm:$0xf] %v5877
  %5990 = vst [vmem:[%s4 + $0x1c0] sm:$0xff] %v5878
  %5991 = vst [vmem:[%s4 + $0x1c8] sm:$0xff] %v5879
  %5992 = vst [vmem:[%s4 + $0x1d0] sm:$0xff] %v5880
  %5993 = vst [vmem:[%s4 + $0x1d8] sm:$0xf] %v5881
  %5994 = vst [vmem:[%s4 + $0x1e0] sm:$0xff] %v5882
  %5995 = vst [vmem:[%s4 + $0x1e8] sm:$0xff] %v5883
  %5996 = vst [vmem:[%s4 + $0x1f0] sm:$0xff] %v5884
  %5997 = vst [vmem:[%s4 + $0x1f8] sm:$0xf] %v5885
  %5998 = vst [vmem:[%s4 + $0x200] sm:$0xff] %v5886
  %5999 = vst [vmem:[%s4 + $0x208] sm:$0xff] %v5887
  %6000 = vst [vmem:[%s4 + $0x210] sm:$0xff] %v5888
  %6001 = vst [vmem:[%s4 + $0x218] sm:$0xf] %v5889
  %6002 = vst [vmem:[%s4 + $0x220] sm:$0xff] %v5890
  %6003 = vst [vmem:[%s4 + $0x228] sm:$0xff] %v5891
  %6004 = vst [vmem:[%s4 + $0x230] sm:$0xff] %v5892
  %6005 = vst [vmem:[%s4 + $0x238] sm:$0xf] %v5893
  %6006 = vst [vmem:[%s4 + $0x240] sm:$0xff] %v5894
  %6007 = vst [vmem:[%s4 + $0x248] sm:$0xff] %v5895
  %6008 = vst [vmem:[%s4 + $0x250] sm:$0xff] %v5896
  %6009 = vst [vmem:[%s4 + $0x258] sm:$0xf] %v5897
  %6010 = vst [vmem:[%s4 + $0x260] sm:$0xff] %v5898
  %6011 = vst [vmem:[%s4 + $0x268] sm:$0xff] %v5899
  %6012 = vst [vmem:[%s4 + $0x270] sm:$0xff] %v5900
  %6013 = vst [vmem:[%s4 + $0x278] sm:$0xf] %v5901
  %6014 = vst [vmem:[%s4 + $0x280] sm:$0xff] %v5902
  %6015 = vst [vmem:[%s4 + $0x288] sm:$0xff] %v5903
  %6016 = vst [vmem:[%s4 + $0x290] sm:$0xff] %v5904
  %6017 = vst [vmem:[%s4 + $0x298] sm:$0xf] %v5905
  %6018 = vst [vmem:[%s4 + $0x2a0] sm:$0xff] %v5906
  %6019 = vst [vmem:[%s4 + $0x2a8] sm:$0xff] %v5907
  %6020 = vst [vmem:[%s4 + $0x2b0] sm:$0xff] %v5908
  %6021 = vst [vmem:[%s4 + $0x2b8] sm:$0xf] %v5909
  %6022 = vst [vmem:[%s4 + $0x2c0] sm:$0xff] %v5910
  %6023 = vst [vmem:[%s4 + $0x2c8] sm:$0xff] %v5911
  %6024 = vst [vmem:[%s4 + $0x2d0] sm:$0xff] %v5912
  %6025 = vst [vmem:[%s4 + $0x2d8] sm:$0xf] %v5913
  %6026 = vst [vmem:[%s4 + $0x2e0] sm:$0xff] %v5914
  %6027 = vst [vmem:[%s4 + $0x2e8] sm:$0xff] %v5915
  %6028 = vst [vmem:[%s4 + $0x2f0] sm:$0xff] %v5916
  %6029 = vst [vmem:[%s4 + $0x2f8] sm:$0xf] %v5917
  %6030 = vst [vmem:[%s4 + $0x300] sm:$0xff] %v5918
  %6031 = vst [vmem:[%s4 + $0x308] sm:$0xff] %v5919
  %6032 = vst [vmem:[%s4 + $0x310] sm:$0xff] %v5920
  %6033 = vst [vmem:[%s4 + $0x318] sm:$0xf] %v5921
  %6034 = vst [vmem:[%s4 + $0x320] sm:$0xff] %v5922
  %6035 = vst [vmem:[%s4 + $0x328] sm:$0xff] %v5923
  %6036 = vst [vmem:[%s4 + $0x330] sm:$0xff] %v5924
  %6037 = vst [vmem:[%s4 + $0x338] sm:$0xf] %v5925
  %6038 = vst [vmem:[%s4 + $0x340] sm:$0xff] %v5926
  %6039 = vst [vmem:[%s4 + $0x348] sm:$0xff] %v5927
  %6040 = vst [vmem:[%s4 + $0x350] sm:$0xff] %v5928
  %6041 = vst [vmem:[%s4 + $0x358] sm:$0xf] %v5929
  %6042 = vst [vmem:[%s4 + $0x360] sm:$0xff] %v5930
  %6043 = vst [vmem:[%s4 + $0x368] sm:$0xff] %v5931
  %6044 = vst [vmem:[%s4 + $0x370] sm:$0xff] %v5932
  %6045 = vst [vmem:[%s4 + $0x378] sm:$0xf] %v5933
  // Predicated region
  $region18: #{relu_dwconv_bn_relu.1} parent=0 // pred_check
    _
  $region19: #{relu_dwconv_bn_relu.1} parent=0 // pred_check_branch
    %6047 = sbr.rel (0) target = $region21
  $region20: #{relu_dwconv_bn_relu.1} parent=0 // pred_region
    _
  $region21: #{relu_dwconv_bn_relu.1} parent=0 // pred_fallthru
    _
  // Predicated region
  $region22: #{relu_dwconv_bn_relu.1} parent=0 // pred_check
    _
  $region23: #{relu_dwconv_bn_relu.1} parent=0 // pred_check_branch
    %6049 = sbr.rel (0) target = $region25
  $region24: #{relu_dwconv_bn_relu.1} parent=0 // pred_region
    _
  $region25: #{relu_dwconv_bn_relu.1} parent=0 // pred_fallthru
    _

</llo_original>
